<compile_context>
chip_gen: v7x
topology: tpu7x:2x2x1
jax: 0.10.0
libtpu: 0.0.40
codegen_flags: <defaults>
</compile_context>

<pallas_src>
import functools

import jax
import jax.numpy as jnp
from jax.experimental import pallas as pl
from jax.experimental.pallas import tpu as pltpu

# ----------------------------- model hyper-params (small) -----------------------------
PATCH = 16
IMG = 32
CHANS = 3
EMBED_DIM = 128            # lane-dense (multiple of 128); real MUSK: 1024
DEPTH = 2                  # real MUSK: 24
HEADS = 4
HEAD_DIM = EMBED_DIM // HEADS
MLP_DIM = 4 * EMBED_DIM
LN_EPS = 1e-5


def _round_up(v, m):
    return (v + m - 1) // m * m


# ----------------------------------- fused kernel -----------------------------------
def _encoder_kernel(
    # layer-0-only inputs, left in HBM (memory_space=pl.ANY), DMAed manually at l==0
    patches_hbm, patch_w_hbm, patch_b_hbm, cls_hbm, pos_hbm,
    # layer-invariant small VMEM-resident inputs
    lnf_g_ref, lnf_b_ref,
    # per-layer (streamed, double-buffered) inputs
    ln1_g_ref, ln1_b_ref, qkv_w_ref, qkv_b_ref, proj_w_ref, proj_b_ref,
    ln2_g_ref, ln2_b_ref, fc1_w_ref, fc1_b_ref, fc2_w_ref, fc2_b_ref,
    # output
    out_ref,
    # scratch: residual stream, persists across the (sequential) layer axis
    x_scr,
    *, num_patches, seq, seq_pad,
):
    b = pl.program_id(0)                 # batch index ("parallel")
    l = pl.program_id(1)                 # layer index ("arbitrary", sequential)
    last = pl.num_programs(1) - 1
    D, H, dh = EMBED_DIM, HEADS, HEAD_DIM
    NP, S, Sp = num_patches, seq, seq_pad
    cpp = CHANS * PATCH * PATCH

    def ln(v, gamma, beta):
        mu = jnp.mean(v, axis=-1, keepdims=True)
        var = jnp.mean(jnp.square(v - mu), axis=-1, keepdims=True)
        return (v - mu) * jax.lax.rsqrt(var + LN_EPS) * gamma + beta

    def mm(a, w, bias=None):
        # bf16 MXU inputs, f32 accumulation.
        y = jnp.dot(a.astype(jnp.bfloat16), w.astype(jnp.bfloat16),
                    preferred_element_type=jnp.float32)
        if bias is not None:
            y = y + bias.astype(jnp.float32)
        return y

    # ---- layer 0: patch-embed + CLS + pos-emb.  Inputs fetched on demand from HBM so
    # ---- they don't occupy VMEM for the remaining DEPTH-1 layers.
    @pl.when(l == 0)
    def _init():
        def body(pbuf, wbuf, bbuf, cbuf, posbuf, sems):
            copies = (
                pltpu.make_async_copy(patches_hbm.at[b], pbuf, sems.at[0]),
                pltpu.make_async_copy(patch_w_hbm, wbuf, sems.at[1]),
                pltpu.make_async_copy(patch_b_hbm, bbuf, sems.at[2]),
                pltpu.make_async_copy(cls_hbm, cbuf, sems.at[3]),
                pltpu.make_async_copy(pos_hbm, posbuf, sems.at[4]),
            )
            for c in copies:
                c.start()
            for c in copies:
                c.wait()
            tok = mm(pbuf[...], wbuf[...], bbuf[...])                    # (NP, D)
            posv = posbuf[...].astype(jnp.float32)                       # (S, D)
            x_scr[0:1, :] = cbuf[...].astype(jnp.float32) + posv[0:1, :]
            x_scr[1:1 + NP, :] = tok + posv[1:1 + NP, :]
            if Sp > S:                                                   # zero padded rows
                x_scr[S:Sp, :] = jnp.zeros((Sp - S, D), jnp.float32)

        pl.run_scoped(
            body,
            pltpu.VMEM((NP, cpp), jnp.float32),       # patches for this batch element
            pltpu.VMEM((cpp, D), jnp.bfloat16),       # patch-embed weight
            pltpu.VMEM((1, D), jnp.float32),          # patch-embed bias
            pltpu.VMEM((1, D), jnp.float32),          # CLS token
            pltpu.VMEM((S, D), jnp.float32),          # positional embedding
            pltpu.SemaphoreType.DMA((5,)),
        )

    # ---- transformer block l (all activations VMEM / register resident) ----
    x = x_scr[...]                                                       # (Sp, D) f32
    h1 = ln(x, ln1_g_ref[0].astype(jnp.float32), ln1_b_ref[0].astype(jnp.float32))
    # qkv kept bf16 after the bias add: halves activation traffic / removes extra casts.
    qkv = mm(h1, qkv_w_ref[0], qkv_b_ref[0]).astype(jnp.bfloat16)        # (Sp, 3D)

    qh = qkv[:, 0 * D:1 * D].reshape(Sp, H, dh)
    kh = qkv[:, 1 * D:2 * D].reshape(Sp, H, dh)
    vh = qkv[:, 2 * D:3 * D].reshape(Sp, H, dh)

    # One head-batched MXU dot for QK^T; scores stay f32 for the softmax statistics.
    s = jnp.einsum('qhd,khd->hqk', qh, kh,
                   preferred_element_type=jnp.float32) * (1.0 / dh ** 0.5)
    key_mask = jax.lax.broadcasted_iota(jnp.int32, (H, Sp, Sp), 2) < S   # mask padded keys
    s = jnp.where(key_mask, s, -1e30)
    m = jnp.max(s, axis=-1, keepdims=True)
    p = jnp.exp(s - m)
    p = p * pl.reciprocal(jnp.sum(p, axis=-1, keepdims=True), approx=True)
    # One head-batched P.V dot; result becomes a lane-dense (Sp, D) slab that feeds the
    # projection GEMM directly (no per-head 32-lane scratch stores).
    o = jnp.einsum('hqk,khd->qhd', p.astype(jnp.bfloat16), vh,
                   preferred_element_type=jnp.float32).reshape(Sp, D)

    # attention projection + residual (fused epilogue)
    x = x + mm(o, proj_w_ref[0], proj_b_ref[0])
    # MLP (pre-LN) + residual (fused epilogue)
    h2 = ln(x, ln2_g_ref[0].astype(jnp.float32), ln2_b_ref[0].astype(jnp.float32))
    f = mm(h2, fc1_w_ref[0], fc1_b_ref[0])
    # TODO(synk): PyTorch nn.GELU default is exact erf; tanh approximation differs ~1e-3.
    f = jax.nn.gelu(f, approximate=True)
    x = x + mm(f, fc2_w_ref[0], fc2_b_ref[0])

    # Write the residual stream back only if another layer will read it.
    @pl.when(l != last)
    def _writeback():
        x_scr[...] = x

    # ---- final LayerNorm on the CLS row only, straight from registers ----
    @pl.when(l == last)
    def _final():
        cls_row = x[0:1, :]                                              # (1, D)
        y = ln(cls_row, lnf_g_ref[...].astype(jnp.float32),
               lnf_b_ref[...].astype(jnp.float32))
        out_ref[0] = y


# -------------------------------- parameter construction --------------------------------
def init_params(key):
    D, M = EMBED_DIM, MLP_DIM
    cpp = CHANS * PATCH * PATCH
    num_patches = (IMG // PATCH) ** 2
    S = num_patches + 1
    ks = jax.random.split(key, 8)

    def nrm(k, shape, dtype=jnp.float32, scale=0.02):
        return (scale * jax.random.normal(k, shape, dtype=jnp.float32)).astype(dtype)

    return dict(
        # Conv2d(3, D, k=16, s=16) expressed as a (C*p*p, D) matmul weight (bf16 for MXU).
        patch_w=nrm(ks[0], (cpp, D), jnp.bfloat16),
        patch_b=jnp.zeros((1, D), jnp.float32),
        cls=nrm(ks[1], (1, D)),
        pos=nrm(ks[2], (S, D)),
        lnf_g=jnp.ones((1, D), jnp.float32),
        lnf_b=jnp.zeros((1, D), jnp.float32),
        # per-layer stacked parameters (leading DEPTH axis, streamed by index_map)
        ln1_g=jnp.ones((DEPTH, 1, D), jnp.float32),
        ln1_b=jnp.zeros((DEPTH, 1, D), jnp.float32),
        qkv_w=nrm(ks[3], (DEPTH, D, 3 * D), jnp.bfloat16),
        qkv_b=jnp.zeros((DEPTH, 1, 3 * D), jnp.float32),
        proj_w=nrm(ks[4], (DEPTH, D, D), jnp.bfloat16),
        proj_b=jnp.zeros((DEPTH, 1, D), jnp.float32),
        ln2_g=jnp.ones((DEPTH, 1, D), jnp.float32),
        ln2_b=jnp.zeros((DEPTH, 1, D), jnp.float32),
        fc1_w=nrm(ks[5], (DEPTH, D, MLP_DIM), jnp.bfloat16),
        fc1_b=jnp.zeros((DEPTH, 1, MLP_DIM), jnp.float32),
        fc2_w=nrm(ks[6], (DEPTH, MLP_DIM, D), jnp.bfloat16),
        fc2_b=jnp.zeros((DEPTH, 1, D), jnp.float32),
    )


# ------------------------------------ forward pass ------------------------------------
def musk_vision_forward(params, x_nchw):
    """MuskInferenceEncoder.forward: global (CLS) vision feature, no head, no L2 norm."""
    B, C, Himg, Wimg = x_nchw.shape
    p = PATCH
    gh, gw = Himg // p, Wimg // p
    np_ = gh * gw
    cpp = C * p * p
    D, M = EMBED_DIM, MLP_DIM
    S = np_ + 1
    Sp = _round_up(S, 8)
    # TODO(synk): for the real MUSK (S=577) pad Sp to a multiple of 128 (=640) so the
    # attention-score lane dim and the P.V contraction are unmasked.

    # Patchify (NCHW; PyTorch Conv2d patch-embed flatten order = (C, ph, pw)) — XLA glue.
    patches = (
        x_nchw.reshape(B, C, gh, p, gw, p)
        .transpose(0, 2, 4, 1, 3, 5)
        .reshape(B, np_, cpp)
    )

    any_spec = pl.BlockSpec(memory_space=pl.ANY)      # stays in HBM; DMAed only at l==0
    const2d = lambda b, l: (0, 0)
    perlayer = lambda b, l: (l, 0, 0)

    in_specs = [
        any_spec,                                     # patches
        any_spec,                                     # patch_w
        any_spec,                                     # patch_b
        any_spec,                                     # cls
        any_spec,                                     # pos
        pl.BlockSpec((1, D), const2d),                # lnf_g
        pl.BlockSpec((1, D), const2d),                # lnf_b
        pl.BlockSpec((1, 1, D), perlayer),            # ln1_g
        pl.BlockSpec((1, 1, D), perlayer),            # ln1_b
        pl.BlockSpec((1, D, 3 * D), perlayer),        # qkv_w
        pl.BlockSpec((1, 1, 3 * D), perlayer),        # qkv_b
        pl.BlockSpec((1, D, D), perlayer),            # proj_w
        pl.BlockSpec((1, 1, D), perlayer),            # proj_b
        pl.BlockSpec((1, 1, D), perlayer),            # ln2_g
        pl.BlockSpec((1, 1, D), perlayer),            # ln2_b
        pl.BlockSpec((1, D, M), perlayer),            # fc1_w
        pl.BlockSpec((1, 1, M), perlayer),            # fc1_b
        pl.BlockSpec((1, M, D), perlayer),            # fc2_w
        pl.BlockSpec((1, 1, D), perlayer),            # fc2_b
    ]
    out_spec = pl.BlockSpec((1, 1, D), lambda b, l: (b, 0, 0))   # written at last layer

    kernel = functools.partial(_encoder_kernel, num_patches=np_, seq=S, seq_pad=Sp)

    # VMEM limit: leave headroom below the physical capacity (v7x: 64 MiB/TC -> ~48 MiB;
    # v5e/v6e: 128 MiB -> 100 MiB cap).
    try:
        vmem_cap = int(pltpu.get_tpu_info().vmem_capacity_bytes)
        vmem_limit = min(vmem_cap - 16 * 1024 * 1024, 100 * 1024 * 1024)
    except Exception:
        vmem_limit = 48 * 1024 * 1024

    out = pl.pallas_call(
        kernel,
        out_shape=jax.ShapeDtypeStruct((B, 1, D), jnp.float32),
        grid_spec=pltpu.PrefetchScalarGridSpec(
            num_scalar_prefetch=0,
            grid=(B, DEPTH),
            in_specs=in_specs,
            out_specs=out_spec,
            scratch_shapes=[
                pltpu.VMEM((Sp, D), jnp.float32),     # residual stream (per core)
            ],
        ),
        compiler_params=pltpu.CompilerParams(
            dimension_semantics=("parallel", "arbitrary"),   # batch parallel, layers seq.
            vmem_limit_bytes=vmem_limit,
        ),
    )(
        patches, params["patch_w"], params["patch_b"], params["cls"], params["pos"],
        params["lnf_g"], params["lnf_b"],
        params["ln1_g"], params["ln1_b"], params["qkv_w"], params["qkv_b"],
        params["proj_w"], params["proj_b"], params["ln2_g"], params["ln2_b"],
        params["fc1_w"], params["fc1_b"], params["fc2_w"], params["fc2_b"],
    )
    return out.reshape(B, D)


# ---------------------------------------- main ----------------------------------------
if __name__ == "__main__":
    key = jax.random.PRNGKey(0)
    pkey, xkey = jax.random.split(key)
    params = init_params(pkey)
    x = jax.random.normal(xkey, (2, CHANS, IMG, IMG), dtype=jnp.float32)  # NCHW like PyTorch

    fwd = jax.jit(musk_vision_forward)
    feats = fwd(params, x)
    jax.block_until_ready(feats)
    assert feats.shape == (2, EMBED_DIM)
    assert bool(jnp.all(jnp.isfinite(feats)))
    print("KERNEL_OK")
</pallas_src>

<mosaic_0001>
module attributes {stable_mosaic.version = 11 : i64} {
  func.func @_encoder_kernel(%arg0: i32, %arg1: i32, %arg2: memref<2x4x768xf32, #tpu.memory_space<any>>, %arg3: memref<768x128xbf16, #tpu.memory_space<any>>, %arg4: memref<1x128xf32, #tpu.memory_space<any>>, %arg5: memref<1x128xf32, #tpu.memory_space<any>>, %arg6: memref<5x128xf32, #tpu.memory_space<any>>, %arg7: memref<1x128xf32, #tpu.memory_space<vmem>>, %arg8: memref<1x128xf32, #tpu.memory_space<vmem>>, %arg9: memref<1x1x128xf32, #tpu.memory_space<vmem>>, %arg10: memref<1x1x128xf32, #tpu.memory_space<vmem>>, %arg11: memref<1x128x384xbf16, #tpu.memory_space<vmem>>, %arg12: memref<1x1x384xf32, #tpu.memory_space<vmem>>, %arg13: memref<1x128x128xbf16, #tpu.memory_space<vmem>>, %arg14: memref<1x1x128xf32, #tpu.memory_space<vmem>>, %arg15: memref<1x1x128xf32, #tpu.memory_space<vmem>>, %arg16: memref<1x1x128xf32, #tpu.memory_space<vmem>>, %arg17: memref<1x128x512xbf16, #tpu.memory_space<vmem>>, %arg18: memref<1x1x512xf32, #tpu.memory_space<vmem>>, %arg19: memref<1x512x128xbf16, #tpu.memory_space<vmem>>, %arg20: memref<1x1x128xf32, #tpu.memory_space<vmem>>, %arg21: memref<1x1x128xf32, #tpu.memory_space<vmem>>, %arg22: memref<8x128xf32, #tpu.memory_space<vmem>>) attributes {dimension_semantics = [#tpu.dimension_semantics<parallel>, #tpu.dimension_semantics<arbitrary>], iteration_bounds = array<i64: 2, 2>, scalar_prefetch = 0 : i64, scratch_operands = 1 : i64, tpu.core_type = #tpu.core_type<tc>, window_params = [{}, {}, {}, {}, {}, {pipeline_mode = #tpu.pipeline_mode<synchronous>, transform_indices = @transform_5, window_bounds = array<i64: 1, 128>}, {pipeline_mode = #tpu.pipeline_mode<synchronous>, transform_indices = @transform_6, window_bounds = array<i64: 1, 128>}, {transform_indices = @transform_7, window_bounds = array<i64: 1, 1, 128>}, {transform_indices = @transform_8, window_bounds = array<i64: 1, 1, 128>}, {transform_indices = @transform_9, window_bounds = array<i64: 1, 128, 384>}, {transform_indices = @transform_10, window_bounds = array<i64: 1, 1, 384>}, {transform_indices = @transform_11, window_bounds = array<i64: 1, 128, 128>}, {transform_indices = @transform_12, window_bounds = array<i64: 1, 1, 128>}, {transform_indices = @transform_13, window_bounds = array<i64: 1, 1, 128>}, {transform_indices = @transform_14, window_bounds = array<i64: 1, 1, 128>}, {transform_indices = @transform_15, window_bounds = array<i64: 1, 128, 512>}, {transform_indices = @transform_16, window_bounds = array<i64: 1, 1, 512>}, {transform_indices = @transform_17, window_bounds = array<i64: 1, 512, 128>}, {transform_indices = @transform_18, window_bounds = array<i64: 1, 1, 128>}, {transform_indices = @transform_19, window_bounds = array<i64: 1, 1, 128>}]} {
    %c0_i32 = arith.constant 0 : i32
    %0 = arith.cmpi eq, %arg1, %c0_i32 : i32
    %1 = arith.extui %0 : i1 to i32
    %c0_i32_0 = arith.constant 0 : i32
    %2 = arith.cmpi ne, %1, %c0_i32_0 : i32
    scf.if %2 {
      "tpu.region"() ({
        %alloca = memref.alloca() : memref<4x768xf32, #tpu.memory_space<vmem>>
        %alloca_64 = memref.alloca() : memref<768x128xbf16, #tpu.memory_space<vmem>>
        %alloca_65 = memref.alloca() : memref<1x128xf32, #tpu.memory_space<vmem>>
        %alloca_66 = memref.alloca() : memref<1x128xf32, #tpu.memory_space<vmem>>
        %alloca_67 = memref.alloca() : memref<5x128xf32, #tpu.memory_space<vmem>>
        %138 = tpu.sem_alloc : memref<5x!tpu.dma_semaphore, #tpu.memory_space<semaphore_mem>>
        %c0_i32_68 = arith.constant 0 : i32
        %c0_i32_69 = arith.constant 0 : i32
        %c0_i32_70 = arith.constant 0 : i32
        %139 = tpu.memref_slice %arg2[%arg0, %c0_i32_69, %c0_i32_70] : memref<2x4x768xf32, #tpu.memory_space<any>> -> memref<1x4x768xf32, #tpu.memory_space<any>>
        %140 = tpu.memref_squeeze %139 : memref<1x4x768xf32, #tpu.memory_space<any>> -> memref<4x768xf32, #tpu.memory_space<any>>
        %141 = tpu.memref_slice %138[%c0_i32_68] : memref<5x!tpu.dma_semaphore, #tpu.memory_space<semaphore_mem>> -> memref<1x!tpu.dma_semaphore, #tpu.memory_space<semaphore_mem>>
        %142 = tpu.memref_squeeze %141 : memref<1x!tpu.dma_semaphore, #tpu.memory_space<semaphore_mem>> -> memref<!tpu.dma_semaphore, #tpu.memory_space<semaphore_mem>>
        tpu.enqueue_dma source(%140 : memref<4x768xf32, #tpu.memory_space<any>>) target(%alloca : memref<4x768xf32, #tpu.memory_space<vmem>>) target_semaphore(%142 : memref<!tpu.dma_semaphore, #tpu.memory_space<semaphore_mem>>)
        %c1_i32_71 = arith.constant 1 : i32
        %143 = tpu.memref_slice %138[%c1_i32_71] : memref<5x!tpu.dma_semaphore, #tpu.memory_space<semaphore_mem>> -> memref<1x!tpu.dma_semaphore, #tpu.memory_space<semaphore_mem>>
        %144 = tpu.memref_squeeze %143 : memref<1x!tpu.dma_semaphore, #tpu.memory_space<semaphore_mem>> -> memref<!tpu.dma_semaphore, #tpu.memory_space<semaphore_mem>>
        tpu.enqueue_dma source(%arg3 : memref<768x128xbf16, #tpu.memory_space<any>>) target(%alloca_64 : memref<768x128xbf16, #tpu.memory_space<vmem>>) target_semaphore(%144 : memref<!tpu.dma_semaphore, #tpu.memory_space<semaphore_mem>>)
        %c2_i32 = arith.constant 2 : i32
        %145 = tpu.memref_slice %138[%c2_i32] : memref<5x!tpu.dma_semaphore, #tpu.memory_space<semaphore_mem>> -> memref<1x!tpu.dma_semaphore, #tpu.memory_space<semaphore_mem>>
        %146 = tpu.memref_squeeze %145 : memref<1x!tpu.dma_semaphore, #tpu.memory_space<semaphore_mem>> -> memref<!tpu.dma_semaphore, #tpu.memory_space<semaphore_mem>>
        tpu.enqueue_dma source(%arg4 : memref<1x128xf32, #tpu.memory_space<any>>) target(%alloca_65 : memref<1x128xf32, #tpu.memory_space<vmem>>) target_semaphore(%146 : memref<!tpu.dma_semaphore, #tpu.memory_space<semaphore_mem>>)
        %c3_i32 = arith.constant 3 : i32
        %147 = tpu.memref_slice %138[%c3_i32] : memref<5x!tpu.dma_semaphore, #tpu.memory_space<semaphore_mem>> -> memref<1x!tpu.dma_semaphore, #tpu.memory_space<semaphore_mem>>
        %148 = tpu.memref_squeeze %147 : memref<1x!tpu.dma_semaphore, #tpu.memory_space<semaphore_mem>> -> memref<!tpu.dma_semaphore, #tpu.memory_space<semaphore_mem>>
        tpu.enqueue_dma source(%arg5 : memref<1x128xf32, #tpu.memory_space<any>>) target(%alloca_66 : memref<1x128xf32, #tpu.memory_space<vmem>>) target_semaphore(%148 : memref<!tpu.dma_semaphore, #tpu.memory_space<semaphore_mem>>)
        %c4_i32 = arith.constant 4 : i32
        %149 = tpu.memref_slice %138[%c4_i32] : memref<5x!tpu.dma_semaphore, #tpu.memory_space<semaphore_mem>> -> memref<1x!tpu.dma_semaphore, #tpu.memory_space<semaphore_mem>>
        %150 = tpu.memref_squeeze %149 : memref<1x!tpu.dma_semaphore, #tpu.memory_space<semaphore_mem>> -> memref<!tpu.dma_semaphore, #tpu.memory_space<semaphore_mem>>
        tpu.enqueue_dma source(%arg6 : memref<5x128xf32, #tpu.memory_space<any>>) target(%alloca_67 : memref<5x128xf32, #tpu.memory_space<vmem>>) target_semaphore(%150 : memref<!tpu.dma_semaphore, #tpu.memory_space<semaphore_mem>>)
        %c0_i32_72 = arith.constant 0 : i32
        %c0_i32_73 = arith.constant 0 : i32
        %c0_i32_74 = arith.constant 0 : i32
        %151 = tpu.memref_slice %arg2[%arg0, %c0_i32_73, %c0_i32_74] : memref<2x4x768xf32, #tpu.memory_space<any>> -> memref<1x4x768xf32, #tpu.memory_space<any>>
        %152 = tpu.memref_squeeze %151 : memref<1x4x768xf32, #tpu.memory_space<any>> -> memref<4x768xf32, #tpu.memory_space<any>>
        %153 = tpu.memref_slice %138[%c0_i32_72] : memref<5x!tpu.dma_semaphore, #tpu.memory_space<semaphore_mem>> -> memref<1x!tpu.dma_semaphore, #tpu.memory_space<semaphore_mem>>
        %154 = tpu.memref_squeeze %153 : memref<1x!tpu.dma_semaphore, #tpu.memory_space<semaphore_mem>> -> memref<!tpu.dma_semaphore, #tpu.memory_space<semaphore_mem>>
        tpu.wait_dma2 semaphore(%154 : memref<!tpu.dma_semaphore, #tpu.memory_space<semaphore_mem>>) src(%152 : memref<4x768xf32, #tpu.memory_space<any>>) dst(%alloca : memref<4x768xf32, #tpu.memory_space<vmem>>)
        %c1_i32_75 = arith.constant 1 : i32
        %155 = tpu.memref_slice %138[%c1_i32_75] : memref<5x!tpu.dma_semaphore, #tpu.memory_space<semaphore_mem>> -> memref<1x!tpu.dma_semaphore, #tpu.memory_space<semaphore_mem>>
        %156 = tpu.memref_squeeze %155 : memref<1x!tpu.dma_semaphore, #tpu.memory_space<semaphore_mem>> -> memref<!tpu.dma_semaphore, #tpu.memory_space<semaphore_mem>>
        tpu.wait_dma2 semaphore(%156 : memref<!tpu.dma_semaphore, #tpu.memory_space<semaphore_mem>>) src(%arg3 : memref<768x128xbf16, #tpu.memory_space<any>>) dst(%alloca_64 : memref<768x128xbf16, #tpu.memory_space<vmem>>)
        %c2_i32_76 = arith.constant 2 : i32
        %157 = tpu.memref_slice %138[%c2_i32_76] : memref<5x!tpu.dma_semaphore, #tpu.memory_space<semaphore_mem>> -> memref<1x!tpu.dma_semaphore, #tpu.memory_space<semaphore_mem>>
        %158 = tpu.memref_squeeze %157 : memref<1x!tpu.dma_semaphore, #tpu.memory_space<semaphore_mem>> -> memref<!tpu.dma_semaphore, #tpu.memory_space<semaphore_mem>>
        tpu.wait_dma2 semaphore(%158 : memref<!tpu.dma_semaphore, #tpu.memory_space<semaphore_mem>>) src(%arg4 : memref<1x128xf32, #tpu.memory_space<any>>) dst(%alloca_65 : memref<1x128xf32, #tpu.memory_space<vmem>>)
        %c3_i32_77 = arith.constant 3 : i32
        %159 = tpu.memref_slice %138[%c3_i32_77] : memref<5x!tpu.dma_semaphore, #tpu.memory_space<semaphore_mem>> -> memref<1x!tpu.dma_semaphore, #tpu.memory_space<semaphore_mem>>
        %160 = tpu.memref_squeeze %159 : memref<1x!tpu.dma_semaphore, #tpu.memory_space<semaphore_mem>> -> memref<!tpu.dma_semaphore, #tpu.memory_space<semaphore_mem>>
        tpu.wait_dma2 semaphore(%160 : memref<!tpu.dma_semaphore, #tpu.memory_space<semaphore_mem>>) src(%arg5 : memref<1x128xf32, #tpu.memory_space<any>>) dst(%alloca_66 : memref<1x128xf32, #tpu.memory_space<vmem>>)
        %c4_i32_78 = arith.constant 4 : i32
        %161 = tpu.memref_slice %138[%c4_i32_78] : memref<5x!tpu.dma_semaphore, #tpu.memory_space<semaphore_mem>> -> memref<1x!tpu.dma_semaphore, #tpu.memory_space<semaphore_mem>>
        %162 = tpu.memref_squeeze %161 : memref<1x!tpu.dma_semaphore, #tpu.memory_space<semaphore_mem>> -> memref<!tpu.dma_semaphore, #tpu.memory_space<semaphore_mem>>
        tpu.wait_dma2 semaphore(%162 : memref<!tpu.dma_semaphore, #tpu.memory_space<semaphore_mem>>) src(%arg6 : memref<5x128xf32, #tpu.memory_space<any>>) dst(%alloca_67 : memref<5x128xf32, #tpu.memory_space<vmem>>)
        %c0_79 = arith.constant 0 : index
        %c0_80 = arith.constant 0 : index
        %163 = vector.load %alloca[%c0_79, %c0_80] : memref<4x768xf32, #tpu.memory_space<vmem>>, vector<4x768xf32>
        %c0_81 = arith.constant 0 : index
        %c0_82 = arith.constant 0 : index
        %164 = vector.load %alloca_64[%c0_81, %c0_82] : memref<768x128xbf16, #tpu.memory_space<vmem>>, vector<768x128xbf16>
        %c0_83 = arith.constant 0 : index
        %c0_84 = arith.constant 0 : index
        %165 = vector.load %alloca_65[%c0_83, %c0_84] : memref<1x128xf32, #tpu.memory_space<vmem>>, vector<1x128xf32>
        %166 = arith.truncf %163 : vector<4x768xf32> to vector<4x768xbf16>
        %cst_85 = arith.constant dense<0.000000e+00> : vector<4x128xf32>
        %167 = tpu.matmul %166, %164, %cst_85 {dimension_numbers = #tpu.dot_dimension_numbers<[1], [0], [0], [1], [0, 0, 1, 1], [], []>} : vector<4x768xbf16>, vector<768x128xbf16>, vector<4x128xf32> -> vector<4x128xf32>
        %168 = vector.broadcast %165 : vector<1x128xf32> to vector<4x128xf32>
        %169 = arith.addf %167, %168 : vector<4x128xf32>
        %c0_86 = arith.constant 0 : index
        %c0_87 = arith.constant 0 : index
        %170 = vector.load %alloca_67[%c0_86, %c0_87] : memref<5x128xf32, #tpu.memory_space<vmem>>, vector<5x128xf32>
        %c0_88 = arith.constant 0 : index
        %c0_89 = arith.constant 0 : index
        %171 = vector.load %alloca_66[%c0_88, %c0_89] : memref<1x128xf32, #tpu.memory_space<vmem>>, vector<1x128xf32>
        %172 = vector.extract_strided_slice %170 {offsets = [0, 0], sizes = [1, 128], strides = [1, 1]} : vector<5x128xf32> to vector<1x128xf32>
        %173 = arith.addf %171, %172 : vector<1x128xf32>
        %c0_90 = arith.constant 0 : index
        %c0_91 = arith.constant 0 : index
        %174 = vector.load %arg22[%c0_90, %c0_91] : memref<8x128xf32, #tpu.memory_space<vmem>>, vector<1x128xf32>
        tpu.vector_store %arg22[%c0_90, %c0_91], %173 {strides = array<i32>} : memref<8x128xf32, #tpu.memory_space<vmem>>, vector<1x128xf32>,
        %175 = vector.extract_strided_slice %170 {offsets = [1, 0], sizes = [4, 128], strides = [1, 1]} : vector<5x128xf32> to vector<4x128xf32>
        %176 = arith.addf %169, %175 : vector<4x128xf32>
        %c1 = arith.constant 1 : index
        %c0_92 = arith.constant 0 : index
        %177 = vector.load %arg22[%c1, %c0_92] : memref<8x128xf32, #tpu.memory_space<vmem>>, vector<4x128xf32>
        tpu.vector_store %arg22[%c1, %c0_92], %176 {strides = array<i32>} : memref<8x128xf32, #tpu.memory_space<vmem>>, vector<4x128xf32>,
        %cst_93 = arith.constant 0.000000e+00 : f32
        %178 = vector.broadcast %cst_93 : f32 to vector<3x128xf32>
        %c5 = arith.constant 5 : index
        %c0_94 = arith.constant 0 : index
        %179 = vector.load %arg22[%c5, %c0_94] : memref<8x128xf32, #tpu.memory_space<vmem>>, vector<3x128xf32>
        tpu.vector_store %arg22[%c5, %c0_94], %178 {strides = array<i32>} : memref<8x128xf32, #tpu.memory_space<vmem>>, vector<3x128xf32>,
        tpu.yield
      }) : () -> ()
    } else {
    }
    %c0 = arith.constant 0 : index
    %c0_1 = arith.constant 0 : index
    %3 = vector.load %arg22[%c0, %c0_1] : memref<8x128xf32, #tpu.memory_space<vmem>>, vector<8x128xf32>
    %c0_2 = arith.constant 0 : index
    %c0_3 = arith.constant 0 : index
    %c0_4 = arith.constant 0 : index
    %4 = vector.load %arg9[%c0_2, %c0_3, %c0_4] : memref<1x1x128xf32, #tpu.memory_space<vmem>>, vector<1x1x128xf32>
    %5 = vector.shape_cast %4 : vector<1x1x128xf32> to vector<1x128xf32>
    %c0_5 = arith.constant 0 : index
    %c0_6 = arith.constant 0 : index
    %c0_7 = arith.constant 0 : index
    %6 = vector.load %arg10[%c0_5, %c0_6, %c0_7] : memref<1x1x128xf32, #tpu.memory_space<vmem>>, vector<1x1x128xf32>
    %7 = vector.shape_cast %6 : vector<1x1x128xf32> to vector<1x128xf32>
    %cst = arith.constant dense<0.000000e+00> : vector<8xf32>
    %8 = vector.multi_reduction <add>, %3, %cst [1] : vector<8x128xf32> to vector<8xf32>
    %9 = vector.shape_cast %8 : vector<8xf32> to vector<8x1xf32>
    %cst_8 = arith.constant 1.280000e+02 : f32
    %10 = vector.broadcast %cst_8 : f32 to vector<8x1xf32>
    %11 = arith.divf %9, %10 : vector<8x1xf32>
    %12 = vector.broadcast %11 : vector<8x1xf32> to vector<8x128xf32>
    %13 = arith.subf %3, %12 : vector<8x128xf32>
    %14 = arith.mulf %13, %13 : vector<8x128xf32>
    %cst_9 = arith.constant dense<0.000000e+00> : vector<8xf32>
    %15 = vector.multi_reduction <add>, %14, %cst_9 [1] : vector<8x128xf32> to vector<8xf32>
    %16 = vector.shape_cast %15 : vector<8xf32> to vector<8x1xf32>
    %cst_10 = arith.constant 1.280000e+02 : f32
    %17 = vector.broadcast %cst_10 : f32 to vector<8x1xf32>
    %18 = arith.divf %16, %17 : vector<8x1xf32>
    %19 = vector.broadcast %11 : vector<8x1xf32> to vector<8x128xf32>
    %20 = arith.subf %3, %19 : vector<8x128xf32>
    %cst_11 = arith.constant 9.99999974E-6 : f32
    %21 = vector.broadcast %cst_11 : f32 to vector<8x1xf32>
    %22 = arith.addf %18, %21 : vector<8x1xf32>
    %23 = math.rsqrt %22 : vector<8x1xf32>
    %24 = vector.broadcast %23 : vector<8x1xf32> to vector<8x128xf32>
    %25 = arith.mulf %20, %24 : vector<8x128xf32>
    %26 = vector.broadcast %5 : vector<1x128xf32> to vector<8x128xf32>
    %27 = arith.mulf %25, %26 : vector<8x128xf32>
    %28 = vector.broadcast %7 : vector<1x128xf32> to vector<8x128xf32>
    %29 = arith.addf %27, %28 : vector<8x128xf32>
    %c0_12 = arith.constant 0 : index
    %c0_13 = arith.constant 0 : index
    %c0_14 = arith.constant 0 : index
    %30 = vector.load %arg11[%c0_12, %c0_13, %c0_14] : memref<1x128x384xbf16, #tpu.memory_space<vmem>>, vector<1x128x384xbf16>
    %31 = vector.shape_cast %30 : vector<1x128x384xbf16> to vector<128x384xbf16>
    %c0_15 = arith.constant 0 : index
    %c0_16 = arith.constant 0 : index
    %c0_17 = arith.constant 0 : index
    %32 = vector.load %arg12[%c0_15, %c0_16, %c0_17] : memref<1x1x384xf32, #tpu.memory_space<vmem>>, vector<1x1x384xf32>
    %33 = vector.shape_cast %32 : vector<1x1x384xf32> to vector<1x384xf32>
    %34 = arith.truncf %29 : vector<8x128xf32> to vector<8x128xbf16>
    %cst_18 = arith.constant dense<0.000000e+00> : vector<8x384xf32>
    %35 = tpu.matmul %34, %31, %cst_18 {dimension_numbers = #tpu.dot_dimension_numbers<[1], [0], [0], [1], [0, 0, 1, 1], [], []>} : vector<8x128xbf16>, vector<128x384xbf16>, vector<8x384xf32> -> vector<8x384xf32>
    %36 = vector.broadcast %33 : vector<1x384xf32> to vector<8x384xf32>
    %37 = arith.addf %35, %36 : vector<8x384xf32>
    %38 = arith.truncf %37 : vector<8x384xf32> to vector<8x384xbf16>
    %39 = vector.extract_strided_slice %38 {offsets = [0, 0], sizes = [8, 128], strides = [1, 1]} : vector<8x384xbf16> to vector<8x128xbf16>
    %40 = vector.shape_cast %39 : vector<8x128xbf16> to vector<8x4x32xbf16>
    %41 = vector.extract_strided_slice %38 {offsets = [0, 128], sizes = [8, 128], strides = [1, 1]} : vector<8x384xbf16> to vector<8x128xbf16>
    %42 = vector.shape_cast %41 : vector<8x128xbf16> to vector<8x4x32xbf16>
    %43 = vector.extract_strided_slice %38 {offsets = [0, 256], sizes = [8, 128], strides = [1, 1]} : vector<8x384xbf16> to vector<8x128xbf16>
    %44 = vector.shape_cast %43 : vector<8x128xbf16> to vector<8x4x32xbf16>
    "tpu.trace_start"() <{level = 10 : i32, message = "qhd,khd->hqk"}> : () -> ()
    %cst_19 = arith.constant dense<0.000000e+00> : vector<4x8x8xf32>
    %45 = tpu.matmul %40, %42, %cst_19 {dimension_numbers = #tpu.dot_dimension_numbers<[2], [2], [0], [0], [0, 1, 0, 0, 1, 0], [1], [1]>} : vector<8x4x32xbf16>, vector<8x4x32xbf16>, vector<4x8x8xf32> -> vector<4x8x8xf32>
    "tpu.trace_stop"() : () -> ()
    %cst_20 = arith.constant 0.176776692 : f32
    %46 = vector.broadcast %cst_20 : f32 to vector<4x8x8xf32>
    %47 = arith.mulf %45, %46 : vector<4x8x8xf32>
    %48 = tpu.iota {dimensions = array<i32: 2>} : vector<4x8x8xi32>
    %c5_i32 = arith.constant 5 : i32
    %49 = vector.broadcast %c5_i32 : i32 to vector<4x8x8xi32>
    %50 = arith.cmpi slt, %48, %49 : vector<4x8x8xi32>
    %cst_21 = arith.constant -1.000000e+30 : f32
    %51 = vector.broadcast %cst_21 : f32 to vector<4x8x8xf32>
    %52 = arith.select %50, %47, %51 : vector<4x8x8xi1>, vector<4x8x8xf32>
    %cst_22 = arith.constant dense<0xFF800000> : vector<4x8xf32>
    %53 = vector.multi_reduction <maximumf>, %52, %cst_22 [2] : vector<4x8x8xf32> to vector<4x8xf32>
    %54 = vector.shape_cast %53 : vector<4x8xf32> to vector<4x8x1xf32>
    %55 = vector.broadcast %54 : vector<4x8x1xf32> to vector<4x8x8xf32>
    %56 = arith.subf %52, %55 : vector<4x8x8xf32>
    %57 = math.exp %56 : vector<4x8x8xf32>
    %cst_23 = arith.constant dense<0.000000e+00> : vector<4x8xf32>
    %58 = vector.multi_reduction <add>, %57, %cst_23 [2] : vector<4x8x8xf32> to vector<4x8xf32>
    %59 = vector.shape_cast %58 : vector<4x8xf32> to vector<4x8x1xf32>
    %60 = tpu.reciprocal %59 {approx = true} : vector<4x8x1xf32> -> vector<4x8x1xf32>
    %61 = vector.broadcast %60 : vector<4x8x1xf32> to vector<4x8x8xf32>
    %62 = arith.mulf %57, %61 : vector<4x8x8xf32>
    %63 = arith.truncf %62 : vector<4x8x8xf32> to vector<4x8x8xbf16>
    "tpu.trace_start"() <{level = 10 : i32, message = "hqk,khd->qhd"}> : () -> ()
    %cst_24 = arith.constant dense<0.000000e+00> : vector<4x32x8xf32>
    %64 = tpu.matmul %44, %63, %cst_24 {dimension_numbers = #tpu.dot_dimension_numbers<[0], [2], [2], [1], [0, 1, 0, 2, 1, 1], [1], [0]>} : vector<8x4x32xbf16>, vector<4x8x8xbf16>, vector<4x32x8xf32> -> vector<4x32x8xf32>
    %65 = tpu.transpose %64, [2, 0, 1] : vector<4x32x8xf32> -> vector<8x4x32xf32>
    "tpu.trace_stop"() : () -> ()
    %66 = vector.shape_cast %65 : vector<8x4x32xf32> to vector<8x128xf32>
    %c0_25 = arith.constant 0 : index
    %c0_26 = arith.constant 0 : index
    %c0_27 = arith.constant 0 : index
    %67 = vector.load %arg13[%c0_25, %c0_26, %c0_27] : memref<1x128x128xbf16, #tpu.memory_space<vmem>>, vector<1x128x128xbf16>
    %68 = vector.shape_cast %67 : vector<1x128x128xbf16> to vector<128x128xbf16>
    %c0_28 = arith.constant 0 : index
    %c0_29 = arith.constant 0 : index
    %c0_30 = arith.constant 0 : index
    %69 = vector.load %arg14[%c0_28, %c0_29, %c0_30] : memref<1x1x128xf32, #tpu.memory_space<vmem>>, vector<1x1x128xf32>
    %70 = vector.shape_cast %69 : vector<1x1x128xf32> to vector<1x128xf32>
    %71 = arith.truncf %66 : vector<8x128xf32> to vector<8x128xbf16>
    %cst_31 = arith.constant dense<0.000000e+00> : vector<8x128xf32>
    %72 = tpu.matmul %71, %68, %cst_31 {dimension_numbers = #tpu.dot_dimension_numbers<[1], [0], [0], [1], [0, 0, 1, 1], [], []>} : vector<8x128xbf16>, vector<128x128xbf16>, vector<8x128xf32> -> vector<8x128xf32>
    %73 = vector.broadcast %70 : vector<1x128xf32> to vector<8x128xf32>
    %74 = arith.addf %72, %73 : vector<8x128xf32>
    %75 = arith.addf %3, %74 : vector<8x128xf32>
    %c0_32 = arith.constant 0 : index
    %c0_33 = arith.constant 0 : index
    %c0_34 = arith.constant 0 : index
    %76 = vector.load %arg15[%c0_32, %c0_33, %c0_34] : memref<1x1x128xf32, #tpu.memory_space<vmem>>, vector<1x1x128xf32>
    %77 = vector.shape_cast %76 : vector<1x1x128xf32> to vector<1x128xf32>
    %c0_35 = arith.constant 0 : index
    %c0_36 = arith.constant 0 : index
    %c0_37 = arith.constant 0 : index
    %78 = vector.load %arg16[%c0_35, %c0_36, %c0_37] : memref<1x1x128xf32, #tpu.memory_space<vmem>>, vector<1x1x128xf32>
    %79 = vector.shape_cast %78 : vector<1x1x128xf32> to vector<1x128xf32>
    %cst_38 = arith.constant dense<0.000000e+00> : vector<8xf32>
    %80 = vector.multi_reduction <add>, %75, %cst_38 [1] : vector<8x128xf32> to vector<8xf32>
    %81 = vector.shape_cast %80 : vector<8xf32> to vector<8x1xf32>
    %cst_39 = arith.constant 1.280000e+02 : f32
    %82 = vector.broadcast %cst_39 : f32 to vector<8x1xf32>
    %83 = arith.divf %81, %82 : vector<8x1xf32>
    %84 = vector.broadcast %83 : vector<8x1xf32> to vector<8x128xf32>
    %85 = arith.subf %75, %84 : vector<8x128xf32>
    %86 = arith.mulf %85, %85 : vector<8x128xf32>
    %cst_40 = arith.constant dense<0.000000e+00> : vector<8xf32>
    %87 = vector.multi_reduction <add>, %86, %cst_40 [1] : vector<8x128xf32> to vector<8xf32>
    %88 = vector.shape_cast %87 : vector<8xf32> to vector<8x1xf32>
    %cst_41 = arith.constant 1.280000e+02 : f32
    %89 = vector.broadcast %cst_41 : f32 to vector<8x1xf32>
    %90 = arith.divf %88, %89 : vector<8x1xf32>
    %91 = vector.broadcast %83 : vector<8x1xf32> to vector<8x128xf32>
    %92 = arith.subf %75, %91 : vector<8x128xf32>
    %cst_42 = arith.constant 9.99999974E-6 : f32
    %93 = vector.broadcast %cst_42 : f32 to vector<8x1xf32>
    %94 = arith.addf %90, %93 : vector<8x1xf32>
    %95 = math.rsqrt %94 : vector<8x1xf32>
    %96 = vector.broadcast %95 : vector<8x1xf32> to vector<8x128xf32>
    %97 = arith.mulf %92, %96 : vector<8x128xf32>
    %98 = vector.broadcast %77 : vector<1x128xf32> to vector<8x128xf32>
    %99 = arith.mulf %97, %98 : vector<8x128xf32>
    %100 = vector.broadcast %79 : vector<1x128xf32> to vector<8x128xf32>
    %101 = arith.addf %99, %100 : vector<8x128xf32>
    %c0_43 = arith.constant 0 : index
    %c0_44 = arith.constant 0 : index
    %c0_45 = arith.constant 0 : index
    %102 = vector.load %arg17[%c0_43, %c0_44, %c0_45] : memref<1x128x512xbf16, #tpu.memory_space<vmem>>, vector<1x128x512xbf16>
    %103 = vector.shape_cast %102 : vector<1x128x512xbf16> to vector<128x512xbf16>
    %c0_46 = arith.constant 0 : index
    %c0_47 = arith.constant 0 : index
    %c0_48 = arith.constant 0 : index
    %104 = vector.load %arg18[%c0_46, %c0_47, %c0_48] : memref<1x1x512xf32, #tpu.memory_space<vmem>>, vector<1x1x512xf32>
    %105 = vector.shape_cast %104 : vector<1x1x512xf32> to vector<1x512xf32>
    %106 = arith.truncf %101 : vector<8x128xf32> to vector<8x128xbf16>
    %cst_49 = arith.constant dense<0.000000e+00> : vector<8x512xf32>
    %107 = tpu.matmul %106, %103, %cst_49 {dimension_numbers = #tpu.dot_dimension_numbers<[1], [0], [0], [1], [0, 0, 1, 1], [], []>} : vector<8x128xbf16>, vector<128x512xbf16>, vector<8x512xf32> -> vector<8x512xf32>
    %108 = vector.broadcast %105 : vector<1x512xf32> to vector<8x512xf32>
    %109 = arith.addf %107, %108 : vector<8x512xf32>
    %110 = arith.mulf %109, %109 : vector<8x512xf32>
    %111 = arith.mulf %109, %110 : vector<8x512xf32>
    %cst_50 = arith.constant 4.471500e-02 : f32
    %112 = vector.broadcast %cst_50 : f32 to vector<8x512xf32>
    %113 = arith.mulf %112, %111 : vector<8x512xf32>
    %114 = arith.addf %109, %113 : vector<8x512xf32>
    %cst_51 = arith.constant 0.797884583 : f32
    %115 = vector.broadcast %cst_51 : f32 to vector<8x512xf32>
    %116 = arith.mulf %115, %114 : vector<8x512xf32>
    %117 = math.tanh %116 : vector<8x512xf32>
    %cst_52 = arith.constant 1.000000e+00 : f32
    %118 = vector.broadcast %cst_52 : f32 to vector<8x512xf32>
    %119 = arith.addf %118, %117 : vector<8x512xf32>
    %cst_53 = arith.constant 5.000000e-01 : f32
    %120 = vector.broadcast %cst_53 : f32 to vector<8x512xf32>
    %121 = arith.mulf %120, %119 : vector<8x512xf32>
    %122 = arith.mulf %109, %121 : vector<8x512xf32>
    %c0_54 = arith.constant 0 : index
    %c0_55 = arith.constant 0 : index
    %c0_56 = arith.constant 0 : index
    %123 = vector.load %arg19[%c0_54, %c0_55, %c0_56] : memref<1x512x128xbf16, #tpu.memory_space<vmem>>, vector<1x512x128xbf16>
    %124 = vector.shape_cast %123 : vector<1x512x128xbf16> to vector<512x128xbf16>
    %c0_57 = arith.constant 0 : index
    %c0_58 = arith.constant 0 : index
    %c0_59 = arith.constant 0 : index
    %125 = vector.load %arg20[%c0_57, %c0_58, %c0_59] : memref<1x1x128xf32, #tpu.memory_space<vmem>>, vector<1x1x128xf32>
    %126 = vector.shape_cast %125 : vector<1x1x128xf32> to vector<1x128xf32>
    %127 = arith.truncf %122 : vector<8x512xf32> to vector<8x512xbf16>
    %cst_60 = arith.constant dense<0.000000e+00> : vector<8x128xf32>
    %128 = tpu.matmul %127, %124, %cst_60 {dimension_numbers = #tpu.dot_dimension_numbers<[1], [0], [0], [1], [0, 0, 1, 1], [], []>} : vector<8x512xbf16>, vector<512x128xbf16>, vector<8x128xf32> -> vector<8x128xf32>
    %129 = vector.broadcast %126 : vector<1x128xf32> to vector<8x128xf32>
    %130 = arith.addf %128, %129 : vector<8x128xf32>
    %131 = arith.addf %75, %130 : vector<8x128xf32>
    %c1_i32 = arith.constant 1 : i32
    %132 = arith.cmpi ne, %arg1, %c1_i32 : i32
    %133 = arith.extui %132 : i1 to i32
    %c0_i32_61 = arith.constant 0 : i32
    %134 = arith.cmpi ne, %133, %c0_i32_61 : i32
    scf.if %134 {
      %c0_64 = arith.constant 0 : index
      %c0_65 = arith.constant 0 : index
      %138 = vector.load %arg22[%c0_64, %c0_65] : memref<8x128xf32, #tpu.memory_space<vmem>>, vector<8x128xf32>
      tpu.vector_store %arg22[%c0_64, %c0_65], %131 {strides = array<i32>} : memref<8x128xf32, #tpu.memory_space<vmem>>, vector<8x128xf32>,
    } else {
    }
    %c1_i32_62 = arith.constant 1 : i32
    %135 = arith.cmpi eq, %arg1, %c1_i32_62 : i32
    %136 = arith.extui %135 : i1 to i32
    %c0_i32_63 = arith.constant 0 : i32
    %137 = arith.cmpi ne, %136, %c0_i32_63 : i32
    scf.if %137 {
      %138 = vector.extract_strided_slice %131 {offsets = [0, 0], sizes = [1, 128], strides = [1, 1]} : vector<8x128xf32> to vector<1x128xf32>
      %c0_64 = arith.constant 0 : index
      %c0_65 = arith.constant 0 : index
      %139 = vector.load %arg7[%c0_64, %c0_65] : memref<1x128xf32, #tpu.memory_space<vmem>>, vector<1x128xf32>
      %c0_66 = arith.constant 0 : index
      %c0_67 = arith.constant 0 : index
      %140 = vector.load %arg8[%c0_66, %c0_67] : memref<1x128xf32, #tpu.memory_space<vmem>>, vector<1x128xf32>
      %cst_68 = arith.constant dense<0.000000e+00> : vector<1xf32>
      %141 = vector.multi_reduction <add>, %138, %cst_68 [1] : vector<1x128xf32> to vector<1xf32>
      %142 = vector.shape_cast %141 : vector<1xf32> to vector<1x1xf32>
      %cst_69 = arith.constant 1.280000e+02 : f32
      %143 = vector.broadcast %cst_69 : f32 to vector<1x1xf32>
      %144 = arith.divf %142, %143 : vector<1x1xf32>
      %145 = vector.broadcast %144 : vector<1x1xf32> to vector<1x128xf32>
      %146 = arith.subf %138, %145 : vector<1x128xf32>
      %147 = arith.mulf %146, %146 : vector<1x128xf32>
      %cst_70 = arith.constant dense<0.000000e+00> : vector<1xf32>
      %148 = vector.multi_reduction <add>, %147, %cst_70 [1] : vector<1x128xf32> to vector<1xf32>
      %149 = vector.shape_cast %148 : vector<1xf32> to vector<1x1xf32>
      %cst_71 = arith.constant 1.280000e+02 : f32
      %150 = vector.broadcast %cst_71 : f32 to vector<1x1xf32>
      %151 = arith.divf %149, %150 : vector<1x1xf32>
      %152 = vector.broadcast %144 : vector<1x1xf32> to vector<1x128xf32>
      %153 = arith.subf %138, %152 : vector<1x128xf32>
      %cst_72 = arith.constant 9.99999974E-6 : f32
      %154 = vector.broadcast %cst_72 : f32 to vector<1x1xf32>
      %155 = arith.addf %151, %154 : vector<1x1xf32>
      %156 = math.rsqrt %155 : vector<1x1xf32>
      %157 = vector.broadcast %156 : vector<1x1xf32> to vector<1x128xf32>
      %158 = arith.mulf %153, %157 : vector<1x128xf32>
      %159 = arith.mulf %158, %139 : vector<1x128xf32>
      %160 = arith.addf %159, %140 : vector<1x128xf32>
      %c0_73 = arith.constant 0 : index
      %c0_74 = arith.constant 0 : index
      %c0_75 = arith.constant 0 : index
      %161 = vector.load %arg21[%c0_73, %c0_74, %c0_75] : memref<1x1x128xf32, #tpu.memory_space<vmem>>, vector<1x1x128xf32>
      %162 = vector.shape_cast %161 : vector<1x1x128xf32> to vector<1x128xf32>
      %163 = vector.shape_cast %160 : vector<1x128xf32> to vector<1x1x128xf32>
      tpu.vector_store %arg21[%c0_73, %c0_74, %c0_75], %163 {strides = array<i32>} : memref<1x1x128xf32, #tpu.memory_space<vmem>>, vector<1x1x128xf32>,
    } else {
    }
    return
  }
  func.func @transform_5(%arg0: i32, %arg1: i32) -> (i32, i32) {
    %c0_i32 = arith.constant 0 : i32
    %c0_i32_0 = arith.constant 0 : i32
    %c0_i32_1 = arith.constant 0 : i32
    return %c0_i32, %c0_i32_0 : i32, i32
  }
  func.func @transform_6(%arg0: i32, %arg1: i32) -> (i32, i32) {
    %c0_i32 = arith.constant 0 : i32
    %c0_i32_0 = arith.constant 0 : i32
    %c0_i32_1 = arith.constant 0 : i32
    return %c0_i32, %c0_i32_0 : i32, i32
  }
  func.func @transform_7(%arg0: i32, %arg1: i32) -> (i32, i32, i32) {
    %c0_i32 = arith.constant 0 : i32
    %c0_i32_0 = arith.constant 0 : i32
    %c0_i32_1 = arith.constant 0 : i32
    return %arg1, %c0_i32, %c0_i32_0 : i32, i32, i32
  }
  func.func @transform_8(%arg0: i32, %arg1: i32) -> (i32, i32, i32) {
    %c0_i32 = arith.constant 0 : i32
    %c0_i32_0 = arith.constant 0 : i32
    %c0_i32_1 = arith.constant 0 : i32
    return %arg1, %c0_i32, %c0_i32_0 : i32, i32, i32
  }
  func.func @transform_9(%arg0: i32, %arg1: i32) -> (i32, i32, i32) {
    %c0_i32 = arith.constant 0 : i32
    %c0_i32_0 = arith.constant 0 : i32
    %c0_i32_1 = arith.constant 0 : i32
    return %arg1, %c0_i32, %c0_i32_0 : i32, i32, i32
  }
  func.func @transform_10(%arg0: i32, %arg1: i32) -> (i32, i32, i32) {
    %c0_i32 = arith.constant 0 : i32
    %c0_i32_0 = arith.constant 0 : i32
    %c0_i32_1 = arith.constant 0 : i32
    return %arg1, %c0_i32, %c0_i32_0 : i32, i32, i32
  }
  func.func @transform_11(%arg0: i32, %arg1: i32) -> (i32, i32, i32) {
    %c0_i32 = arith.constant 0 : i32
    %c0_i32_0 = arith.constant 0 : i32
    %c0_i32_1 = arith.constant 0 : i32
    return %arg1, %c0_i32, %c0_i32_0 : i32, i32, i32
  }
  func.func @transform_12(%arg0: i32, %arg1: i32) -> (i32, i32, i32) {
    %c0_i32 = arith.constant 0 : i32
    %c0_i32_0 = arith.constant 0 : i32
    %c0_i32_1 = arith.constant 0 : i32
    return %arg1, %c0_i32, %c0_i32_0 : i32, i32, i32
  }
  func.func @transform_13(%arg0: i32, %arg1: i32) -> (i32, i32, i32) {
    %c0_i32 = arith.constant 0 : i32
    %c0_i32_0 = arith.constant 0 : i32
    %c0_i32_1 = arith.constant 0 : i32
    return %arg1, %c0_i32, %c0_i32_0 : i32, i32, i32
  }
  func.func @transform_14(%arg0: i32, %arg1: i32) -> (i32, i32, i32) {
    %c0_i32 = arith.constant 0 : i32
    %c0_i32_0 = arith.constant 0 : i32
    %c0_i32_1 = arith.constant 0 : i32
    return %arg1, %c0_i32, %c0_i32_0 : i32, i32, i32
  }
  func.func @transform_15(%arg0: i32, %arg1: i32) -> (i32, i32, i32) {
    %c0_i32 = arith.constant 0 : i32
    %c0_i32_0 = arith.constant 0 : i32
    %c0_i32_1 = arith.constant 0 : i32
    return %arg1, %c0_i32, %c0_i32_0 : i32, i32, i32
  }
  func.func @transform_16(%arg0: i32, %arg1: i32) -> (i32, i32, i32) {
    %c0_i32 = arith.constant 0 : i32
    %c0_i32_0 = arith.constant 0 : i32
    %c0_i32_1 = arith.constant 0 : i32
    return %arg1, %c0_i32, %c0_i32_0 : i32, i32, i32
  }
  func.func @transform_17(%arg0: i32, %arg1: i32) -> (i32, i32, i32) {
    %c0_i32 = arith.constant 0 : i32
    %c0_i32_0 = arith.constant 0 : i32
    %c0_i32_1 = arith.constant 0 : i32
    return %arg1, %c0_i32, %c0_i32_0 : i32, i32, i32
  }
  func.func @transform_18(%arg0: i32, %arg1: i32) -> (i32, i32, i32) {
    %c0_i32 = arith.constant 0 : i32
    %c0_i32_0 = arith.constant 0 : i32
    %c0_i32_1 = arith.constant 0 : i32
    return %arg1, %c0_i32, %c0_i32_0 : i32, i32, i32
  }
  func.func @transform_19(%arg0: i32, %arg1: i32) -> (i32, i32, i32) {
    %c0_i32 = arith.constant 0 : i32
    %c0_i32_0 = arith.constant 0 : i32
    %c0_i32_1 = arith.constant 0 : i32
    return %arg0, %c0_i32, %c0_i32_0 : i32, i32, i32
  }
}

</mosaic_0001>

<llo_original>
// kernel: musk_vision_forward.1
$region0: #{musk_vision_forward.1}
  #allocation0 [shape = 'u32[]', space=smem, size = 0x4, offset = 0x4, fixed_abs, tag = 'smem constant byte address 0x4 - core index']
  #allocation1 [shape = 'u32[144,128]{1,0:T(1,128)}', space=vmem, size = 0x12000, scoped, tag = 'internal scratch']
  #allocation2 [shape = 'f32[8,128]{1,0:T(8,128)}', space=vmem, size = 0x1000, scoped, tag = 'scratch operand']
  #allocation22 [shape = 's32[]', space=sflag, size = 0x4, offset = 0, fixed_abs, tag = 'sflag constant byte address 0x0 - dummy sync flag']
  #allocation23 [shape = 's32[]', space=sflag, size = 0x4, offset = 0, fixed_abs, tag = 'sflag constant byte address 0x0 - dummy sync flag']
  #allocation24 [shape = 's32[]', space=sflag, size = 0x4, offset = 0, fixed_abs, tag = 'sflag constant byte address 0x0 - dummy sync flag']
  #allocation25 [shape = 's32[]', space=sflag, size = 0x4, offset = 0, fixed_abs, tag = 'sflag constant byte address 0x0 - dummy sync flag']
  #allocation26 [shape = 's32[]', space=sflag, size = 0x4, offset = 0, fixed_abs, tag = 'sflag constant byte address 0x0 - dummy sync flag']
  #allocation27 [shape = 'u32[]', space=smem, size = 0x4, offset = 0x44, fixed_abs, tag = 'smem constant byte address 0x44 - assertion arg 0']
  #allocation28 [shape = 'u32[]', space=smem, size = 0x4, offset = 0x48, fixed_abs, tag = 'smem constant byte address 0x48 - assertion arg 1']
  #allocation29 [shape = 's32[]', space=sflag, size = 0x4, offset = 0, fixed_abs, tag = 'sflag constant byte address 0x0 - dummy sync flag']
  %s0 = inlined_call_operand.vmem [shape: f32[2,4,768], index: 0, kind: input, shape index: {}]
  %s1 = inlined_call_operand.vmem [shape: bf16[768,128], index: 1, kind: input, shape index: {}]
  %s2 = inlined_call_operand.vmem [shape: f32[1,128], index: 2, kind: input, shape index: {}]
  %s3 = inlined_call_operand.hbm [shape: f32[1,128], index: 3, kind: input, shape index: {}]
  %s4 = inlined_call_operand.vmem [shape: f32[5,128], index: 4, kind: input, shape index: {}]
  %s5 = inlined_call_operand.vmem [shape: f32[1,128], index: 5, kind: input, shape index: {}]
  %s6 = inlined_call_operand.hbm [shape: f32[1,128], index: 6, kind: input, shape index: {}]
  %s7 = inlined_call_operand.vmem [shape: f32[2,1,128], index: 7, kind: input, shape index: {}]
  %s8 = inlined_call_operand.hbm [shape: f32[2,1,128], index: 8, kind: input, shape index: {}]
  %s9 = inlined_call_operand.vmem [shape: bf16[2,128,384], index: 9, kind: input, shape index: {}]
  %s10 = inlined_call_operand.vmem [shape: f32[2,1,384], index: 10, kind: input, shape index: {}]
  %s11 = inlined_call_operand.hbm [shape: bf16[2,128,128], index: 11, kind: input, shape index: {}]
  %s12 = inlined_call_operand.vmem [shape: f32[2,1,128], index: 12, kind: input, shape index: {}]
  %s13 = inlined_call_operand.hbm [shape: f32[2,1,128], index: 13, kind: input, shape index: {}]
  %s14 = inlined_call_operand.hbm [shape: f32[2,1,128], index: 14, kind: input, shape index: {}]
  %s15 = inlined_call_operand.vmem [shape: bf16[2,128,512], index: 15, kind: input, shape index: {}]
  %s16 = inlined_call_operand.hbm [shape: f32[2,1,512], index: 16, kind: input, shape index: {}]
  %s17 = inlined_call_operand.vmem [shape: bf16[2,512,128], index: 17, kind: input, shape index: {}]
  %s18 = inlined_call_operand.hbm [shape: f32[2,1,128], index: 18, kind: input, shape index: {}]
  %s19 = inlined_call_operand.hbm [shape: f32[2,1,128], index: 19, kind: output, shape index: {}]
  %s20 = sld [smem:[#allocation0]]
  $region262: #{musk_vision_forward.1} parent=0
    _
  %s22 = ssub.s32 1, %s20
  %s23 = scalar_select 0, %s22, %s20
  $region1: #{musk_vision_forward.1} parent=0
    #allocation3 [shape = 'u8[512]{0}', space=vmem, size = 0x400, scoped, tag = 'input window, operand 6, single buffered']
    #allocation4 [shape = 's32[2]{0}', space=sflag, size = 0x8, scoped, tag = 'scoped memory for musk_vision_forward.1']
    #allocation5 [shape = 's32[2]{0}', space=sflag, size = 0x8, scoped, tag = 'scoped memory for musk_vision_forward.1']
    #allocation6 [shape = 'u8[1024]{0}', space=vmem, size = 0x400, scoped, tag = 'input window, operand 8']
    #allocation7 [shape = 's32[2]{0}', space=sflag, size = 0x8, scoped, tag = 'scoped memory for musk_vision_forward.1']
    #allocation8 [shape = 'u8[65536]{0}', space=vmem, size = 0x10000, scoped, tag = 'input window, operand 11']
    #allocation9 [shape = 'u8[1024]{0}', space=vmem, size = 0x400, scoped, tag = 'input window, operand 13']
    #allocation10 [shape = 's32[2]{0}', space=sflag, size = 0x8, scoped, tag = 'scoped memory for musk_vision_forward.1']
    #allocation11 [shape = 'u8[1024]{0}', space=vmem, size = 0x400, scoped, tag = 'input window, operand 14']
    #allocation12 [shape = 'u8[4096]{0}', space=vmem, size = 0x1000, scoped, tag = 'input window, operand 16']
    #allocation13 [shape = 's32[2]{0}', space=sflag, size = 0x8, scoped, tag = 'scoped memory for musk_vision_forward.1']
    #allocation14 [shape = 'u8[1024]{0}', space=vmem, size = 0x400, scoped, tag = 'input window, operand 18']
    #allocation15 [shape = 'u8[1024]{0}', space=vmem, size = 0x400, scoped, tag = 'output window, operand 0']
    %24 = vsyncpa [#allocation4], 0
    %25 = vsyncpa [#allocation7], 0
    %s26 = scalar_lea.sflag [#allocation7], 1
    %27 = vsyncpa %s26, 0
    %28 = vsyncpa [#allocation10], 0
    %s29 = scalar_lea.sflag [#allocation10], 1
    %30 = vsyncpa %s29, 0
    %31 = vsyncpa [#allocation13], 0
    %s32 = scalar_lea.sflag [#allocation13], 1
    %33 = vsyncpa %s32, 0
    %34 = vsyncpa [#allocation5], 0
    %s35 = scalar_lea.sflag [#allocation5], 1
    %36 = vsyncpa %s35, 0
    loop: start=0, step=1, limit=6
    $region2: #{musk_vision_forward.1} parent=1 // loop_pre_header
      _
    $region3: #{musk_vision_forward.1} parent=1 // loop_header
      %s38 = sphi 0, %s42
      %p39 = scmp.ge.s32.totalorder %s38, 6
      %s45 = sphi 0, %s57
      %s46 = sphi 0, %s53
      %s47 = sphi 0, %s45
      %s48 = sphi 0, %s46
      %s49 = sphi 0, %s47
      %s50 = sphi 0, %s48
      %s58 = sphi 0, %s58
      %s60 = sphi 0, %s58
      %s61 = sphi 0, %s60
      %s75 = sphi 0, %s61
      %s79 = sphi 0, %s79
      %s81 = sphi 0, %s79
      %s82 = sphi 0, %s81
      %s96 = sphi 0, %s82
      %s102 = sphi 0, %s104
      %s105 = sphi 0, %s102
      %s106 = sphi 0, %s105
      %s122 = sphi 0, %s106
      %s128 = sphi 0, %s130
      %s131 = sphi 0, %s128
      %s132 = sphi 0, %s131
      %s148 = sphi 0, %s132
      %s154 = sphi 0, %s156
      %s157 = sphi 0, %s154
      %s158 = sphi 0, %s157
      %s174 = sphi 0, %s158
      %s180 = sphi 0, %s182
      %s183 = sphi 0, %s180
      %s184 = sphi 0, %s183
      %s200 = sphi 0, %s184
      %s206 = sphi 0, %s208
      %s209 = sphi 0, %s206
      %s210 = sphi 0, %s209
      %s226 = sphi 0, %s210
      %s232 = sphi 0, %s234
      %s235 = sphi 0, %s232
      %s236 = sphi 0, %s235
      %s252 = sphi 0, %s236
      %s258 = sphi 0, %s260
      %s261 = sphi 0, %s258
      %s262 = sphi 0, %s261
      %s278 = sphi 0, %s262
      %s284 = sphi 0, %s286
      %s287 = sphi 0, %s284
      %s288 = sphi 0, %s287
      %s304 = sphi 0, %s288
      %s310 = sphi 0, %s312
      %s313 = sphi 0, %s310
      %s314 = sphi 0, %s313
      %s330 = sphi 0, %s314
      %s336 = sphi 0, %s338
      %s339 = sphi 0, %s336
      %s340 = sphi 0, %s339
      %s356 = sphi 0, %s340
      %s362 = sphi 0, %s364
      %s365 = sphi 0, %s362
      %s366 = sphi 0, %s365
      %s382 = sphi 0, %s366
      %s388 = sphi 0, %s390
      %s391 = sphi 0, %s388
      %s392 = sphi 0, %s391
      %s408 = sphi 0, %s392
      %s414 = sphi 0, %s416
      %s417 = sphi 0, %s414
      %s418 = sphi 0, %s417
      %s434 = sphi 0, %s418
    $region4: #{musk_vision_forward.1} parent=1 // loop_header_branch
      %41 = sbr.rel (%p39) target = $region8
    $region5: #{musk_vision_forward.1} parent=1 // loop_body
      %s43 = ssub.s32 %s38, 1
      %s44 = ssub.s32 %s38, 2
      %s51 = sadd.s32 1, %s46
      %p52 = scmp.ge.s32.totalorder %s51, 2
      %s53 = scalar_select %p52, 0, %s51
      %s54 = sadd.s32 1, %s45
      %s55 = scalar_select %p52, %s54, %s45
      %p56 = scmp.ge.s32.totalorder %s55, 2
      %s57 = scalar_select %p56, 0, %s55
      %s59 = sadd.s32 %s58, 1
      %p62 = scmp.eq.s32.totalorder %s38, 3
      %p63 = scmp.ne.s32.totalorder %s58, %s60
      %p64 = scmp.eq.s32.totalorder %s38, 0
      %p65 = por %p63, %p64
      %p66 = scmp.ne.s32.totalorder %s58, %s60
      %p67 = scmp.eq.s32.totalorder %s43, 3
      %p68 = por %p66, %p67
      %p69 = scmp.ne.s32.totalorder %s60, %s61
      %p70 = scmp.eq.s32.totalorder %s43, 0
      %p71 = por %p69, %p70
      %p72 = scmp.ne.s32.totalorder %s60, %s61
      %p73 = scmp.eq.s32.totalorder %s44, 3
      %p74 = por %p72, %p73
      %p76 = scmp.ne.s32.totalorder %s61, %s75
      %p77 = scmp.eq.s32.totalorder %s44, 0
      %p78 = por %p76, %p77
      %s80 = sadd.s32 %s79, 1
      %p83 = scmp.eq.s32.totalorder %s38, 3
      %p84 = scmp.ne.s32.totalorder %s79, %s81
      %p85 = scmp.eq.s32.totalorder %s38, 0
      %p86 = por %p84, %p85
      %p87 = scmp.ne.s32.totalorder %s79, %s81
      %p88 = scmp.eq.s32.totalorder %s43, 3
      %p89 = por %p87, %p88
      %p90 = scmp.ne.s32.totalorder %s81, %s82
      %p91 = scmp.eq.s32.totalorder %s43, 0
      %p92 = por %p90, %p91
      %p93 = scmp.ne.s32.totalorder %s81, %s82
      %p94 = scmp.eq.s32.totalorder %s44, 3
      %p95 = por %p93, %p94
      %p97 = scmp.ne.s32.totalorder %s82, %s96
      %p98 = scmp.eq.s32.totalorder %s44, 0
      %p99 = por %p97, %p98
      %s100 = ssub.s32 %s46, %s53
      %p101 = scmp.eq.s32.totalorder %s100, 0
      %s103 = sadd.s32 %s102, 1
      %s104 = scalar_select %p101, %s102, %s103
      %p107 = pneg %p101
      %p108 = scmp.eq.s32.totalorder %s38, 3
      %p109 = por %p107, %p108
      %p110 = scmp.ne.s32.totalorder %s102, %s105
      %p111 = scmp.eq.s32.totalorder %s38, 0
      %p112 = por %p110, %p111
      %p113 = scmp.ne.s32.totalorder %s102, %s105
      %p114 = scmp.eq.s32.totalorder %s43, 3
      %p115 = por %p113, %p114
      %p116 = scmp.ne.s32.totalorder %s105, %s106
      %p117 = scmp.eq.s32.totalorder %s43, 0
      %p118 = por %p116, %p117
      %p119 = scmp.ne.s32.totalorder %s105, %s106
      %p120 = scmp.eq.s32.totalorder %s44, 3
      %p121 = por %p119, %p120
      %p123 = scmp.ne.s32.totalorder %s106, %s122
      %p124 = scmp.eq.s32.totalorder %s44, 0
      %p125 = por %p123, %p124
      %s126 = ssub.s32 %s46, %s53
      %p127 = scmp.eq.s32.totalorder %s126, 0
      %s129 = sadd.s32 %s128, 1
      %s130 = scalar_select %p127, %s128, %s129
      %p133 = pneg %p127
      %p134 = scmp.eq.s32.totalorder %s38, 3
      %p135 = por %p133, %p134
      %p136 = scmp.ne.s32.totalorder %s128, %s131
      %p137 = scmp.eq.s32.totalorder %s38, 0
      %p138 = por %p136, %p137
      %p139 = scmp.ne.s32.totalorder %s128, %s131
      %p140 = scmp.eq.s32.totalorder %s43, 3
      %p141 = por %p139, %p140
      %p142 = scmp.ne.s32.totalorder %s131, %s132
      %p143 = scmp.eq.s32.totalorder %s43, 0
      %p144 = por %p142, %p143
      %p145 = scmp.ne.s32.totalorder %s131, %s132
      %p146 = scmp.eq.s32.totalorder %s44, 3
      %p147 = por %p145, %p146
      %p149 = scmp.ne.s32.totalorder %s132, %s148
      %p150 = scmp.eq.s32.totalorder %s44, 0
      %p151 = por %p149, %p150
      %s152 = ssub.s32 %s46, %s53
      %p153 = scmp.eq.s32.totalorder %s152, 0
      %s155 = sadd.s32 %s154, 1
      %s156 = scalar_select %p153, %s154, %s155
      %p159 = pneg %p153
      %p160 = scmp.eq.s32.totalorder %s38, 3
      %p161 = por %p159, %p160
      %p162 = scmp.ne.s32.totalorder %s154, %s157
      %p163 = scmp.eq.s32.totalorder %s38, 0
      %p164 = por %p162, %p163
      %p165 = scmp.ne.s32.totalorder %s154, %s157
      %p166 = scmp.eq.s32.totalorder %s43, 3
      %p167 = por %p165, %p166
      %p168 = scmp.ne.s32.totalorder %s157, %s158
      %p169 = scmp.eq.s32.totalorder %s43, 0
      %p170 = por %p168, %p169
      %p171 = scmp.ne.s32.totalorder %s157, %s158
      %p172 = scmp.eq.s32.totalorder %s44, 3
      %p173 = por %p171, %p172
      %p175 = scmp.ne.s32.totalorder %s158, %s174
      %p176 = scmp.eq.s32.totalorder %s44, 0
      %p177 = por %p175, %p176
      %s178 = ssub.s32 %s46, %s53
      %p179 = scmp.eq.s32.totalorder %s178, 0
      %s181 = sadd.s32 %s180, 1
      %s182 = scalar_select %p179, %s180, %s181
      %p185 = pneg %p179
      %p186 = scmp.eq.s32.totalorder %s38, 3
      %p187 = por %p185, %p186
      %p188 = scmp.ne.s32.totalorder %s180, %s183
      %p189 = scmp.eq.s32.totalorder %s38, 0
      %p190 = por %p188, %p189
      %p191 = scmp.ne.s32.totalorder %s180, %s183
      %p192 = scmp.eq.s32.totalorder %s43, 3
      %p193 = por %p191, %p192
      %p194 = scmp.ne.s32.totalorder %s183, %s184
      %p195 = scmp.eq.s32.totalorder %s43, 0
      %p196 = por %p194, %p195
      %p197 = scmp.ne.s32.totalorder %s183, %s184
      %p198 = scmp.eq.s32.totalorder %s44, 3
      %p199 = por %p197, %p198
      %p201 = scmp.ne.s32.totalorder %s184, %s200
      %p202 = scmp.eq.s32.totalorder %s44, 0
      %p203 = por %p201, %p202
      %s204 = ssub.s32 %s46, %s53
      %p205 = scmp.eq.s32.totalorder %s204, 0
      %s207 = sadd.s32 %s206, 1
      %s208 = scalar_select %p205, %s206, %s207
      %p211 = pneg %p205
      %p212 = scmp.eq.s32.totalorder %s38, 3
      %p213 = por %p211, %p212
      %p214 = scmp.ne.s32.totalorder %s206, %s209
      %p215 = scmp.eq.s32.totalorder %s38, 0
      %p216 = por %p214, %p215
      %p217 = scmp.ne.s32.totalorder %s206, %s209
      %p218 = scmp.eq.s32.totalorder %s43, 3
      %p219 = por %p217, %p218
      %p220 = scmp.ne.s32.totalorder %s209, %s210
      %p221 = scmp.eq.s32.totalorder %s43, 0
      %p222 = por %p220, %p221
      %p223 = scmp.ne.s32.totalorder %s209, %s210
      %p224 = scmp.eq.s32.totalorder %s44, 3
      %p225 = por %p223, %p224
      %p227 = scmp.ne.s32.totalorder %s210, %s226
      %p228 = scmp.eq.s32.totalorder %s44, 0
      %p229 = por %p227, %p228
      %s230 = ssub.s32 %s46, %s53
      %p231 = scmp.eq.s32.totalorder %s230, 0
      %s233 = sadd.s32 %s232, 1
      %s234 = scalar_select %p231, %s232, %s233
      %p237 = pneg %p231
      %p238 = scmp.eq.s32.totalorder %s38, 3
      %p239 = por %p237, %p238
      %p240 = scmp.ne.s32.totalorder %s232, %s235
      %p241 = scmp.eq.s32.totalorder %s38, 0
      %p242 = por %p240, %p241
      %p243 = scmp.ne.s32.totalorder %s232, %s235
      %p244 = scmp.eq.s32.totalorder %s43, 3
      %p245 = por %p243, %p244
      %p246 = scmp.ne.s32.totalorder %s235, %s236
      %p247 = scmp.eq.s32.totalorder %s43, 0
      %p248 = por %p246, %p247
      %p249 = scmp.ne.s32.totalorder %s235, %s236
      %p250 = scmp.eq.s32.totalorder %s44, 3
      %p251 = por %p249, %p250
      %p253 = scmp.ne.s32.totalorder %s236, %s252
      %p254 = scmp.eq.s32.totalorder %s44, 0
      %p255 = por %p253, %p254
      %s256 = ssub.s32 %s46, %s53
      %p257 = scmp.eq.s32.totalorder %s256, 0
      %s259 = sadd.s32 %s258, 1
      %s260 = scalar_select %p257, %s258, %s259
      %p263 = pneg %p257
      %p264 = scmp.eq.s32.totalorder %s38, 3
      %p265 = por %p263, %p264
      %p266 = scmp.ne.s32.totalorder %s258, %s261
      %p267 = scmp.eq.s32.totalorder %s38, 0
      %p268 = por %p266, %p267
      %p269 = scmp.ne.s32.totalorder %s258, %s261
      %p270 = scmp.eq.s32.totalorder %s43, 3
      %p271 = por %p269, %p270
      %p272 = scmp.ne.s32.totalorder %s261, %s262
      %p273 = scmp.eq.s32.totalorder %s43, 0
      %p274 = por %p272, %p273
      %p275 = scmp.ne.s32.totalorder %s261, %s262
      %p276 = scmp.eq.s32.totalorder %s44, 3
      %p277 = por %p275, %p276
      %p279 = scmp.ne.s32.totalorder %s262, %s278
      %p280 = scmp.eq.s32.totalorder %s44, 0
      %p281 = por %p279, %p280
      %s282 = ssub.s32 %s46, %s53
      %p283 = scmp.eq.s32.totalorder %s282, 0
      %s285 = sadd.s32 %s284, 1
      %s286 = scalar_select %p283, %s284, %s285
      %p289 = pneg %p283
      %p290 = scmp.eq.s32.totalorder %s38, 3
      %p291 = por %p289, %p290
      %p292 = scmp.ne.s32.totalorder %s284, %s287
      %p293 = scmp.eq.s32.totalorder %s38, 0
      %p294 = por %p292, %p293
      %p295 = scmp.ne.s32.totalorder %s284, %s287
      %p296 = scmp.eq.s32.totalorder %s43, 3
      %p297 = por %p295, %p296
      %p298 = scmp.ne.s32.totalorder %s287, %s288
      %p299 = scmp.eq.s32.totalorder %s43, 0
      %p300 = por %p298, %p299
      %p301 = scmp.ne.s32.totalorder %s287, %s288
      %p302 = scmp.eq.s32.totalorder %s44, 3
      %p303 = por %p301, %p302
      %p305 = scmp.ne.s32.totalorder %s288, %s304
      %p306 = scmp.eq.s32.totalorder %s44, 0
      %p307 = por %p305, %p306
      %s308 = ssub.s32 %s46, %s53
      %p309 = scmp.eq.s32.totalorder %s308, 0
      %s311 = sadd.s32 %s310, 1
      %s312 = scalar_select %p309, %s310, %s311
      %p315 = pneg %p309
      %p316 = scmp.eq.s32.totalorder %s38, 3
      %p317 = por %p315, %p316
      %p318 = scmp.ne.s32.totalorder %s310, %s313
      %p319 = scmp.eq.s32.totalorder %s38, 0
      %p320 = por %p318, %p319
      %p321 = scmp.ne.s32.totalorder %s310, %s313
      %p322 = scmp.eq.s32.totalorder %s43, 3
      %p323 = por %p321, %p322
      %p324 = scmp.ne.s32.totalorder %s313, %s314
      %p325 = scmp.eq.s32.totalorder %s43, 0
      %p326 = por %p324, %p325
      %p327 = scmp.ne.s32.totalorder %s313, %s314
      %p328 = scmp.eq.s32.totalorder %s44, 3
      %p329 = por %p327, %p328
      %p331 = scmp.ne.s32.totalorder %s314, %s330
      %p332 = scmp.eq.s32.totalorder %s44, 0
      %p333 = por %p331, %p332
      %s334 = ssub.s32 %s46, %s53
      %p335 = scmp.eq.s32.totalorder %s334, 0
      %s337 = sadd.s32 %s336, 1
      %s338 = scalar_select %p335, %s336, %s337
      %p341 = pneg %p335
      %p342 = scmp.eq.s32.totalorder %s38, 3
      %p343 = por %p341, %p342
      %p344 = scmp.ne.s32.totalorder %s336, %s339
      %p345 = scmp.eq.s32.totalorder %s38, 0
      %p346 = por %p344, %p345
      %p347 = scmp.ne.s32.totalorder %s336, %s339
      %p348 = scmp.eq.s32.totalorder %s43, 3
      %p349 = por %p347, %p348
      %p350 = scmp.ne.s32.totalorder %s339, %s340
      %p351 = scmp.eq.s32.totalorder %s43, 0
      %p352 = por %p350, %p351
      %p353 = scmp.ne.s32.totalorder %s339, %s340
      %p354 = scmp.eq.s32.totalorder %s44, 3
      %p355 = por %p353, %p354
      %p357 = scmp.ne.s32.totalorder %s340, %s356
      %p358 = scmp.eq.s32.totalorder %s44, 0
      %p359 = por %p357, %p358
      %s360 = ssub.s32 %s46, %s53
      %p361 = scmp.eq.s32.totalorder %s360, 0
      %s363 = sadd.s32 %s362, 1
      %s364 = scalar_select %p361, %s362, %s363
      %p367 = pneg %p361
      %p368 = scmp.eq.s32.totalorder %s38, 3
      %p369 = por %p367, %p368
      %p370 = scmp.ne.s32.totalorder %s362, %s365
      %p371 = scmp.eq.s32.totalorder %s38, 0
      %p372 = por %p370, %p371
      %p373 = scmp.ne.s32.totalorder %s362, %s365
      %p374 = scmp.eq.s32.totalorder %s43, 3
      %p375 = por %p373, %p374
      %p376 = scmp.ne.s32.totalorder %s365, %s366
      %p377 = scmp.eq.s32.totalorder %s43, 0
      %p378 = por %p376, %p377
      %p379 = scmp.ne.s32.totalorder %s365, %s366
      %p380 = scmp.eq.s32.totalorder %s44, 3
      %p381 = por %p379, %p380
      %p383 = scmp.ne.s32.totalorder %s366, %s382
      %p384 = scmp.eq.s32.totalorder %s44, 0
      %p385 = por %p383, %p384
      %s386 = ssub.s32 %s46, %s53
      %p387 = scmp.eq.s32.totalorder %s386, 0
      %s389 = sadd.s32 %s388, 1
      %s390 = scalar_select %p387, %s388, %s389
      %p393 = pneg %p387
      %p394 = scmp.eq.s32.totalorder %s38, 3
      %p395 = por %p393, %p394
      %p396 = scmp.ne.s32.totalorder %s388, %s391
      %p397 = scmp.eq.s32.totalorder %s38, 0
      %p398 = por %p396, %p397
      %p399 = scmp.ne.s32.totalorder %s388, %s391
      %p400 = scmp.eq.s32.totalorder %s43, 3
      %p401 = por %p399, %p400
      %p402 = scmp.ne.s32.totalorder %s391, %s392
      %p403 = scmp.eq.s32.totalorder %s43, 0
      %p404 = por %p402, %p403
      %p405 = scmp.ne.s32.totalorder %s391, %s392
      %p406 = scmp.eq.s32.totalorder %s44, 3
      %p407 = por %p405, %p406
      %p409 = scmp.ne.s32.totalorder %s392, %s408
      %p410 = scmp.eq.s32.totalorder %s44, 0
      %p411 = por %p409, %p410
      %s412 = ssub.s32 %s45, %s57
      %p413 = scmp.eq.s32.totalorder %s412, 0
      %s415 = sadd.s32 %s414, 1
      %s416 = scalar_select %p413, %s414, %s415
      %p419 = pneg %p413
      %p420 = scmp.eq.s32.totalorder %s38, 3
      %p421 = por %p419, %p420
      %p422 = scmp.ne.s32.totalorder %s414, %s417
      %p423 = scmp.eq.s32.totalorder %s38, 0
      %p424 = por %p422, %p423
      %p425 = scmp.ne.s32.totalorder %s414, %s417
      %p426 = scmp.eq.s32.totalorder %s43, 3
      %p427 = por %p425, %p426
      %p428 = scmp.ne.s32.totalorder %s417, %s418
      %p429 = scmp.eq.s32.totalorder %s43, 0
      %p430 = por %p428, %p429
      %p431 = scmp.ne.s32.totalorder %s417, %s418
      %p432 = scmp.eq.s32.totalorder %s44, 3
      %p433 = por %p431, %p432
      %p435 = scmp.ne.s32.totalorder %s418, %s434
      %p436 = scmp.eq.s32.totalorder %s44, 0
      %p437 = por %p435, %p436
      %p438 = scmp.le.s32.totalorder 1, %s38
      %p439 = scmp.lt.s32.totalorder %s38, 5
      %p440 = pnand %p438, %p439
      %p441 = pneg %p440
      // Predicated region
      $region9: #{musk_vision_forward.1} parent=5 // pred_check
        _
      $region10: #{musk_vision_forward.1} parent=5 // pred_check_branch
        %443 = sbr.rel (%p440) target = $region12
      $region11: #{musk_vision_forward.1} parent=5 // pred_region
        %s444 = ssub.s32 %s38, 1
        // Predicated region
        $region13: #{musk_vision_forward.1} parent=11 // pred_check
          %p445 = pneg %p71
        $region14: #{musk_vision_forward.1} parent=11 // pred_check_branch
          %447 = sbr.rel (%p445) target = $region16
        $region15: #{musk_vision_forward.1} parent=11 // pred_region
          _
        $region16: #{musk_vision_forward.1} parent=11 // pred_fallthru
          _
        // Predicated region
        $region17: #{musk_vision_forward.1} parent=11 // pred_check
          %p448 = pneg %p92
        $region18: #{musk_vision_forward.1} parent=11 // pred_check_branch
          %450 = sbr.rel (%p448) target = $region20
        $region19: #{musk_vision_forward.1} parent=11 // pred_region
          %s452 = ssub.s32 16, 16
          %453 = vsyncadd [#allocation4], %s452
          %s455 = sshll.u32 [#allocation3], 4
          %s456 = int_to_ptr.vmem [resolvable:$true] %s455
          %458 = dma.hbm_to_vmem [thread:$0]  %s6, 16, %s456, [#allocation4]
        $region20: #{musk_vision_forward.1} parent=11 // pred_fallthru
          _
      $region12: #{musk_vision_forward.1} parent=5 // pred_fallthru
        _
      %p459 = scmp.lt.s32.totalorder %s38, 4
      // Predicated region
      $region21: #{musk_vision_forward.1} parent=5 // pred_check
        %p460 = pneg %p459
      $region22: #{musk_vision_forward.1} parent=5 // pred_check_branch
        %462 = sbr.rel (%p460) target = $region24
      $region23: #{musk_vision_forward.1} parent=5 // pred_region
        // Predicated region
        $region25: #{musk_vision_forward.1} parent=23 // pred_check
          %p463 = pneg %p112
        $region26: #{musk_vision_forward.1} parent=23 // pred_check_branch
          %465 = sbr.rel (%p463) target = $region28
        $region27: #{musk_vision_forward.1} parent=23 // pred_region
          %p466 = scmp.lt.s32.totalorder %s46, 1
          %s467 = scalar_select %p466, %s46, 1
          %s468 = scalar_lea.vmem %s7, %s467
        $region28: #{musk_vision_forward.1} parent=23 // pred_fallthru
          _
        // Predicated region
        $region29: #{musk_vision_forward.1} parent=23 // pred_check
          %p469 = pneg %p138
        $region30: #{musk_vision_forward.1} parent=23 // pred_check_branch
          %471 = sbr.rel (%p469) target = $region32
        $region31: #{musk_vision_forward.1} parent=23 // pred_region
          %s472 = sand.u32 %s38, 1
          %s473 = scalar_lea.sflag [#allocation7], %s472
          %s474 = sand.u32 %s128, 1
          %s475 = scalar_lea.vmem [#allocation6], %s474
          %s477 = ssub.s32 16, 16
          %478 = vsyncadd %s473, %s477
          %s479 = smul.addr %s46, 16
          %s480 = scalar_lea.hbm %s8, %s479
          %s482 = sshll.u32 %s475, 4
          %s483 = int_to_ptr.vmem [resolvable:$true] %s482
          %485 = dma.hbm_to_vmem [thread:$0]  %s480, 16, %s483, %s473
        $region32: #{musk_vision_forward.1} parent=23 // pred_fallthru
          _
        // Predicated region
        $region33: #{musk_vision_forward.1} parent=23 // pred_check
          %p486 = pneg %p164
        $region34: #{musk_vision_forward.1} parent=23 // pred_check_branch
          %488 = sbr.rel (%p486) target = $region36
        $region35: #{musk_vision_forward.1} parent=23 // pred_region
          %p489 = scmp.lt.s32.totalorder %s46, 1
          %s490 = scalar_select %p489, %s46, 1
          %s491 = smul.addr %s490, 48
          %s492 = smul.addr %s491, 4
          %s493 = scalar_lea.vmem %s9, %s492
        $region36: #{musk_vision_forward.1} parent=23 // pred_fallthru
          _
        // Predicated region
        $region37: #{musk_vision_forward.1} parent=23 // pred_check
          %p494 = pneg %p190
        $region38: #{musk_vision_forward.1} parent=23 // pred_check_branch
          %496 = sbr.rel (%p494) target = $region40
        $region39: #{musk_vision_forward.1} parent=23 // pred_region
          %p497 = scmp.lt.s32.totalorder %s46, 1
          %s498 = scalar_select %p497, %s46, 1
          %s499 = smul.addr %s498, 3
          %s500 = scalar_lea.vmem %s10, %s499
        $region40: #{musk_vision_forward.1} parent=23 // pred_fallthru
          _
        // Predicated region
        $region41: #{musk_vision_forward.1} parent=23 // pred_check
          %p501 = pneg %p216
        $region42: #{musk_vision_forward.1} parent=23 // pred_check_branch
          %503 = sbr.rel (%p501) target = $region44
        $region43: #{musk_vision_forward.1} parent=23 // pred_region
          %s504 = sand.u32 %s38, 1
          %s505 = scalar_lea.sflag [#allocation7], %s504
          %s506 = sand.u32 %s206, 1
          %s507 = smul.addr %s506, 64
          %s508 = scalar_lea.vmem [#allocation8], %s507
          %s510 = ssub.s32 1024, 1024
          %511 = vsyncadd %s505, %s510
          %s512 = smul.addr %s46, 16
          %s513 = smul.addr %s512, 64
          %s514 = scalar_lea.hbm %s11, %s513
          %s515 = sshll.u32 %s508, 4
          %s516 = int_to_ptr.vmem [resolvable:$true] %s515
          %521 = dma.hbm_to_vmem [thread:$0]  %s514, 1024, %s516, %s505, 64, 64, 4
        $region44: #{musk_vision_forward.1} parent=23 // pred_fallthru
          _
        // Predicated region
        $region45: #{musk_vision_forward.1} parent=23 // pred_check
          %p522 = pneg %p242
        $region46: #{musk_vision_forward.1} parent=23 // pred_check_branch
          %524 = sbr.rel (%p522) target = $region48
        $region47: #{musk_vision_forward.1} parent=23 // pred_region
          %p525 = scmp.lt.s32.totalorder %s46, 1
          %s526 = scalar_select %p525, %s46, 1
          %s527 = scalar_lea.vmem %s12, %s526
        $region48: #{musk_vision_forward.1} parent=23 // pred_fallthru
          _
        // Predicated region
        $region49: #{musk_vision_forward.1} parent=23 // pred_check
          %p528 = pneg %p268
        $region50: #{musk_vision_forward.1} parent=23 // pred_check_branch
          %530 = sbr.rel (%p528) target = $region52
        $region51: #{musk_vision_forward.1} parent=23 // pred_region
          %s531 = sand.u32 %s38, 1
          %s532 = scalar_lea.sflag [#allocation10], %s531
          %s533 = sand.u32 %s258, 1
          %s534 = scalar_lea.vmem [#allocation9], %s533
          %s536 = ssub.s32 16, 16
          %537 = vsyncadd %s532, %s536
          %s538 = smul.addr %s46, 16
          %s539 = scalar_lea.hbm %s13, %s538
          %s541 = sshll.u32 %s534, 4
          %s542 = int_to_ptr.vmem [resolvable:$true] %s541
          %544 = dma.hbm_to_vmem [thread:$0]  %s539, 16, %s542, %s532
        $region52: #{musk_vision_forward.1} parent=23 // pred_fallthru
          _
        // Predicated region
        $region53: #{musk_vision_forward.1} parent=23 // pred_check
          %p545 = pneg %p294
        $region54: #{musk_vision_forward.1} parent=23 // pred_check_branch
          %547 = sbr.rel (%p545) target = $region56
        $region55: #{musk_vision_forward.1} parent=23 // pred_region
          %s548 = sand.u32 %s38, 1
          %s549 = scalar_lea.sflag [#allocation10], %s548
          %s550 = sand.u32 %s284, 1
          %s551 = scalar_lea.vmem [#allocation11], %s550
          %s553 = ssub.s32 16, 16
          %554 = vsyncadd %s549, %s553
          %s555 = smul.addr %s46, 16
          %s556 = scalar_lea.hbm %s14, %s555
          %s558 = sshll.u32 %s551, 4
          %s559 = int_to_ptr.vmem [resolvable:$true] %s558
          %561 = dma.hbm_to_vmem [thread:$0]  %s556, 16, %s559, %s549
        $region56: #{musk_vision_forward.1} parent=23 // pred_fallthru
          _
        // Predicated region
        $region57: #{musk_vision_forward.1} parent=23 // pred_check
          %p562 = pneg %p320
        $region58: #{musk_vision_forward.1} parent=23 // pred_check_branch
          %564 = sbr.rel (%p562) target = $region60
        $region59: #{musk_vision_forward.1} parent=23 // pred_region
          %p565 = scmp.lt.s32.totalorder %s46, 1
          %s566 = scalar_select %p565, %s46, 1
          %s567 = smul.addr %s566, 64
          %s568 = smul.addr %s567, 4
          %s569 = scalar_lea.vmem %s15, %s568
        $region60: #{musk_vision_forward.1} parent=23 // pred_fallthru
          _
        // Predicated region
        $region61: #{musk_vision_forward.1} parent=23 // pred_check
          %p570 = pneg %p346
        $region62: #{musk_vision_forward.1} parent=23 // pred_check_branch
          %572 = sbr.rel (%p570) target = $region64
        $region63: #{musk_vision_forward.1} parent=23 // pred_region
          %s573 = sand.u32 %s38, 1
          %s574 = scalar_lea.sflag [#allocation13], %s573
          %s575 = sand.u32 %s336, 1
          %s576 = smul.addr %s575, 4
          %s577 = scalar_lea.vmem [#allocation12], %s576
          %s579 = ssub.s32 64, 64
          %580 = vsyncadd %s574, %s579
          %s581 = smul.addr %s46, 4
          %s582 = smul.addr %s581, 16
          %s583 = scalar_lea.hbm %s16, %s582
          %s585 = sshll.u32 %s577, 4
          %s586 = int_to_ptr.vmem [resolvable:$true] %s585
          %588 = dma.hbm_to_vmem [thread:$0]  %s583, 64, %s586, %s574
        $region64: #{musk_vision_forward.1} parent=23 // pred_fallthru
          _
        // Predicated region
        $region65: #{musk_vision_forward.1} parent=23 // pred_check
          %p589 = pneg %p372
        $region66: #{musk_vision_forward.1} parent=23 // pred_check_branch
          %591 = sbr.rel (%p589) target = $region68
        $region67: #{musk_vision_forward.1} parent=23 // pred_region
          %p592 = scmp.lt.s32.totalorder %s46, 1
          %s593 = scalar_select %p592, %s46, 1
          %s594 = smul.addr %s593, 64
          %s595 = smul.addr %s594, 4
          %s596 = scalar_lea.vmem %s17, %s595
        $region68: #{musk_vision_forward.1} parent=23 // pred_fallthru
          _
        // Predicated region
        $region69: #{musk_vision_forward.1} parent=23 // pred_check
          %p597 = pneg %p398
        $region70: #{musk_vision_forward.1} parent=23 // pred_check_branch
          %599 = sbr.rel (%p597) target = $region72
        $region71: #{musk_vision_forward.1} parent=23 // pred_region
          %s600 = sand.u32 %s38, 1
          %s601 = scalar_lea.sflag [#allocation13], %s600
          %s602 = sand.u32 %s388, 1
          %s603 = scalar_lea.vmem [#allocation14], %s602
          %s605 = ssub.s32 16, 16
          %606 = vsyncadd %s601, %s605
          %s607 = smul.addr %s46, 16
          %s608 = scalar_lea.hbm %s18, %s607
          %s610 = sshll.u32 %s603, 4
          %s611 = int_to_ptr.vmem [resolvable:$true] %s610
          %613 = dma.hbm_to_vmem [thread:$0]  %s608, 16, %s611, %s601
        $region72: #{musk_vision_forward.1} parent=23 // pred_fallthru
          _
      $region24: #{musk_vision_forward.1} parent=5 // pred_fallthru
        _
      %p614 = scmp.le.s32.totalorder 1, %s38
      %p615 = scmp.lt.s32.totalorder %s38, 5
      %p616 = pnand %p614, %p615
      %p617 = pneg %p616
      // Predicated region
      $region73: #{musk_vision_forward.1} parent=5 // pred_check
        _
      $region74: #{musk_vision_forward.1} parent=5 // pred_check_branch
        %619 = sbr.rel (%p616) target = $region76
      $region75: #{musk_vision_forward.1} parent=5 // pred_region
        %s620 = ssub.s32 %s38, 1
        // Predicated region
        $region77: #{musk_vision_forward.1} parent=75 // pred_check
          %p621 = pneg %p92
        $region78: #{musk_vision_forward.1} parent=75 // pred_check_branch
          %623 = sbr.rel (%p621) target = $region80
        $region79: #{musk_vision_forward.1} parent=75 // pred_region
          %624 = dma.done [#allocation4], 16
        $region80: #{musk_vision_forward.1} parent=75 // pred_fallthru
          _
        %s625 = sand.u32 %s43, 1
        %s626 = scalar_lea.sflag [#allocation7], %s625
        %s627 = sand.u32 %s131, 1
        %s628 = scalar_lea.vmem [#allocation6], %s627
        // Predicated region
        $region81: #{musk_vision_forward.1} parent=75 // pred_check
          %p629 = pneg %p144
        $region82: #{musk_vision_forward.1} parent=75 // pred_check_branch
          %631 = sbr.rel (%p629) target = $region84
        $region83: #{musk_vision_forward.1} parent=75 // pred_region
          %632 = dma.done %s626, 16
        $region84: #{musk_vision_forward.1} parent=75 // pred_fallthru
          _
        %s633 = sand.u32 %s43, 1
        %s634 = scalar_lea.sflag [#allocation7], %s633
        %s635 = sand.u32 %s209, 1
        %s636 = smul.addr %s635, 64
        %s637 = scalar_lea.vmem [#allocation8], %s636
        // Predicated region
        $region85: #{musk_vision_forward.1} parent=75 // pred_check
          %p638 = pneg %p222
        $region86: #{musk_vision_forward.1} parent=75 // pred_check_branch
          %640 = sbr.rel (%p638) target = $region88
        $region87: #{musk_vision_forward.1} parent=75 // pred_region
          %641 = dma.done %s634, 1024
        $region88: #{musk_vision_forward.1} parent=75 // pred_fallthru
          _
        %s642 = sand.u32 %s43, 1
        %s643 = scalar_lea.sflag [#allocation10], %s642
        %s644 = sand.u32 %s261, 1
        %s645 = scalar_lea.vmem [#allocation9], %s644
        // Predicated region
        $region89: #{musk_vision_forward.1} parent=75 // pred_check
          %p646 = pneg %p274
        $region90: #{musk_vision_forward.1} parent=75 // pred_check_branch
          %648 = sbr.rel (%p646) target = $region92
        $region91: #{musk_vision_forward.1} parent=75 // pred_region
          %649 = dma.done %s643, 16
        $region92: #{musk_vision_forward.1} parent=75 // pred_fallthru
          _
        %s650 = sand.u32 %s43, 1
        %s651 = scalar_lea.sflag [#allocation10], %s650
        %s652 = sand.u32 %s287, 1
        %s653 = scalar_lea.vmem [#allocation11], %s652
        // Predicated region
        $region93: #{musk_vision_forward.1} parent=75 // pred_check
          %p654 = pneg %p300
        $region94: #{musk_vision_forward.1} parent=75 // pred_check_branch
          %656 = sbr.rel (%p654) target = $region96
        $region95: #{musk_vision_forward.1} parent=75 // pred_region
          %657 = dma.done %s651, 16
        $region96: #{musk_vision_forward.1} parent=75 // pred_fallthru
          _
        %s658 = sand.u32 %s43, 1
        %s659 = scalar_lea.sflag [#allocation13], %s658
        %s660 = sand.u32 %s339, 1
        %s661 = smul.addr %s660, 4
        %s662 = scalar_lea.vmem [#allocation12], %s661
        // Predicated region
        $region97: #{musk_vision_forward.1} parent=75 // pred_check
          %p663 = pneg %p352
        $region98: #{musk_vision_forward.1} parent=75 // pred_check_branch
          %665 = sbr.rel (%p663) target = $region100
        $region99: #{musk_vision_forward.1} parent=75 // pred_region
          %666 = dma.done %s659, 64
        $region100: #{musk_vision_forward.1} parent=75 // pred_fallthru
          _
        %s667 = sand.u32 %s43, 1
        %s668 = scalar_lea.sflag [#allocation13], %s667
        %s669 = sand.u32 %s391, 1
        %s670 = scalar_lea.vmem [#allocation14], %s669
        // Predicated region
        $region101: #{musk_vision_forward.1} parent=75 // pred_check
          %p671 = pneg %p404
        $region102: #{musk_vision_forward.1} parent=75 // pred_check_branch
          %673 = sbr.rel (%p671) target = $region104
        $region103: #{musk_vision_forward.1} parent=75 // pred_region
          %674 = dma.done %s668, 16
        $region104: #{musk_vision_forward.1} parent=75 // pred_fallthru
          _
        %p675 = pneg %p71
        %p676 = pneg %p68
        %p677 = pneg %p92
        %p678 = pneg %p89
        %p679 = scmp.lt.s32.totalorder %s48, 1
        %s680 = scalar_select %p679, %s48, 1
        %s681 = scalar_lea.vmem %s7, %s680
        %p682 = pneg %p118
        %p683 = pneg %p115
        %s684 = sand.u32 %s43, 1
        %s685 = scalar_lea.sflag [#allocation7], %s684
        %s686 = sand.u32 %s131, 1
        %s687 = scalar_lea.vmem [#allocation6], %s686
        %p688 = pneg %p144
        %p689 = pneg %p141
        %p690 = scmp.lt.s32.totalorder %s48, 1
        %s691 = scalar_select %p690, %s48, 1
        %s692 = smul.addr %s691, 48
        %s693 = smul.addr %s692, 4
        %s694 = scalar_lea.vmem %s9, %s693
        %p695 = pneg %p170
        %p696 = pneg %p167
        %p697 = scmp.lt.s32.totalorder %s48, 1
        %s698 = scalar_select %p697, %s48, 1
        %s699 = smul.addr %s698, 3
        %s700 = scalar_lea.vmem %s10, %s699
        %p701 = pneg %p196
        %p702 = pneg %p193
        %s703 = sand.u32 %s43, 1
        %s704 = scalar_lea.sflag [#allocation7], %s703
        %s705 = sand.u32 %s209, 1
        %s706 = smul.addr %s705, 64
        %s707 = scalar_lea.vmem [#allocation8], %s706
        %p708 = pneg %p222
        %p709 = pneg %p219
        %p710 = scmp.lt.s32.totalorder %s48, 1
        %s711 = scalar_select %p710, %s48, 1
        %s712 = scalar_lea.vmem %s12, %s711
        %p713 = pneg %p248
        %p714 = pneg %p245
        %s715 = sand.u32 %s43, 1
        %s716 = scalar_lea.sflag [#allocation10], %s715
        %s717 = sand.u32 %s261, 1
        %s718 = scalar_lea.vmem [#allocation9], %s717
        %p719 = pneg %p274
        %p720 = pneg %p271
        %s721 = sand.u32 %s43, 1
        %s722 = scalar_lea.sflag [#allocation10], %s721
        %s723 = sand.u32 %s287, 1
        %s724 = scalar_lea.vmem [#allocation11], %s723
        %p725 = pneg %p300
        %p726 = pneg %p297
        %p727 = scmp.lt.s32.totalorder %s48, 1
        %s728 = scalar_select %p727, %s48, 1
        %s729 = smul.addr %s728, 64
        %s730 = smul.addr %s729, 4
        %s731 = scalar_lea.vmem %s15, %s730
        %p732 = pneg %p326
        %p733 = pneg %p323
        %s734 = sand.u32 %s43, 1
        %s735 = scalar_lea.sflag [#allocation13], %s734
        %s736 = sand.u32 %s339, 1
        %s737 = smul.addr %s736, 4
        %s738 = scalar_lea.vmem [#allocation12], %s737
        %p739 = pneg %p352
        %p740 = pneg %p349
        %p741 = scmp.lt.s32.totalorder %s48, 1
        %s742 = scalar_select %p741, %s48, 1
        %s743 = smul.addr %s742, 64
        %s744 = smul.addr %s743, 4
        %s745 = scalar_lea.vmem %s17, %s744
        %p746 = pneg %p378
        %p747 = pneg %p375
        %s748 = sand.u32 %s43, 1
        %s749 = scalar_lea.sflag [#allocation13], %s748
        %s750 = sand.u32 %s391, 1
        %s751 = scalar_lea.vmem [#allocation14], %s750
        %p752 = pneg %p404
        %p753 = pneg %p401
        %p754 = pneg %p430
        %p755 = pneg %p427
        %s756 = sand.u32 %s417, 1
        %s757 = scalar_lea.sflag [#allocation5], %s756
        %s758 = sand.u32 %s417, 1
        %s759 = scalar_lea.vmem [#allocation15], %s758
        %p760 = scmp.lt.s32.totalorder %s48, 1
        %s761 = scalar_select %p760, %s48, 1
        %s762 = scalar_lea.vmem %s7, %s761
        %p763 = scmp.lt.s32.totalorder %s48, 1
        %s764 = scalar_select %p763, %s48, 1
        %s765 = smul.addr %s764, 48
        %s766 = smul.addr %s765, 4
        %s767 = scalar_lea.vmem %s9, %s766
        %p768 = scmp.lt.s32.totalorder %s48, 1
        %s769 = scalar_select %p768, %s48, 1
        %s770 = smul.addr %s769, 3
        %s771 = scalar_lea.vmem %s10, %s770
        %p772 = scmp.lt.s32.totalorder %s48, 1
        %s773 = scalar_select %p772, %s48, 1
        %s774 = scalar_lea.vmem %s12, %s773
        %p775 = scmp.lt.s32.totalorder %s48, 1
        %s776 = scalar_select %p775, %s48, 1
        %s777 = smul.addr %s776, 64
        %s778 = smul.addr %s777, 4
        %s779 = scalar_lea.vmem %s15, %s778
        %p780 = scmp.lt.s32.totalorder %s48, 1
        %s781 = scalar_select %p780, %s48, 1
        %s782 = smul.addr %s781, 64
        %s783 = smul.addr %s782, 4
        %s784 = scalar_lea.vmem %s17, %s783
        %p786 = scmp.eq.s32.totalorder %s48, 0
        // Predicated region
        $region105: #{musk_vision_forward.1} parent=75 // pred_check
          %p787 = pneg %p786
        $region106: #{musk_vision_forward.1} parent=75 // pred_check_branch
          %789 = sbr.rel (%p787) target = $region108
        $region107: #{musk_vision_forward.1} parent=75 // pred_region
          $region109: #{musk_vision_forward.1} parent=107
            #allocation16 [shape = 'u8[12288]{0}', space=vmem, size = 0x3000, scoped, tag = 'scoped memory for musk_vision_forward.1']
            #allocation17 [shape = 'u8[196608]{0}', space=vmem, size = 0x30000, scoped, tag = 'scoped memory for musk_vision_forward.1']
            #allocation18 [shape = 'u8[512]{0}', space=vmem, size = 0x400, scoped, tag = 'scoped memory for musk_vision_forward.1']
            #allocation19 [shape = 'u8[512]{0}', space=vmem, size = 0x400, scoped, tag = 'scoped memory for musk_vision_forward.1']
            #allocation20 [shape = 'u8[2560]{0}', space=vmem, size = 0xc00, scoped, tag = 'scoped memory for musk_vision_forward.1']
            #allocation21 [shape = 's32[5]{0}', space=sflag, size = 0x14, scoped, tag = 'scoped memory for musk_vision_forward.1']
            %s790 = smul.u32 %s47, 6
            %s791 = smul.addr %s790, 4
            %s792 = scalar_lea.vmem %s0, %s791
            %p794 = scmp.lt.u32.totalorder 24, 8
            %p795 = pneg %p794
            // Predicated region
            $region110: #{musk_vision_forward.1} parent=109 // pred_check
              _
            $region111: #{musk_vision_forward.1} parent=109 // pred_check_branch
              %797 = sbr.rel (%p794) target = $region113
            $region112: #{musk_vision_forward.1} parent=109 // pred_region
              %s812 = sand.u32 24, 7
              %p813 = scmp.eq.s32.totalorder %s812, 0
              // Predicated region
              $region125: #{musk_vision_forward.1} parent=112 // pred_check
                %p814 = pneg %p813
              $region126: #{musk_vision_forward.1} parent=112 // pred_check_branch
                %816 = sbr.rel (%p814) target = $region128
              $region127: #{musk_vision_forward.1} parent=112 // pred_region
                loop: start=0, step=1, limit=1
                $region129: #{musk_vision_forward.1} parent=127 // loop_pre_header
                  _
                $region130: #{musk_vision_forward.1} parent=127 // loop_header
                  %s818 = sphi 0, %s822
                  %p819 = scmp.ge.s32.totalorder %s818, 1
                  %s823 = sphi %s792, %s792
                  %s824 = sphi [#allocation16], [#allocation16]
                $region131: #{musk_vision_forward.1} parent=127 // loop_header_branch
                  %821 = sbr.rel (%p819) target = $region135
                $region132: #{musk_vision_forward.1} parent=127 // loop_body
                  %v825 = vld [vmem:[%s823] sm:$0xff]
                  %826 = vst [vmem:[%s824] sm:$0xff] %v825
                  %v827 = vld [vmem:[%s823 + $0x8] sm:$0xff]
                  %828 = vst [vmem:[%s824 + $0x8] sm:$0xff] %v827
                  %v829 = vld [vmem:[%s823 + $0x10] sm:$0xff]
                  %830 = vst [vmem:[%s824 + $0x10] sm:$0xff] %v829
                $region133: #{musk_vision_forward.1} parent=127 // loop_footer
                  %s822 = sadd.s32 1, %s818
                $region134: #{musk_vision_forward.1} parent=127 // loop_footer_branch
                  %817 = sbr.rel target = $region130
                $region135: #{musk_vision_forward.1} parent=127 // loop_exit
                  _
              $region128: #{musk_vision_forward.1} parent=112 // pred_fallthru
                _
              %p831 = pneg %p813
              // Predicated region
              $region136: #{musk_vision_forward.1} parent=112 // pred_check
                _
              $region137: #{musk_vision_forward.1} parent=112 // pred_check_branch
                %833 = sbr.rel (%p813) target = $region139
              $region138: #{musk_vision_forward.1} parent=112 // pred_region
                %s834 = sand.u32 24, 7
              $region139: #{musk_vision_forward.1} parent=112 // pred_fallthru
                _
            $region113: #{musk_vision_forward.1} parent=109 // pred_fallthru
              _
            // Predicated region
            $region114: #{musk_vision_forward.1} parent=109 // pred_check
              %p798 = pneg %p794
            $region115: #{musk_vision_forward.1} parent=109 // pred_check_branch
              %800 = sbr.rel (%p798) target = $region117
            $region116: #{musk_vision_forward.1} parent=109 // pred_region
              %s801 = sshllo.u32 0, 24
              loop: start=0, step=1, limit=1
              $region118: #{musk_vision_forward.1} parent=116 // loop_pre_header
                _
              $region119: #{musk_vision_forward.1} parent=116 // loop_header
                %s803 = sphi 0, %s807
                %p804 = scmp.ge.s32.totalorder %s803, 1
                %s808 = sphi %s792, %s792
                %s809 = sphi [#allocation16], [#allocation16]
              $region120: #{musk_vision_forward.1} parent=116 // loop_header_branch
                %806 = sbr.rel (%p804) target = $region124
              $region121: #{musk_vision_forward.1} parent=116 // loop_body
                %v810 = vld [vmem:[%s808] sm:%s801]
                %811 = vst [vmem:[%s809] sm:%s801] %v810
              $region122: #{musk_vision_forward.1} parent=116 // loop_footer
                %s807 = sadd.s32 1, %s803
              $region123: #{musk_vision_forward.1} parent=116 // loop_footer_branch
                %802 = sbr.rel target = $region119
              $region124: #{musk_vision_forward.1} parent=116 // loop_exit
                _
            $region117: #{musk_vision_forward.1} parent=109 // pred_fallthru
              _
            // Predicated region
            $region140: #{musk_vision_forward.1} parent=109 // pred_check
              _
            $region141: #{musk_vision_forward.1} parent=109 // pred_check_branch
              %837 = sbr.rel (0) target = $region143
            $region142: #{musk_vision_forward.1} parent=109 // pred_region
              %838 = vsyncadd [#allocation21], 384
            $region143: #{musk_vision_forward.1} parent=109 // pred_fallthru
              _
            %s839 = scalar_lea.sflag [#allocation21], 1
            %p841 = scmp.lt.u32.totalorder 384, 8
            %p842 = pneg %p841
            // Predicated region
            $region144: #{musk_vision_forward.1} parent=109 // pred_check
              _
            $region145: #{musk_vision_forward.1} parent=109 // pred_check_branch
              %844 = sbr.rel (%p841) target = $region147
            $region146: #{musk_vision_forward.1} parent=109 // pred_region
              %s859 = sand.u32 384, 7
              %p860 = scmp.eq.s32.totalorder %s859, 0
              // Predicated region
              $region159: #{musk_vision_forward.1} parent=146 // pred_check
                %p861 = pneg %p860
              $region160: #{musk_vision_forward.1} parent=146 // pred_check_branch
                %863 = sbr.rel (%p861) target = $region162
              $region161: #{musk_vision_forward.1} parent=146 // pred_region
                loop: start=0, step=1, limit=1
                $region163: #{musk_vision_forward.1} parent=161 // loop_pre_header
                  _
                $region164: #{musk_vision_forward.1} parent=161 // loop_header
                  %s865 = sphi 0, %s869
                  %p866 = scmp.ge.s32.totalorder %s865, 1
                  %s870 = sphi %s1, %s1
                  %s871 = sphi [#allocation17], [#allocation17]
                $region165: #{musk_vision_forward.1} parent=161 // loop_header_branch
                  %868 = sbr.rel (%p866) target = $region169
                $region166: #{musk_vision_forward.1} parent=161 // loop_body
                  %v872 = vld [vmem:[%s870] sm:$0xff]
                  %873 = vst [vmem:[%s871] sm:$0xff] %v872
                  %v874 = vld [vmem:[%s870 + $0x8] sm:$0xff]
                  %875 = vst [vmem:[%s871 + $0x8] sm:$0xff] %v874
                  %v876 = vld [vmem:[%s870 + $0x10] sm:$0xff]
                  %877 = vst [vmem:[%s871 + $0x10] sm:$0xff] %v876
                  %v878 = vld [vmem:[%s870 + $0x18] sm:$0xff]
                  %879 = vst [vmem:[%s871 + $0x18] sm:$0xff] %v878
                  %v880 = vld [vmem:[%s870 + $0x20] sm:$0xff]
                  %881 = vst [vmem:[%s871 + $0x20] sm:$0xff] %v880
                  %v882 = vld [vmem:[%s870 + $0x28] sm:$0xff]
                  %883 = vst [vmem:[%s871 + $0x28] sm:$0xff] %v882
                  %v884 = vld [vmem:[%s870 + $0x30] sm:$0xff]
                  %885 = vst [vmem:[%s871 + $0x30] sm:$0xff] %v884
                  %v886 = vld [vmem:[%s870 + $0x38] sm:$0xff]
                  %887 = vst [vmem:[%s871 + $0x38] sm:$0xff] %v886
                  %v888 = vld [vmem:[%s870 + $0x40] sm:$0xff]
                  %889 = vst [vmem:[%s871 + $0x40] sm:$0xff] %v888
                  %v890 = vld [vmem:[%s870 + $0x48] sm:$0xff]
                  %891 = vst [vmem:[%s871 + $0x48] sm:$0xff] %v890
                  %v892 = vld [vmem:[%s870 + $0x50] sm:$0xff]
                  %893 = vst [vmem:[%s871 + $0x50] sm:$0xff] %v892
                  %v894 = vld [vmem:[%s870 + $0x58] sm:$0xff]
                  %895 = vst [vmem:[%s871 + $0x58] sm:$0xff] %v894
                  %v896 = vld [vmem:[%s870 + $0x60] sm:$0xff]
                  %897 = vst [vmem:[%s871 + $0x60] sm:$0xff] %v896
                  %v898 = vld [vmem:[%s870 + $0x68] sm:$0xff]
                  %899 = vst [vmem:[%s871 + $0x68] sm:$0xff] %v898
                  %v900 = vld [vmem:[%s870 + $0x70] sm:$0xff]
                  %901 = vst [vmem:[%s871 + $0x70] sm:$0xff] %v900
                  %v902 = vld [vmem:[%s870 + $0x78] sm:$0xff]
                  %903 = vst [vmem:[%s871 + $0x78] sm:$0xff] %v902
                  %v904 = vld [vmem:[%s870 + $0x80] sm:$0xff]
                  %905 = vst [vmem:[%s871 + $0x80] sm:$0xff] %v904
                  %v906 = vld [vmem:[%s870 + $0x88] sm:$0xff]
                  %907 = vst [vmem:[%s871 + $0x88] sm:$0xff] %v906
                  %v908 = vld [vmem:[%s870 + $0x90] sm:$0xff]
                  %909 = vst [vmem:[%s871 + $0x90] sm:$0xff] %v908
                  %v910 = vld [vmem:[%s870 + $0x98] sm:$0xff]
                  %911 = vst [vmem:[%s871 + $0x98] sm:$0xff] %v910
                  %v912 = vld [vmem:[%s870 + $0xa0] sm:$0xff]
                  %913 = vst [vmem:[%s871 + $0xa0] sm:$0xff] %v912
                  %v914 = vld [vmem:[%s870 + $0xa8] sm:$0xff]
                  %915 = vst [vmem:[%s871 + $0xa8] sm:$0xff] %v914
                  %v916 = vld [vmem:[%s870 + $0xb0] sm:$0xff]
                  %917 = vst [vmem:[%s871 + $0xb0] sm:$0xff] %v916
                  %v918 = vld [vmem:[%s870 + $0xb8] sm:$0xff]
                  %919 = vst [vmem:[%s871 + $0xb8] sm:$0xff] %v918
                  %v920 = vld [vmem:[%s870 + $0xc0] sm:$0xff]
                  %921 = vst [vmem:[%s871 + $0xc0] sm:$0xff] %v920
                  %v922 = vld [vmem:[%s870 + $0xc8] sm:$0xff]
                  %923 = vst [vmem:[%s871 + $0xc8] sm:$0xff] %v922
                  %v924 = vld [vmem:[%s870 + $0xd0] sm:$0xff]
                  %925 = vst [vmem:[%s871 + $0xd0] sm:$0xff] %v924
                  %v926 = vld [vmem:[%s870 + $0xd8] sm:$0xff]
                  %927 = vst [vmem:[%s871 + $0xd8] sm:$0xff] %v926
                  %v928 = vld [vmem:[%s870 + $0xe0] sm:$0xff]
                  %929 = vst [vmem:[%s871 + $0xe0] sm:$0xff] %v928
                  %v930 = vld [vmem:[%s870 + $0xe8] sm:$0xff]
                  %931 = vst [vmem:[%s871 + $0xe8] sm:$0xff] %v930
                  %v932 = vld [vmem:[%s870 + $0xf0] sm:$0xff]
                  %933 = vst [vmem:[%s871 + $0xf0] sm:$0xff] %v932
                  %v934 = vld [vmem:[%s870 + $0xf8] sm:$0xff]
                  %935 = vst [vmem:[%s871 + $0xf8] sm:$0xff] %v934
                  %v936 = vld [vmem:[%s870 + $0x100] sm:$0xff]
                  %937 = vst [vmem:[%s871 + $0x100] sm:$0xff] %v936
                  %v938 = vld [vmem:[%s870 + $0x108] sm:$0xff]
                  %939 = vst [vmem:[%s871 + $0x108] sm:$0xff] %v938
                  %v940 = vld [vmem:[%s870 + $0x110] sm:$0xff]
                  %941 = vst [vmem:[%s871 + $0x110] sm:$0xff] %v940
                  %v942 = vld [vmem:[%s870 + $0x118] sm:$0xff]
                  %943 = vst [vmem:[%s871 + $0x118] sm:$0xff] %v942
                  %v944 = vld [vmem:[%s870 + $0x120] sm:$0xff]
                  %945 = vst [vmem:[%s871 + $0x120] sm:$0xff] %v944
                  %v946 = vld [vmem:[%s870 + $0x128] sm:$0xff]
                  %947 = vst [vmem:[%s871 + $0x128] sm:$0xff] %v946
                  %v948 = vld [vmem:[%s870 + $0x130] sm:$0xff]
                  %949 = vst [vmem:[%s871 + $0x130] sm:$0xff] %v948
                  %v950 = vld [vmem:[%s870 + $0x138] sm:$0xff]
                  %951 = vst [vmem:[%s871 + $0x138] sm:$0xff] %v950
                  %v952 = vld [vmem:[%s870 + $0x140] sm:$0xff]
                  %953 = vst [vmem:[%s871 + $0x140] sm:$0xff] %v952
                  %v954 = vld [vmem:[%s870 + $0x148] sm:$0xff]
                  %955 = vst [vmem:[%s871 + $0x148] sm:$0xff] %v954
                  %v956 = vld [vmem:[%s870 + $0x150] sm:$0xff]
                  %957 = vst [vmem:[%s871 + $0x150] sm:$0xff] %v956
                  %v958 = vld [vmem:[%s870 + $0x158] sm:$0xff]
                  %959 = vst [vmem:[%s871 + $0x158] sm:$0xff] %v958
                  %v960 = vld [vmem:[%s870 + $0x160] sm:$0xff]
                  %961 = vst [vmem:[%s871 + $0x160] sm:$0xff] %v960
                  %v962 = vld [vmem:[%s870 + $0x168] sm:$0xff]
                  %963 = vst [vmem:[%s871 + $0x168] sm:$0xff] %v962
                  %v964 = vld [vmem:[%s870 + $0x170] sm:$0xff]
                  %965 = vst [vmem:[%s871 + $0x170] sm:$0xff] %v964
                  %v966 = vld [vmem:[%s870 + $0x178] sm:$0xff]
                  %967 = vst [vmem:[%s871 + $0x178] sm:$0xff] %v966
                $region167: #{musk_vision_forward.1} parent=161 // loop_footer
                  %s869 = sadd.s32 1, %s865
                $region168: #{musk_vision_forward.1} parent=161 // loop_footer_branch
                  %864 = sbr.rel target = $region164
                $region169: #{musk_vision_forward.1} parent=161 // loop_exit
                  _
              $region162: #{musk_vision_forward.1} parent=146 // pred_fallthru
                _
              %p968 = pneg %p860
              // Predicated region
              $region170: #{musk_vision_forward.1} parent=146 // pred_check
                _
              $region171: #{musk_vision_forward.1} parent=146 // pred_check_branch
                %970 = sbr.rel (%p860) target = $region173
              $region172: #{musk_vision_forward.1} parent=146 // pred_region
                %s971 = sand.u32 384, 7
              $region173: #{musk_vision_forward.1} parent=146 // pred_fallthru
                _
            $region147: #{musk_vision_forward.1} parent=109 // pred_fallthru
              _
            // Predicated region
            $region148: #{musk_vision_forward.1} parent=109 // pred_check
              %p845 = pneg %p841
            $region149: #{musk_vision_forward.1} parent=109 // pred_check_branch
              %847 = sbr.rel (%p845) target = $region151
            $region150: #{musk_vision_forward.1} parent=109 // pred_region
              %s848 = sshllo.u32 0, 384
              loop: start=0, step=1, limit=1
              $region152: #{musk_vision_forward.1} parent=150 // loop_pre_header
                _
              $region153: #{musk_vision_forward.1} parent=150 // loop_header
                %s850 = sphi 0, %s854
                %p851 = scmp.ge.s32.totalorder %s850, 1
                %s855 = sphi %s1, %s1
                %s856 = sphi [#allocation17], [#allocation17]
              $region154: #{musk_vision_forward.1} parent=150 // loop_header_branch
                %853 = sbr.rel (%p851) target = $region158
              $region155: #{musk_vision_forward.1} parent=150 // loop_body
                %v857 = vld [vmem:[%s855] sm:%s848]
                %858 = vst [vmem:[%s856] sm:%s848] %v857
              $region156: #{musk_vision_forward.1} parent=150 // loop_footer
                %s854 = sadd.s32 1, %s850
              $region157: #{musk_vision_forward.1} parent=150 // loop_footer_branch
                %849 = sbr.rel target = $region153
              $region158: #{musk_vision_forward.1} parent=150 // loop_exit
                _
            $region151: #{musk_vision_forward.1} parent=109 // pred_fallthru
              _
            // Predicated region
            $region174: #{musk_vision_forward.1} parent=109 // pred_check
              _
            $region175: #{musk_vision_forward.1} parent=109 // pred_check_branch
              %974 = sbr.rel (0) target = $region177
            $region176: #{musk_vision_forward.1} parent=109 // pred_region
              %975 = vsyncadd %s839, 6144
            $region177: #{musk_vision_forward.1} parent=109 // pred_fallthru
              _
            %s976 = scalar_lea.sflag [#allocation21], 2
            %p978 = scmp.lt.u32.totalorder 1, 8
            %p979 = pneg %p978
            // Predicated region
            $region178: #{musk_vision_forward.1} parent=109 // pred_check
              _
            $region179: #{musk_vision_forward.1} parent=109 // pred_check_branch
              %981 = sbr.rel (%p978) target = $region181
            $region180: #{musk_vision_forward.1} parent=109 // pred_region
              %s996 = sand.u32 1, 7
              %p997 = scmp.eq.s32.totalorder %s996, 0
              %p998 = pneg %p997
              // Predicated region
              $region193: #{musk_vision_forward.1} parent=180 // pred_check
                _
              $region194: #{musk_vision_forward.1} parent=180 // pred_check_branch
                %1000 = sbr.rel (%p997) target = $region196
              $region195: #{musk_vision_forward.1} parent=180 // pred_region
                %s1001 = sand.u32 1, 7
                %s1002 = ssub.s32 1, %s1001
                %s1003 = scalar_lea.vmem %s2, %s1002
                %s1004 = ssub.s32 1, %s1001
                %s1005 = scalar_lea.vmem [#allocation18], %s1004
                %s1006 = sshllo.u32 0, %s1001
                loop: start=0, step=1, limit=1
                $region197: #{musk_vision_forward.1} parent=195 // loop_pre_header
                  _
                $region198: #{musk_vision_forward.1} parent=195 // loop_header
                  %s1008 = sphi 0, %s1012
                  %p1009 = scmp.ge.s32.totalorder %s1008, 1
                  %s1013 = sphi %s1003, %s1003
                  %s1014 = sphi %s1005, %s1005
                $region199: #{musk_vision_forward.1} parent=195 // loop_header_branch
                  %1011 = sbr.rel (%p1009) target = $region203
                $region200: #{musk_vision_forward.1} parent=195 // loop_body
                  %v1015 = vld [vmem:[%s1013] sm:%s1006]
                  %1016 = vst [vmem:[%s1014] sm:%s1006] %v1015
                $region201: #{musk_vision_forward.1} parent=195 // loop_footer
                  %s1012 = sadd.s32 1, %s1008
                $region202: #{musk_vision_forward.1} parent=195 // loop_footer_branch
                  %1007 = sbr.rel target = $region198
                $region203: #{musk_vision_forward.1} parent=195 // loop_exit
                  _
              $region196: #{musk_vision_forward.1} parent=180 // pred_fallthru
                _
            $region181: #{musk_vision_forward.1} parent=109 // pred_fallthru
              _
            // Predicated region
            $region182: #{musk_vision_forward.1} parent=109 // pred_check
              %p982 = pneg %p978
            $region183: #{musk_vision_forward.1} parent=109 // pred_check_branch
              %984 = sbr.rel (%p982) target = $region185
            $region184: #{musk_vision_forward.1} parent=109 // pred_region
              %s985 = sshllo.u32 0, 1
              loop: start=0, step=1, limit=1
              $region186: #{musk_vision_forward.1} parent=184 // loop_pre_header
                _
              $region187: #{musk_vision_forward.1} parent=184 // loop_header
                %s987 = sphi 0, %s991
                %p988 = scmp.ge.s32.totalorder %s987, 1
                %s992 = sphi %s2, %s2
                %s993 = sphi [#allocation18], [#allocation18]
              $region188: #{musk_vision_forward.1} parent=184 // loop_header_branch
                %990 = sbr.rel (%p988) target = $region192
              $region189: #{musk_vision_forward.1} parent=184 // loop_body
                %v994 = vld [vmem:[%s992] sm:%s985]
                %995 = vst [vmem:[%s993] sm:%s985] %v994
              $region190: #{musk_vision_forward.1} parent=184 // loop_footer
                %s991 = sadd.s32 1, %s987
              $region191: #{musk_vision_forward.1} parent=184 // loop_footer_branch
                %986 = sbr.rel target = $region187
              $region192: #{musk_vision_forward.1} parent=184 // loop_exit
                _
            $region185: #{musk_vision_forward.1} parent=109 // pred_fallthru
              _
            // Predicated region
            $region204: #{musk_vision_forward.1} parent=109 // pred_check
              _
            $region205: #{musk_vision_forward.1} parent=109 // pred_check_branch
              %1019 = sbr.rel (0) target = $region207
            $region206: #{musk_vision_forward.1} parent=109 // pred_region
              %1020 = vsyncadd %s976, 16
            $region207: #{musk_vision_forward.1} parent=109 // pred_fallthru
              _
            %s1021 = scalar_lea.sflag [#allocation21], 3
            // Predicated region
            $region208: #{musk_vision_forward.1} parent=109 // pred_check
              _
            $region209: #{musk_vision_forward.1} parent=109 // pred_check_branch
              %1023 = sbr.rel target = $region211
            $region210: #{musk_vision_forward.1} parent=109 // pred_region
              %1024 = sst [smem:[#allocation27]] [#allocation26]
              %1025 = sst [smem:[#allocation28]] [#allocation25]
            $region211: #{musk_vision_forward.1} parent=109 // pred_fallthru
              _
            %1027 = shalt.err (0)
            %s1029 = sshll.u32 [#allocation19], 4
            %s1030 = int_to_ptr.vmem [resolvable:$true] %s1029
            %1032 = dma.hbm_to_vmem [thread:$0]  %s3, 16, %s1030, %s1021
            %s1033 = scalar_lea.sflag [#allocation21], 4
            %p1035 = scmp.lt.u32.totalorder 5, 8
            %p1036 = pneg %p1035
            // Predicated region
            $region212: #{musk_vision_forward.1} parent=109 // pred_check
              _
            $region213: #{musk_vision_forward.1} parent=109 // pred_check_branch
              %1038 = sbr.rel (%p1035) target = $region215
            $region214: #{musk_vision_forward.1} parent=109 // pred_region
              %s1053 = sand.u32 5, 7
              %p1054 = scmp.eq.s32.totalorder %s1053, 0
              %p1055 = pneg %p1054
              // Predicated region
              $region227: #{musk_vision_forward.1} parent=214 // pred_check
                _
              $region228: #{musk_vision_forward.1} parent=214 // pred_check_branch
                %1057 = sbr.rel (%p1054) target = $region230
              $region229: #{musk_vision_forward.1} parent=214 // pred_region
                %s1058 = sand.u32 5, 7
                %s1059 = ssub.s32 5, %s1058
                %s1060 = scalar_lea.vmem %s4, %s1059
                %s1061 = ssub.s32 5, %s1058
                %s1062 = scalar_lea.vmem [#allocation20], %s1061
                %s1063 = sshllo.u32 0, %s1058
                loop: start=0, step=1, limit=1
                $region231: #{musk_vision_forward.1} parent=229 // loop_pre_header
                  _
                $region232: #{musk_vision_forward.1} parent=229 // loop_header
                  %s1065 = sphi 0, %s1069
                  %p1066 = scmp.ge.s32.totalorder %s1065, 1
                  %s1070 = sphi %s1060, %s1060
                  %s1071 = sphi %s1062, %s1062
                $region233: #{musk_vision_forward.1} parent=229 // loop_header_branch
                  %1068 = sbr.rel (%p1066) target = $region237
                $region234: #{musk_vision_forward.1} parent=229 // loop_body
                  %v1072 = vld [vmem:[%s1070] sm:%s1063]
                  %1073 = vst [vmem:[%s1071] sm:%s1063] %v1072
                $region235: #{musk_vision_forward.1} parent=229 // loop_footer
                  %s1069 = sadd.s32 1, %s1065
                $region236: #{musk_vision_forward.1} parent=229 // loop_footer_branch
                  %1064 = sbr.rel target = $region232
                $region237: #{musk_vision_forward.1} parent=229 // loop_exit
                  _
              $region230: #{musk_vision_forward.1} parent=214 // pred_fallthru
                _
            $region215: #{musk_vision_forward.1} parent=109 // pred_fallthru
              _
            // Predicated region
            $region216: #{musk_vision_forward.1} parent=109 // pred_check
              %p1039 = pneg %p1035
            $region217: #{musk_vision_forward.1} parent=109 // pred_check_branch
              %1041 = sbr.rel (%p1039) target = $region219
            $region218: #{musk_vision_forward.1} parent=109 // pred_region
              %s1042 = sshllo.u32 0, 5
              loop: start=0, step=1, limit=1
              $region220: #{musk_vision_forward.1} parent=218 // loop_pre_header
                _
              $region221: #{musk_vision_forward.1} parent=218 // loop_header
                %s1044 = sphi 0, %s1048
                %p1045 = scmp.ge.s32.totalorder %s1044, 1
                %s1049 = sphi %s4, %s4
                %s1050 = sphi [#allocation20], [#allocation20]
              $region222: #{musk_vision_forward.1} parent=218 // loop_header_branch
                %1047 = sbr.rel (%p1045) target = $region226
              $region223: #{musk_vision_forward.1} parent=218 // loop_body
                %v1051 = vld [vmem:[%s1049] sm:%s1042]
                %1052 = vst [vmem:[%s1050] sm:%s1042] %v1051
              $region224: #{musk_vision_forward.1} parent=218 // loop_footer
                %s1048 = sadd.s32 1, %s1044
              $region225: #{musk_vision_forward.1} parent=218 // loop_footer_branch
                %1043 = sbr.rel target = $region221
              $region226: #{musk_vision_forward.1} parent=218 // loop_exit
                _
            $region219: #{musk_vision_forward.1} parent=109 // pred_fallthru
              _
            // Predicated region
            $region238: #{musk_vision_forward.1} parent=109 // pred_check
              _
            $region239: #{musk_vision_forward.1} parent=109 // pred_check_branch
              %1076 = sbr.rel (0) target = $region241
            $region240: #{musk_vision_forward.1} parent=109 // pred_region
              %1077 = vsyncadd %s1033, 80
            $region241: #{musk_vision_forward.1} parent=109 // pred_fallthru
              _
            %s1078 = smul.u32 4, 1
            %s1079 = smul.u32 %s1078, 6
            %s1080 = sshll.u32 %s1079, 4
            %1081 = dma.done [#allocation21], %s1080
            %s1082 = smul.u32 4, 96
            %s1083 = smul.u32 %s1082, 1
            %s1084 = sshll.u32 %s1083, 4
            %1085 = dma.done %s839, %s1084
            %s1086 = smul.u32 1, 1
            %s1087 = sshll.u32 %s1086, 4
            %1088 = dma.done %s976, %s1087
            %s1089 = sshll.u32 %s1086, 4
            %1090 = dma.done %s1021, %s1089
            %s1091 = smul.u32 5, 1
            %s1092 = sshll.u32 %s1091, 4
            %1093 = dma.done %s1033, %s1092
            %v1094 = vld [vmem:[#allocation16] sm:$0xff]
            %v1095 = vld [vmem:[#allocation16 + $0x8] sm:$0xff]
            %v1096 = vld [vmem:[#allocation16 + $0x10] sm:$0xff]
            %v1097 = vld [vmem:[#allocation17] sm:$0xff]
            %v1098 = vld [vmem:[#allocation17 + $0x8] sm:$0xff]
            %v1099 = vld [vmem:[#allocation17 + $0x10] sm:$0xff]
            %v1100 = vld [vmem:[#allocation17 + $0x18] sm:$0xff]
            %v1101 = vld [vmem:[#allocation17 + $0x20] sm:$0xff]
            %v1102 = vld [vmem:[#allocation17 + $0x28] sm:$0xff]
            %v1103 = vld [vmem:[#allocation17 + $0x30] sm:$0xff]
            %v1104 = vld [vmem:[#allocation17 + $0x38] sm:$0xff]
            %v1105 = vld [vmem:[#allocation17 + $0x40] sm:$0xff]
            %v1106 = vld [vmem:[#allocation17 + $0x48] sm:$0xff]
            %v1107 = vld [vmem:[#allocation17 + $0x50] sm:$0xff]
            %v1108 = vld [vmem:[#allocation17 + $0x58] sm:$0xff]
            %v1109 = vld [vmem:[#allocation17 + $0x60] sm:$0xff]
            %v1110 = vld [vmem:[#allocation17 + $0x68] sm:$0xff]
            %v1111 = vld [vmem:[#allocation17 + $0x70] sm:$0xff]
            %v1112 = vld [vmem:[#allocation17 + $0x78] sm:$0xff]
            %v1113 = vld [vmem:[#allocation17 + $0x80] sm:$0xff]
            %v1114 = vld [vmem:[#allocation17 + $0x88] sm:$0xff]
            %v1115 = vld [vmem:[#allocation17 + $0x90] sm:$0xff]
            %v1116 = vld [vmem:[#allocation17 + $0x98] sm:$0xff]
            %v1117 = vld [vmem:[#allocation17 + $0xa0] sm:$0xff]
            %v1118 = vld [vmem:[#allocation17 + $0xa8] sm:$0xff]
            %v1119 = vld [vmem:[#allocation17 + $0xb0] sm:$0xff]
            %v1120 = vld [vmem:[#allocation17 + $0xb8] sm:$0xff]
            %v1121 = vld [vmem:[#allocation17 + $0xc0] sm:$0xff]
            %v1122 = vld [vmem:[#allocation17 + $0xc8] sm:$0xff]
            %v1123 = vld [vmem:[#allocation17 + $0xd0] sm:$0xff]
            %v1124 = vld [vmem:[#allocation17 + $0xd8] sm:$0xff]
            %v1125 = vld [vmem:[#allocation17 + $0xe0] sm:$0xff]
            %v1126 = vld [vmem:[#allocation17 + $0xe8] sm:$0xff]
            %v1127 = vld [vmem:[#allocation17 + $0xf0] sm:$0xff]
            %v1128 = vld [vmem:[#allocation17 + $0xf8] sm:$0xff]
            %v1129 = vld [vmem:[#allocation17 + $0x100] sm:$0xff]
            %v1130 = vld [vmem:[#allocation17 + $0x108] sm:$0xff]
            %v1131 = vld [vmem:[#allocation17 + $0x110] sm:$0xff]
            %v1132 = vld [vmem:[#allocation17 + $0x118] sm:$0xff]
            %v1133 = vld [vmem:[#allocation17 + $0x120] sm:$0xff]
            %v1134 = vld [vmem:[#allocation17 + $0x128] sm:$0xff]
            %v1135 = vld [vmem:[#allocation17 + $0x130] sm:$0xff]
            %v1136 = vld [vmem:[#allocation17 + $0x138] sm:$0xff]
            %v1137 = vld [vmem:[#allocation17 + $0x140] sm:$0xff]
            %v1138 = vld [vmem:[#allocation17 + $0x148] sm:$0xff]
            %v1139 = vld [vmem:[#allocation17 + $0x150] sm:$0xff]
            %v1140 = vld [vmem:[#allocation17 + $0x158] sm:$0xff]
            %v1141 = vld [vmem:[#allocation17 + $0x160] sm:$0xff]
            %v1142 = vld [vmem:[#allocation17 + $0x168] sm:$0xff]
            %v1143 = vld [vmem:[#allocation17 + $0x170] sm:$0xff]
            %v1144 = vld [vmem:[#allocation17 + $0x178] sm:$0xff]
            %v1145 = vld [vmem:[#allocation18] sm:$0x1]
            %v1149 = vcombine.high %v1094, %v1094
            %v1150 = vcombine.high %v1095, %v1095
            %v1151 = vcombine.high %v1096, %v1096
            %v1155 = vpack.c.bf16 %v1094, %v1094
            %v1156 = vpack.c.bf16 %v1149, %v1149
            %v1157 = vpack.c.bf16 %v1095, %v1095
            %v1158 = vpack.c.bf16 %v1150, %v1150
            %v1159 = vpack.c.bf16 %v1096, %v1096
            %v1160 = vpack.c.bf16 %v1151, %v1151
            %v1162 = vlaneseq
            %v1163 = vshrl.u32 %v1162, 7
            %v1164 = vsub.s32 0, %v1163
            %v1165 = vrot.slane %v1145, %v1164
            %1167 = vmatprep.subr.bf16.mxu0 0
            %1168 = vmatpush1.bf16.msra.mxu0 %v1097
            %1169 = vmatprep.subr.bf16.mxu0 0
            %1170 = vmatpush1.bf16.msra.mxu0 %v1098
            %1171 = vmatprep.subr.bf16.mxu0 0
            %1172 = vmatpush1.bf16.msra.mxu0 %v1099
            %1173 = vmatprep.subr.bf16.mxu0 0
            %1174 = vmatpush1.bf16.msra.mxu0 %v1100
            %1175 = vmatprep.subr.bf16.mxu0 0
            %1176 = vmatpush1.bf16.msra.mxu0 %v1101
            %1177 = vmatprep.subr.bf16.mxu0 0
            %1178 = vmatpush1.bf16.msra.mxu0 %v1102
            %1179 = vmatprep.subr.bf16.mxu0 0
            %1180 = vmatpush1.bf16.msra.mxu0 %v1103
            %1181 = vmatprep.subr.bf16.mxu0 0
            %1182 = vmatpush1.bf16.msra.mxu0 %v1104
            %1183 = vmatprep.subr.bf16.mxu0 0
            %1184 = vmatpush1.bf16.msra.mxu0 %v1105
            %1185 = vmatprep.subr.bf16.mxu0 0
            %1186 = vmatpush1.bf16.msra.mxu0 %v1106
            %1187 = vmatprep.subr.bf16.mxu0 0
            %1188 = vmatpush1.bf16.msra.mxu0 %v1107
            %1189 = vmatprep.subr.bf16.mxu0 0
            %1190 = vmatpush1.bf16.msra.mxu0 %v1108
            %1191 = vmatprep.subr.bf16.mxu0 0
            %1192 = vmatpush1.bf16.msra.mxu0 %v1109
            %1193 = vmatprep.subr.bf16.mxu0 0
            %1194 = vmatpush1.bf16.msra.mxu0 %v1110
            %1195 = vmatprep.subr.bf16.mxu0 0
            %1196 = vmatpush1.bf16.msra.mxu0 %v1111
            %1197 = vmatprep.subr.bf16.mxu0 0
            %1198 = vmatpush1.bf16.msra.mxu0 %v1112
            %1199 = vmatprep.mubr.bf16.mxu0 %v1156
            %1200 = vmatmul.mubr.bf16.gmra.mrb[0].mxu0 %v1155
            %v1201 = vpop.f32.mrb[0].mxu0
            %v1202 = vadd.f32 %v1165, %v1201
            %v1203 = vpop.f32.mrb[0].mxu0
            %v1204 = vpop.f32.mrb[0].mxu0
            %v1205 = vpop.f32.mrb[0].mxu0
            %1206 = vdwg.mxu0
            %1207 = vmatprep.subr.bf16.mxu0 0
            %1208 = vmatpush1.bf16.msra.mxu0 %v1113
            %1209 = vmatprep.subr.bf16.mxu0 0
            %1210 = vmatpush1.bf16.msra.mxu0 %v1114
            %1211 = vmatprep.subr.bf16.mxu0 0
            %1212 = vmatpush1.bf16.msra.mxu0 %v1115
            %1213 = vmatprep.subr.bf16.mxu0 0
            %1214 = vmatpush1.bf16.msra.mxu0 %v1116
            %1215 = vmatprep.subr.bf16.mxu0 0
            %1216 = vmatpush1.bf16.msra.mxu0 %v1117
            %1217 = vmatprep.subr.bf16.mxu0 0
            %1218 = vmatpush1.bf16.msra.mxu0 %v1118
            %1219 = vmatprep.subr.bf16.mxu0 0
            %1220 = vmatpush1.bf16.msra.mxu0 %v1119
            %1221 = vmatprep.subr.bf16.mxu0 0
            %1222 = vmatpush1.bf16.msra.mxu0 %v1120
            %1223 = vmatprep.subr.bf16.mxu0 0
            %1224 = vmatpush1.bf16.msra.mxu0 %v1121
            %1225 = vmatprep.subr.bf16.mxu0 0
            %1226 = vmatpush1.bf16.msra.mxu0 %v1122
            %1227 = vmatprep.subr.bf16.mxu0 0
            %1228 = vmatpush1.bf16.msra.mxu0 %v1123
            %1229 = vmatprep.subr.bf16.mxu0 0
            %1230 = vmatpush1.bf16.msra.mxu0 %v1124
            %1231 = vmatprep.subr.bf16.mxu0 0
            %1232 = vmatpush1.bf16.msra.mxu0 %v1125
            %1233 = vmatprep.subr.bf16.mxu0 0
            %1234 = vmatpush1.bf16.msra.mxu0 %v1126
            %1235 = vmatprep.subr.bf16.mxu0 0
            %1236 = vmatpush1.bf16.msra.mxu0 %v1127
            %1237 = vmatprep.subr.bf16.mxu0 0
            %1238 = vmatpush1.bf16.msra.mxu0 %v1128
            %1239 = vmatprep.mubr.bf16.mxu0 %v1158
            %1240 = vmatmul.mubr.bf16.gmra.mrb[0].mxu0 %v1157
            %v1241 = vpop.f32.mrb[0].mxu0
            %v1242 = vadd.f32 %v1202, %v1241
            %v1243 = vpop.f32.mrb[0].mxu0
            %v1244 = vpop.f32.mrb[0].mxu0
            %v1245 = vpop.f32.mrb[0].mxu0
            %1246 = vdwg.mxu0
            %1247 = vmatprep.subr.bf16.mxu0 0
            %1248 = vmatpush1.bf16.msra.mxu0 %v1129
            %1249 = vmatprep.subr.bf16.mxu0 0
            %1250 = vmatpush1.bf16.msra.mxu0 %v1130
            %1251 = vmatprep.subr.bf16.mxu0 0
            %1252 = vmatpush1.bf16.msra.mxu0 %v1131
            %1253 = vmatprep.subr.bf16.mxu0 0
            %1254 = vmatpush1.bf16.msra.mxu0 %v1132
            %1255 = vmatprep.subr.bf16.mxu0 0
            %1256 = vmatpush1.bf16.msra.mxu0 %v1133
            %1257 = vmatprep.subr.bf16.mxu0 0
            %1258 = vmatpush1.bf16.msra.mxu0 %v1134
            %1259 = vmatprep.subr.bf16.mxu0 0
            %1260 = vmatpush1.bf16.msra.mxu0 %v1135
            %1261 = vmatprep.subr.bf16.mxu0 0
            %1262 = vmatpush1.bf16.msra.mxu0 %v1136
            %1263 = vmatprep.subr.bf16.mxu0 0
            %1264 = vmatpush1.bf16.msra.mxu0 %v1137
            %1265 = vmatprep.subr.bf16.mxu0 0
            %1266 = vmatpush1.bf16.msra.mxu0 %v1138
            %1267 = vmatprep.subr.bf16.mxu0 0
            %1268 = vmatpush1.bf16.msra.mxu0 %v1139
            %1269 = vmatprep.subr.bf16.mxu0 0
            %1270 = vmatpush1.bf16.msra.mxu0 %v1140
            %1271 = vmatprep.subr.bf16.mxu0 0
            %1272 = vmatpush1.bf16.msra.mxu0 %v1141
            %1273 = vmatprep.subr.bf16.mxu0 0
            %1274 = vmatpush1.bf16.msra.mxu0 %v1142
            %1275 = vmatprep.subr.bf16.mxu0 0
            %1276 = vmatpush1.bf16.msra.mxu0 %v1143
            %1277 = vmatprep.subr.bf16.mxu0 0
            %1278 = vmatpush1.bf16.msra.mxu0 %v1144
            %1279 = vmatprep.mubr.bf16.mxu0 %v1160
            %1280 = vmatmul.mubr.bf16.gmra.mrb[0].mxu0 %v1159
            %v1281 = vpop.f32.mrb[0].mxu0
            %v1282 = vadd.f32 %v1242, %v1281
            %v1283 = vpop.f32.mrb[0].mxu0
            %v1284 = vpop.f32.mrb[0].mxu0
            %v1285 = vpop.f32.mrb[0].mxu0
            %1286 = vdwg.mxu0
            %v1287 = vld [vmem:[#allocation20] sm:$0x1f]
            %v1288 = vld [vmem:[#allocation19] sm:$0x1]
            %v1289 = vadd.f32 %v1288, %v1287
            %1290 = vst [vmem:[#allocation2] sm:$0x1] %v1289
            %v1292 = vrot.slane %v1287, 1
            %v1294 = vadd.f32 %v1282, %v1292
            %1295 = vst [vmem:[#allocation2 + $0x1] sm:$0xf] %v1294
            %1296 = vst [vmem:[#allocation2 + $0x5] sm:$0x7] 0.0
        $region108: #{musk_vision_forward.1} parent=75 // pred_fallthru
          _
        %v1297 = vld [vmem:[#allocation2] sm:$0xff]
        %v1298 = vld [vmem:[%s762] sm:$0x1]
        %v1299 = vld [vmem:[%s628] sm:$0x1]
        %1300 = vadd.xlane.f32.xlu0 %v1297
        %v1301 = vpop.xlane.xlu0 %1300
        %v1302 = vrcp.pop 128.0
        %v1303 = vmul.f32 %v1301, %v1302
        %v1304 = vsub.f32 %v1297, %v1303
        %v1305 = vmul.f32 %v1304, %v1304
        %1306 = vadd.xlane.f32.xlu0 %v1305
        %v1307 = vpop.xlane.xlu0 %1306
        %v1308 = vmul.f32 %v1307, %v1302
        %v1309 = vadd.f32 %v1308, 1e-05
        %v1310 = vrsqrt.pop %v1309
        %v1311 = vmul.f32 %v1304, %v1310
        %v1313 = vlaneseq
        %v1314 = vshrl.u32 %v1313, 7
        %v1315 = vsub.s32 0, %v1314
        %v1316 = vrot.slane %v1298, %v1315
        %v1318 = vmul.f32 %v1311, %v1316
        %v1320 = vlaneseq
        %v1321 = vshrl.u32 %v1320, 7
        %v1322 = vsub.s32 0, %v1321
        %v1323 = vrot.slane %v1299, %v1322
        %v1325 = vadd.f32 %v1318, %v1323
        %v1326 = vld [vmem:[%s767] sm:$0xff]
        %v1327 = vld [vmem:[%s767 + $0x8] sm:$0xf]
        %v1328 = vld [vmem:[%s767 + $0xc] sm:$0xff]
        %v1329 = vld [vmem:[%s767 + $0x14] sm:$0xf]
        %v1330 = vld [vmem:[%s767 + $0x18] sm:$0xff]
        %v1331 = vld [vmem:[%s767 + $0x20] sm:$0xf]
        %v1332 = vld [vmem:[%s767 + $0x24] sm:$0xff]
        %v1333 = vld [vmem:[%s767 + $0x2c] sm:$0xf]
        %v1334 = vld [vmem:[%s767 + $0x30] sm:$0xff]
        %v1335 = vld [vmem:[%s767 + $0x38] sm:$0xf]
        %v1336 = vld [vmem:[%s767 + $0x3c] sm:$0xff]
        %v1337 = vld [vmem:[%s767 + $0x44] sm:$0xf]
        %v1338 = vld [vmem:[%s767 + $0x48] sm:$0xff]
        %v1339 = vld [vmem:[%s767 + $0x50] sm:$0xf]
        %v1340 = vld [vmem:[%s767 + $0x54] sm:$0xff]
        %v1341 = vld [vmem:[%s767 + $0x5c] sm:$0xf]
        %v1342 = vld [vmem:[%s767 + $0x60] sm:$0xff]
        %v1343 = vld [vmem:[%s767 + $0x68] sm:$0xf]
        %v1344 = vld [vmem:[%s767 + $0x6c] sm:$0xff]
        %v1345 = vld [vmem:[%s767 + $0x74] sm:$0xf]
        %v1346 = vld [vmem:[%s767 + $0x78] sm:$0xff]
        %v1347 = vld [vmem:[%s767 + $0x80] sm:$0xf]
        %v1348 = vld [vmem:[%s767 + $0x84] sm:$0xff]
        %v1349 = vld [vmem:[%s767 + $0x8c] sm:$0xf]
        %v1350 = vld [vmem:[%s767 + $0x90] sm:$0xff]
        %v1351 = vld [vmem:[%s767 + $0x98] sm:$0xf]
        %v1352 = vld [vmem:[%s767 + $0x9c] sm:$0xff]
        %v1353 = vld [vmem:[%s767 + $0xa4] sm:$0xf]
        %v1354 = vld [vmem:[%s767 + $0xa8] sm:$0xff]
        %v1355 = vld [vmem:[%s767 + $0xb0] sm:$0xf]
        %v1356 = vld [vmem:[%s767 + $0xb4] sm:$0xff]
        %v1357 = vld [vmem:[%s767 + $0xbc] sm:$0xf]
        %v1358 = vld [vmem:[%s771] sm:$0x7]
        %v1359 = vpack.c.bf16 %v1325, %v1325
        %v1361 = vlaneseq
        %v1362 = vshrl.u32 %v1361, 7
        %v1363 = vsub.s32 0, %v1362
        %v1364 = vrot.slane %v1358, %v1363
        %v1365 = vlaneseq
        %v1366 = vshrl.u32 %v1365, 7
        %v1367 = vsub.s32 1, %v1366
        %v1368 = vrot.slane %v1358, %v1367
        %v1369 = vlaneseq
        %v1370 = vshrl.u32 %v1369, 7
        %v1371 = vsub.s32 2, %v1370
        %v1372 = vrot.slane %v1358, %v1371
        %v1408 = vunpack.c.l.b16 %v1326
        %v1409 = vunpack.c.h.b16 %v1326
        %v1410 = vunpack.c.l.b16 %v1327
        %v1411 = vunpack.c.l.b16 %v1328
        %v1412 = vunpack.c.h.b16 %v1328
        %v1413 = vunpack.c.l.b16 %v1329
        %v1414 = vunpack.c.l.b16 %v1330
        %v1415 = vunpack.c.h.b16 %v1330
        %v1416 = vunpack.c.l.b16 %v1331
        %v1417 = vunpack.c.l.b16 %v1332
        %v1418 = vunpack.c.h.b16 %v1332
        %v1419 = vunpack.c.l.b16 %v1333
        %v1420 = vunpack.c.l.b16 %v1334
        %v1421 = vunpack.c.h.b16 %v1334
        %v1422 = vunpack.c.l.b16 %v1335
        %v1423 = vunpack.c.l.b16 %v1336
        %v1424 = vunpack.c.h.b16 %v1336
        %v1425 = vunpack.c.l.b16 %v1337
        %v1426 = vunpack.c.l.b16 %v1338
        %v1427 = vunpack.c.h.b16 %v1338
        %v1428 = vunpack.c.l.b16 %v1339
        %v1429 = vunpack.c.l.b16 %v1340
        %v1430 = vunpack.c.h.b16 %v1340
        %v1431 = vunpack.c.l.b16 %v1341
        %v1432 = vunpack.c.l.b16 %v1342
        %v1433 = vunpack.c.h.b16 %v1342
        %v1434 = vunpack.c.l.b16 %v1343
        %v1435 = vunpack.c.l.b16 %v1344
        %v1436 = vunpack.c.h.b16 %v1344
        %v1437 = vunpack.c.l.b16 %v1345
        %v1438 = vunpack.c.l.b16 %v1346
        %v1439 = vunpack.c.h.b16 %v1346
        %v1440 = vunpack.c.l.b16 %v1347
        %v1441 = vunpack.c.l.b16 %v1348
        %v1442 = vunpack.c.h.b16 %v1348
        %v1443 = vunpack.c.l.b16 %v1349
        %v1444 = vunpack.c.l.b16 %v1350
        %v1445 = vunpack.c.h.b16 %v1350
        %v1446 = vunpack.c.l.b16 %v1351
        %v1447 = vunpack.c.l.b16 %v1352
        %v1448 = vunpack.c.h.b16 %v1352
        %v1449 = vunpack.c.l.b16 %v1353
        %v1450 = vunpack.c.l.b16 %v1354
        %v1451 = vunpack.c.h.b16 %v1354
        %v1452 = vunpack.c.l.b16 %v1355
        %v1453 = vunpack.c.l.b16 %v1356
        %v1454 = vunpack.c.h.b16 %v1356
        %v1455 = vunpack.c.l.b16 %v1357
        %v1456 = vpack.c.b16 %v1411, %v1408
        %v1457 = vpack.c.b16 %v1412, %v1409
        %v1458 = vpack.c.b16 %v1413, %v1410
        %v1459 = vpack.c.b16 %v1417, %v1414
        %v1460 = vpack.c.b16 %v1418, %v1415
        %v1461 = vpack.c.b16 %v1419, %v1416
        %v1462 = vpack.c.b16 %v1423, %v1420
        %v1463 = vpack.c.b16 %v1424, %v1421
        %v1464 = vpack.c.b16 %v1425, %v1422
        %v1465 = vpack.c.b16 %v1429, %v1426
        %v1466 = vpack.c.b16 %v1430, %v1427
        %v1467 = vpack.c.b16 %v1431, %v1428
        %v1468 = vpack.c.b16 %v1435, %v1432
        %v1469 = vpack.c.b16 %v1436, %v1433
        %v1470 = vpack.c.b16 %v1437, %v1434
        %v1471 = vpack.c.b16 %v1441, %v1438
        %v1472 = vpack.c.b16 %v1442, %v1439
        %v1473 = vpack.c.b16 %v1443, %v1440
        %v1474 = vpack.c.b16 %v1447, %v1444
        %v1475 = vpack.c.b16 %v1448, %v1445
        %v1476 = vpack.c.b16 %v1449, %v1446
        %v1477 = vpack.c.b16 %v1453, %v1450
        %v1478 = vpack.c.b16 %v1454, %v1451
        %v1479 = vpack.c.b16 %v1455, %v1452
        %1504 = vmatprep.subr.bf16.mxu0 %v1457
        %1505 = vmatpush1.bf16.msra.mxu0 %v1456
        %1506 = vmatprep.subr.bf16.mxu0 %v1460
        %1507 = vmatpush1.bf16.msra.mxu0 %v1459
        %1508 = vmatprep.subr.bf16.mxu0 %v1463
        %1509 = vmatpush1.bf16.msra.mxu0 %v1462
        %1510 = vmatprep.subr.bf16.mxu0 %v1466
        %1511 = vmatpush1.bf16.msra.mxu0 %v1465
        %1512 = vmatprep.subr.bf16.mxu0 %v1469
        %1513 = vmatpush1.bf16.msra.mxu0 %v1468
        %1514 = vmatprep.subr.bf16.mxu0 %v1472
        %1515 = vmatpush1.bf16.msra.mxu0 %v1471
        %1516 = vmatprep.subr.bf16.mxu0 %v1475
        %1517 = vmatpush1.bf16.msra.mxu0 %v1474
        %1518 = vmatprep.subr.bf16.mxu0 %v1478
        %1519 = vmatpush1.bf16.msra.mxu0 %v1477
        %1520 = vmatprep.subr.bf16.mxu0 0
        %1521 = vmatpush1.bf16.msra.mxu0 0
        %1522 = vmatprep.subr.bf16.mxu0 0
        %1523 = vmatpush1.bf16.msra.mxu0 0
        %1524 = vmatprep.subr.bf16.mxu0 0
        %1525 = vmatpush1.bf16.msra.mxu0 0
        %1526 = vmatprep.subr.bf16.mxu0 0
        %1527 = vmatpush1.bf16.msra.mxu0 0
        %1528 = vmatprep.subr.bf16.mxu0 0
        %1529 = vmatpush1.bf16.msra.mxu0 0
        %1530 = vmatprep.subr.bf16.mxu0 0
        %1531 = vmatpush1.bf16.msra.mxu0 0
        %1532 = vmatprep.subr.bf16.mxu0 0
        %1533 = vmatpush1.bf16.msra.mxu0 0
        %1534 = vmatprep.subr.bf16.mxu0 0
        %1535 = vmatpush1.bf16.msra.mxu0 0
        %1536 = vmatprep.mubr.bf16.mxu0 0
        %1537 = vmatmul.mubr.bf16.gmra.mrb[0].mxu0 %v1359
        %v1538 = vpop.f32.mrb[0].mxu0
        %v1539 = vadd.f32 %v1364, %v1538
        %v1540 = vpop.f32.mrb[0].mxu0
        %v1541 = vadd.f32 %v1368, %v1540
        %v1542 = vpop.f32.mrb[0].mxu0
        %v1543 = vpop.f32.mrb[0].mxu0
        %1544 = vdwg.mxu0
        %1545 = vmatprep.subr.bf16.mxu0 0
        %1546 = vmatpush1.bf16.msra.mxu0 %v1458
        %1547 = vmatprep.subr.bf16.mxu0 0
        %1548 = vmatpush1.bf16.msra.mxu0 %v1461
        %1549 = vmatprep.subr.bf16.mxu0 0
        %1550 = vmatpush1.bf16.msra.mxu0 %v1464
        %1551 = vmatprep.subr.bf16.mxu0 0
        %1552 = vmatpush1.bf16.msra.mxu0 %v1467
        %1553 = vmatprep.subr.bf16.mxu0 0
        %1554 = vmatpush1.bf16.msra.mxu0 %v1470
        %1555 = vmatprep.subr.bf16.mxu0 0
        %1556 = vmatpush1.bf16.msra.mxu0 %v1473
        %1557 = vmatprep.subr.bf16.mxu0 0
        %1558 = vmatpush1.bf16.msra.mxu0 %v1476
        %1559 = vmatprep.subr.bf16.mxu0 0
        %1560 = vmatpush1.bf16.msra.mxu0 %v1479
        %1561 = vmatprep.subr.bf16.mxu0 0
        %1562 = vmatpush1.bf16.msra.mxu0 0
        %1563 = vmatprep.subr.bf16.mxu0 0
        %1564 = vmatpush1.bf16.msra.mxu0 0
        %1565 = vmatprep.subr.bf16.mxu0 0
        %1566 = vmatpush1.bf16.msra.mxu0 0
        %1567 = vmatprep.subr.bf16.mxu0 0
        %1568 = vmatpush1.bf16.msra.mxu0 0
        %1569 = vmatprep.subr.bf16.mxu0 0
        %1570 = vmatpush1.bf16.msra.mxu0 0
        %1571 = vmatprep.subr.bf16.mxu0 0
        %1572 = vmatpush1.bf16.msra.mxu0 0
        %1573 = vmatprep.subr.bf16.mxu0 0
        %1574 = vmatpush1.bf16.msra.mxu0 0
        %1575 = vmatprep.subr.bf16.mxu0 0
        %1576 = vmatpush1.bf16.msra.mxu0 0
        %1577 = vmatprep.mubr.bf16.mxu0 0
        %1578 = vmatmul.mubr.bf16.gmra.mrb[0].mxu0 %v1359
        %v1579 = vpop.f32.mrb[0].mxu0
        %v1580 = vadd.f32 %v1372, %v1579
        %v1581 = vpop.f32.mrb[0].mxu0
        %v1582 = vpop.f32.mrb[0].mxu0
        %v1583 = vpop.f32.mrb[0].mxu0
        %1584 = vdwg.mxu0
        %v1585 = vpack.c.bf16 %v1539, %v1539
        %v1586 = vpack.c.bf16 %v1541, %v1541
        %v1587 = vpack.c.bf16 %v1580, %v1580
        %1589 = vrot.lane.b32.xlu0 %v1585, 96
        %v1590 = vpop.permute.xlu0 %1589
        %1591 = vrot.lane.b32.xlu0 %v1585, 64
        %v1592 = vpop.permute.xlu0 %1591
        %1593 = vrot.lane.b32.xlu0 %v1585, 32
        %v1594 = vpop.permute.xlu0 %1593
        %1596 = vrot.lane.b32.xlu0 %v1586, 96
        %v1597 = vpop.permute.xlu0 %1596
        %1599 = vrot.lane.b32.xlu0 %v1586, 64
        %v1600 = vpop.permute.xlu0 %1599
        %1602 = vrot.lane.b32.xlu0 %v1586, 32
        %v1603 = vpop.permute.xlu0 %1602
        %1606 = vrot.lane.b32.xlu0 %v1587, 96
        %v1607 = vpop.permute.xlu0 %1606
        %1609 = vrot.lane.b32.xlu0 %v1587, 64
        %v1610 = vpop.permute.xlu0 %1609
        %1612 = vrot.lane.b32.xlu0 %v1587, 32
        %v1613 = vpop.permute.xlu0 %1612
        %1615 = vxpose.xlu0.c.b16.start [1/8] %v1586, 128
        %1616 = vxpose.xlu0.c.b16.cont [2/8] 0, 128
        %1617 = vxpose.xlu0.c.b16.cont [3/8] 0, 128
        %1618 = vxpose.xlu0.c.b16.cont [4/8] 0, 128
        %1619 = vxpose.xlu0.c.b16.cont [5/8] 0, 128
        %1620 = vxpose.xlu0.c.b16.cont [6/8] 0, 128
        %1621 = vxpose.xlu0.c.b16.cont [7/8] 0, 128
        %1622 = vxpose.xlu0.c.b16.end [8/8] 0, 128
        %v1623 = vpop.trf.xlu0
        %v1624 = vpop.trf.xlu0
        %v1625 = vpop.trf.xlu0
        %v1626 = vpop.trf.xlu0
        %v1627 = vpop.trf.xlu0
        %v1628 = vpop.trf.xlu0
        %v1629 = vpop.trf.xlu0
        %v1630 = vpop.trf.xlu0
        %1631 = vxpose.xlu0.c.b16.start [1/8] %v1597, 128
        %1632 = vxpose.xlu0.c.b16.cont [2/8] 0, 128
        %1633 = vxpose.xlu0.c.b16.cont [3/8] 0, 128
        %1634 = vxpose.xlu0.c.b16.cont [4/8] 0, 128
        %1635 = vxpose.xlu0.c.b16.cont [5/8] 0, 128
        %1636 = vxpose.xlu0.c.b16.cont [6/8] 0, 128
        %1637 = vxpose.xlu0.c.b16.cont [7/8] 0, 128
        %1638 = vxpose.xlu0.c.b16.end [8/8] 0, 128
        %v1639 = vpop.trf.xlu0
        %v1640 = vpop.trf.xlu0
        %v1641 = vpop.trf.xlu0
        %v1642 = vpop.trf.xlu0
        %v1643 = vpop.trf.xlu0
        %v1644 = vpop.trf.xlu0
        %v1645 = vpop.trf.xlu0
        %v1646 = vpop.trf.xlu0
        %1647 = vxpose.xlu0.c.b16.start [1/8] %v1600, 128
        %1648 = vxpose.xlu0.c.b16.cont [2/8] 0, 128
        %1649 = vxpose.xlu0.c.b16.cont [3/8] 0, 128
        %1650 = vxpose.xlu0.c.b16.cont [4/8] 0, 128
        %1651 = vxpose.xlu0.c.b16.cont [5/8] 0, 128
        %1652 = vxpose.xlu0.c.b16.cont [6/8] 0, 128
        %1653 = vxpose.xlu0.c.b16.cont [7/8] 0, 128
        %1654 = vxpose.xlu0.c.b16.end [8/8] 0, 128
        %v1655 = vpop.trf.xlu0
        %v1656 = vpop.trf.xlu0
        %v1657 = vpop.trf.xlu0
        %v1658 = vpop.trf.xlu0
        %v1659 = vpop.trf.xlu0
        %v1660 = vpop.trf.xlu0
        %v1661 = vpop.trf.xlu0
        %v1662 = vpop.trf.xlu0
        %1663 = vxpose.xlu0.c.b16.start [1/8] %v1603, 128
        %1664 = vxpose.xlu0.c.b16.cont [2/8] 0, 128
        %1665 = vxpose.xlu0.c.b16.cont [3/8] 0, 128
        %1666 = vxpose.xlu0.c.b16.cont [4/8] 0, 128
        %1667 = vxpose.xlu0.c.b16.cont [5/8] 0, 128
        %1668 = vxpose.xlu0.c.b16.cont [6/8] 0, 128
        %1669 = vxpose.xlu0.c.b16.cont [7/8] 0, 128
        %1670 = vxpose.xlu0.c.b16.end [8/8] 0, 128
        %v1671 = vpop.trf.xlu0
        %v1672 = vpop.trf.xlu0
        %v1673 = vpop.trf.xlu0
        %v1674 = vpop.trf.xlu0
        %v1675 = vpop.trf.xlu0
        %v1676 = vpop.trf.xlu0
        %v1677 = vpop.trf.xlu0
        %v1678 = vpop.trf.xlu0
        %vm1679 = vcmask 261120
        %v1681 = vsel %vm1679, %v1585, 0
        %1683 = vmatprep.subr.bf16.mxu0 0
        %1684 = vmatpush1.bf16.msra.mxu0 %v1623
        %1685 = vmatprep.subr.bf16.mxu0 0
        %1686 = vmatpush1.bf16.msra.mxu0 %v1624
        %1687 = vmatprep.subr.bf16.mxu0 0
        %1688 = vmatpush1.bf16.msra.mxu0 0
        %1689 = vmatprep.subr.bf16.mxu0 0
        %1690 = vmatpush1.bf16.msra.mxu0 0
        %1691 = vmatprep.subr.bf16.mxu0 0
        %1692 = vmatpush1.bf16.msra.mxu0 0
        %1693 = vmatprep.subr.bf16.mxu0 0
        %1694 = vmatpush1.bf16.msra.mxu0 0
        %1695 = vmatprep.subr.bf16.mxu0 0
        %1696 = vmatpush1.bf16.msra.mxu0 0
        %1697 = vmatprep.subr.bf16.mxu0 0
        %1698 = vmatpush1.bf16.msra.mxu0 0
        %1699 = vmatprep.subr.bf16.mxu0 0
        %1700 = vmatpush1.bf16.msra.mxu0 0
        %1701 = vmatprep.subr.bf16.mxu0 0
        %1702 = vmatpush1.bf16.msra.mxu0 0
        %1703 = vmatprep.subr.bf16.mxu0 0
        %1704 = vmatpush1.bf16.msra.mxu0 0
        %1705 = vmatprep.subr.bf16.mxu0 0
        %1706 = vmatpush1.bf16.msra.mxu0 0
        %1707 = vmatprep.subr.bf16.mxu0 0
        %1708 = vmatpush1.bf16.msra.mxu0 0
        %1709 = vmatprep.subr.bf16.mxu0 0
        %1710 = vmatpush1.bf16.msra.mxu0 0
        %1711 = vmatprep.subr.bf16.mxu0 0
        %1712 = vmatpush1.bf16.msra.mxu0 0
        %1713 = vmatprep.subr.bf16.mxu0 0
        %1714 = vmatpush1.bf16.msra.mxu0 0
        %1715 = vmatprep.mubr.bf16.mxu0 0
        %1716 = vmatmul.mubr.bf16.gmra.mrb[0].mxu0 %v1681
        %v1717 = vpop.f32.mrb[0].mxu0
        %v1718 = vadd.f32 0.0, %v1717
        %v1719 = vpop.f32.mrb[0].mxu0
        %v1720 = vpop.f32.mrb[0].mxu0
        %v1721 = vpop.f32.mrb[0].mxu0
        %1722 = vdwg.mxu0
        %v1724 = vsel %vm1679, %v1590, 0
        %1726 = vmatprep.subr.bf16.mxu0 0
        %1727 = vmatpush1.bf16.msra.mxu0 %v1639
        %1728 = vmatprep.subr.bf16.mxu0 0
        %1729 = vmatpush1.bf16.msra.mxu0 %v1640
        %1730 = vmatprep.subr.bf16.mxu0 0
        %1731 = vmatpush1.bf16.msra.mxu0 0
        %1732 = vmatprep.subr.bf16.mxu0 0
        %1733 = vmatpush1.bf16.msra.mxu0 0
        %1734 = vmatprep.subr.bf16.mxu0 0
        %1735 = vmatpush1.bf16.msra.mxu0 0
        %1736 = vmatprep.subr.bf16.mxu0 0
        %1737 = vmatpush1.bf16.msra.mxu0 0
        %1738 = vmatprep.subr.bf16.mxu0 0
        %1739 = vmatpush1.bf16.msra.mxu0 0
        %1740 = vmatprep.subr.bf16.mxu0 0
        %1741 = vmatpush1.bf16.msra.mxu0 0
        %1742 = vmatprep.subr.bf16.mxu0 0
        %1743 = vmatpush1.bf16.msra.mxu0 0
        %1744 = vmatprep.subr.bf16.mxu0 0
        %1745 = vmatpush1.bf16.msra.mxu0 0
        %1746 = vmatprep.subr.bf16.mxu0 0
        %1747 = vmatpush1.bf16.msra.mxu0 0
        %1748 = vmatprep.subr.bf16.mxu0 0
        %1749 = vmatpush1.bf16.msra.mxu0 0
        %1750 = vmatprep.subr.bf16.mxu0 0
        %1751 = vmatpush1.bf16.msra.mxu0 0
        %1752 = vmatprep.subr.bf16.mxu0 0
        %1753 = vmatpush1.bf16.msra.mxu0 0
        %1754 = vmatprep.subr.bf16.mxu0 0
        %1755 = vmatpush1.bf16.msra.mxu0 0
        %1756 = vmatprep.subr.bf16.mxu0 0
        %1757 = vmatpush1.bf16.msra.mxu0 0
        %1758 = vmatprep.mubr.bf16.mxu0 0
        %1759 = vmatmul.mubr.bf16.gmra.mrb[0].mxu0 %v1724
        %v1760 = vpop.f32.mrb[0].mxu0
        %v1761 = vadd.f32 0.0, %v1760
        %v1762 = vpop.f32.mrb[0].mxu0
        %v1763 = vpop.f32.mrb[0].mxu0
        %v1764 = vpop.f32.mrb[0].mxu0
        %1765 = vdwg.mxu0
        %v1767 = vsel %vm1679, %v1592, 0
        %1769 = vmatprep.subr.bf16.mxu0 0
        %1770 = vmatpush1.bf16.msra.mxu0 %v1655
        %1771 = vmatprep.subr.bf16.mxu0 0
        %1772 = vmatpush1.bf16.msra.mxu0 %v1656
        %1773 = vmatprep.subr.bf16.mxu0 0
        %1774 = vmatpush1.bf16.msra.mxu0 0
        %1775 = vmatprep.subr.bf16.mxu0 0
        %1776 = vmatpush1.bf16.msra.mxu0 0
        %1777 = vmatprep.subr.bf16.mxu0 0
        %1778 = vmatpush1.bf16.msra.mxu0 0
        %1779 = vmatprep.subr.bf16.mxu0 0
        %1780 = vmatpush1.bf16.msra.mxu0 0
        %1781 = vmatprep.subr.bf16.mxu0 0
        %1782 = vmatpush1.bf16.msra.mxu0 0
        %1783 = vmatprep.subr.bf16.mxu0 0
        %1784 = vmatpush1.bf16.msra.mxu0 0
        %1785 = vmatprep.subr.bf16.mxu0 0
        %1786 = vmatpush1.bf16.msra.mxu0 0
        %1787 = vmatprep.subr.bf16.mxu0 0
        %1788 = vmatpush1.bf16.msra.mxu0 0
        %1789 = vmatprep.subr.bf16.mxu0 0
        %1790 = vmatpush1.bf16.msra.mxu0 0
        %1791 = vmatprep.subr.bf16.mxu0 0
        %1792 = vmatpush1.bf16.msra.mxu0 0
        %1793 = vmatprep.subr.bf16.mxu0 0
        %1794 = vmatpush1.bf16.msra.mxu0 0
        %1795 = vmatprep.subr.bf16.mxu0 0
        %1796 = vmatpush1.bf16.msra.mxu0 0
        %1797 = vmatprep.subr.bf16.mxu0 0
        %1798 = vmatpush1.bf16.msra.mxu0 0
        %1799 = vmatprep.subr.bf16.mxu0 0
        %1800 = vmatpush1.bf16.msra.mxu0 0
        %1801 = vmatprep.mubr.bf16.mxu0 0
        %1802 = vmatmul.mubr.bf16.gmra.mrb[0].mxu0 %v1767
        %v1803 = vpop.f32.mrb[0].mxu0
        %v1804 = vadd.f32 0.0, %v1803
        %v1805 = vpop.f32.mrb[0].mxu0
        %v1806 = vpop.f32.mrb[0].mxu0
        %v1807 = vpop.f32.mrb[0].mxu0
        %1808 = vdwg.mxu0
        %v1810 = vsel %vm1679, %v1594, 0
        %1812 = vmatprep.subr.bf16.mxu0 0
        %1813 = vmatpush1.bf16.msra.mxu0 %v1671
        %1814 = vmatprep.subr.bf16.mxu0 0
        %1815 = vmatpush1.bf16.msra.mxu0 %v1672
        %1816 = vmatprep.subr.bf16.mxu0 0
        %1817 = vmatpush1.bf16.msra.mxu0 0
        %1818 = vmatprep.subr.bf16.mxu0 0
        %1819 = vmatpush1.bf16.msra.mxu0 0
        %1820 = vmatprep.subr.bf16.mxu0 0
        %1821 = vmatpush1.bf16.msra.mxu0 0
        %1822 = vmatprep.subr.bf16.mxu0 0
        %1823 = vmatpush1.bf16.msra.mxu0 0
        %1824 = vmatprep.subr.bf16.mxu0 0
        %1825 = vmatpush1.bf16.msra.mxu0 0
        %1826 = vmatprep.subr.bf16.mxu0 0
        %1827 = vmatpush1.bf16.msra.mxu0 0
        %1828 = vmatprep.subr.bf16.mxu0 0
        %1829 = vmatpush1.bf16.msra.mxu0 0
        %1830 = vmatprep.subr.bf16.mxu0 0
        %1831 = vmatpush1.bf16.msra.mxu0 0
        %1832 = vmatprep.subr.bf16.mxu0 0
        %1833 = vmatpush1.bf16.msra.mxu0 0
        %1834 = vmatprep.subr.bf16.mxu0 0
        %1835 = vmatpush1.bf16.msra.mxu0 0
        %1836 = vmatprep.subr.bf16.mxu0 0
        %1837 = vmatpush1.bf16.msra.mxu0 0
        %1838 = vmatprep.subr.bf16.mxu0 0
        %1839 = vmatpush1.bf16.msra.mxu0 0
        %1840 = vmatprep.subr.bf16.mxu0 0
        %1841 = vmatpush1.bf16.msra.mxu0 0
        %1842 = vmatprep.subr.bf16.mxu0 0
        %1843 = vmatpush1.bf16.msra.mxu0 0
        %1844 = vmatprep.mubr.bf16.mxu0 0
        %1845 = vmatmul.mubr.bf16.gmra.mrb[0].mxu0 %v1810
        %v1846 = vpop.f32.mrb[0].mxu0
        %v1847 = vadd.f32 0.0, %v1846
        %v1848 = vpop.f32.mrb[0].mxu0
        %v1849 = vpop.f32.mrb[0].mxu0
        %v1850 = vpop.f32.mrb[0].mxu0
        %1851 = vdwg.mxu0
        %v1852 = vmul.f32 %v1718, 0.17677669
        %v1853 = vmul.f32 %v1761, 0.17677669
        %v1854 = vmul.f32 %v1804, 0.17677669
        %v1855 = vmul.f32 %v1847, 0.17677669
        %v1856 = vlaneseq
        %v1857 = vand.u32 %v1856, 127
        %vm1858 = vcmp.lt.s32.totalorder %v1857, 5
        %v1859 = vsel %vm1858, %v1852, -1e+30
        %v1860 = vsel %vm1858, %v1853, -1e+30
        %v1861 = vsel %vm1858, %v1854, -1e+30
        %v1862 = vsel %vm1858, %v1855, -1e+30
        %vm1863 = vcmask 64512
        %v1864 = vsel %vm1863, %v1859, -inf
        %1865 = vmax.xlane.f32.xlu0 %v1864
        %v1866 = vpop.xlane.xlu0 %1865
        %v1867 = vsel %vm1863, %v1860, -inf
        %1868 = vmax.xlane.f32.xlu0 %v1867
        %v1869 = vpop.xlane.xlu0 %1868
        %v1870 = vsel %vm1863, %v1861, -inf
        %1871 = vmax.xlane.f32.xlu0 %v1870
        %v1872 = vpop.xlane.xlu0 %1871
        %v1873 = vsel %vm1863, %v1862, -inf
        %1874 = vmax.xlane.f32.xlu0 %v1873
        %v1875 = vpop.xlane.xlu0 %1874
        %v1876 = vsub.f32 %v1859, %v1866
        %v1877 = vsub.f32 %v1860, %v1869
        %v1878 = vsub.f32 %v1861, %v1872
        %v1879 = vsub.f32 %v1862, %v1875
        %v1880 = vmul.f32 %v1876, 1.442695
        %v1881 = vpow.pop %v1880
        %v1882 = vmul.f32 %v1877, 1.442695
        %v1883 = vpow.pop %v1882
        %v1884 = vmul.f32 %v1878, 1.442695
        %v1885 = vpow.pop %v1884
        %v1886 = vmul.f32 %v1879, 1.442695
        %v1887 = vpow.pop %v1886
        %v1888 = vsel %vm1863, %v1881, 0.0
        %1889 = vadd.xlane.f32.xlu0 %v1888
        %v1890 = vpop.xlane.xlu0 %1889
        %v1891 = vsel %vm1863, %v1883, 0.0
        %1892 = vadd.xlane.f32.xlu0 %v1891
        %v1893 = vpop.xlane.xlu0 %1892
        %v1894 = vsel %vm1863, %v1885, 0.0
        %1895 = vadd.xlane.f32.xlu0 %v1894
        %v1896 = vpop.xlane.xlu0 %1895
        %v1897 = vsel %vm1863, %v1887, 0.0
        %1898 = vadd.xlane.f32.xlu0 %v1897
        %v1899 = vpop.xlane.xlu0 %1898
        %v1900 = vrcp.pop %v1890
        %v1901 = vrcp.pop %v1893
        %v1902 = vrcp.pop %v1896
        %v1903 = vrcp.pop %v1899
        %v1904 = vmul.f32 %v1881, %v1900
        %v1905 = vmul.f32 %v1883, %v1901
        %v1906 = vmul.f32 %v1885, %v1902
        %v1907 = vmul.f32 %v1887, %v1903
        %v1908 = vpack.c.bf16 %v1904, %v1904
        %v1909 = vpack.c.bf16 %v1905, %v1905
        %v1910 = vpack.c.bf16 %v1906, %v1906
        %v1911 = vpack.c.bf16 %v1907, %v1907
        %1912 = vxpose.xlu0.c.b16.start [1/8] %v1587, 128
        %1913 = vxpose.xlu0.c.b16.cont [2/8] 0, 128
        %1914 = vxpose.xlu0.c.b16.cont [3/8] 0, 128
        %1915 = vxpose.xlu0.c.b16.cont [4/8] 0, 128
        %1916 = vxpose.xlu0.c.b16.cont [5/8] 0, 128
        %1917 = vxpose.xlu0.c.b16.cont [6/8] 0, 128
        %1918 = vxpose.xlu0.c.b16.cont [7/8] 0, 128
        %1919 = vxpose.xlu0.c.b16.end [8/8] 0, 128
        %v1920 = vpop.trf.xlu0
        %v1921 = vpop.trf.xlu0
        %v1922 = vpop.trf.xlu0
        %v1923 = vpop.trf.xlu0
        %v1924 = vpop.trf.xlu0
        %v1925 = vpop.trf.xlu0
        %v1926 = vpop.trf.xlu0
        %v1927 = vpop.trf.xlu0
        %1928 = vxpose.xlu0.c.b16.start [1/8] %v1607, 128
        %1929 = vxpose.xlu0.c.b16.cont [2/8] 0, 128
        %1930 = vxpose.xlu0.c.b16.cont [3/8] 0, 128
        %1931 = vxpose.xlu0.c.b16.cont [4/8] 0, 128
        %1932 = vxpose.xlu0.c.b16.cont [5/8] 0, 128
        %1933 = vxpose.xlu0.c.b16.cont [6/8] 0, 128
        %1934 = vxpose.xlu0.c.b16.cont [7/8] 0, 128
        %1935 = vxpose.xlu0.c.b16.end [8/8] 0, 128
        %v1936 = vpop.trf.xlu0
        %v1937 = vpop.trf.xlu0
        %v1938 = vpop.trf.xlu0
        %v1939 = vpop.trf.xlu0
        %v1940 = vpop.trf.xlu0
        %v1941 = vpop.trf.xlu0
        %v1942 = vpop.trf.xlu0
        %v1943 = vpop.trf.xlu0
        %1944 = vxpose.xlu0.c.b16.start [1/8] %v1610, 128
        %1945 = vxpose.xlu0.c.b16.cont [2/8] 0, 128
        %1946 = vxpose.xlu0.c.b16.cont [3/8] 0, 128
        %1947 = vxpose.xlu0.c.b16.cont [4/8] 0, 128
        %1948 = vxpose.xlu0.c.b16.cont [5/8] 0, 128
        %1949 = vxpose.xlu0.c.b16.cont [6/8] 0, 128
        %1950 = vxpose.xlu0.c.b16.cont [7/8] 0, 128
        %1951 = vxpose.xlu0.c.b16.end [8/8] 0, 128
        %v1952 = vpop.trf.xlu0
        %v1953 = vpop.trf.xlu0
        %v1954 = vpop.trf.xlu0
        %v1955 = vpop.trf.xlu0
        %v1956 = vpop.trf.xlu0
        %v1957 = vpop.trf.xlu0
        %v1958 = vpop.trf.xlu0
        %v1959 = vpop.trf.xlu0
        %1960 = vxpose.xlu0.c.b16.start [1/8] %v1613, 128
        %1961 = vxpose.xlu0.c.b16.cont [2/8] 0, 128
        %1962 = vxpose.xlu0.c.b16.cont [3/8] 0, 128
        %1963 = vxpose.xlu0.c.b16.cont [4/8] 0, 128
        %1964 = vxpose.xlu0.c.b16.cont [5/8] 0, 128
        %1965 = vxpose.xlu0.c.b16.cont [6/8] 0, 128
        %1966 = vxpose.xlu0.c.b16.cont [7/8] 0, 128
        %1967 = vxpose.xlu0.c.b16.end [8/8] 0, 128
        %v1968 = vpop.trf.xlu0
        %v1969 = vpop.trf.xlu0
        %v1970 = vpop.trf.xlu0
        %v1971 = vpop.trf.xlu0
        %v1972 = vpop.trf.xlu0
        %v1973 = vpop.trf.xlu0
        %v1974 = vpop.trf.xlu0
        %v1975 = vpop.trf.xlu0
        %v1977 = vsel %vm1863, %v1920, 0
        %v1980 = vsel %vm1863, %v1921, 0
        %v1983 = vsel %vm1863, %v1908, 0
        %1985 = vmatprep.subr.bf16.mxu0 0
        %1986 = vmatpush1.bf16.xpose.msra.mxu0 %v1983
        %1987 = vmatprep.subr.bf16.mxu0 0
        %1988 = vmatpush1.bf16.xpose.msra.mxu0 0
        %1989 = vmatprep.subr.bf16.mxu0 0
        %1990 = vmatpush1.bf16.xpose.msra.mxu0 0
        %1991 = vmatprep.subr.bf16.mxu0 0
        %1992 = vmatpush1.bf16.xpose.msra.mxu0 0
        %1993 = vmatprep.subr.bf16.mxu0 0
        %1994 = vmatpush1.bf16.xpose.msra.mxu0 0
        %1995 = vmatprep.subr.bf16.mxu0 0
        %1996 = vmatpush1.bf16.xpose.msra.mxu0 0
        %1997 = vmatprep.subr.bf16.mxu0 0
        %1998 = vmatpush1.bf16.xpose.msra.mxu0 0
        %1999 = vmatprep.subr.bf16.mxu0 0
        %2000 = vmatpush1.bf16.xpose.msra.mxu0 0
        %2001 = vmatprep.subr.bf16.mxu0 0
        %2002 = vmatpush1.bf16.xpose.msra.mxu0 0
        %2003 = vmatprep.subr.bf16.mxu0 0
        %2004 = vmatpush1.bf16.xpose.msra.mxu0 0
        %2005 = vmatprep.subr.bf16.mxu0 0
        %2006 = vmatpush1.bf16.xpose.msra.mxu0 0
        %2007 = vmatprep.subr.bf16.mxu0 0
        %2008 = vmatpush1.bf16.xpose.msra.mxu0 0
        %2009 = vmatprep.subr.bf16.mxu0 0
        %2010 = vmatpush1.bf16.xpose.msra.mxu0 0
        %2011 = vmatprep.subr.bf16.mxu0 0
        %2012 = vmatpush1.bf16.xpose.msra.mxu0 0
        %2013 = vmatprep.subr.bf16.mxu0 0
        %2014 = vmatpush1.bf16.xpose.msra.mxu0 0
        %2015 = vmatprep.subr.bf16.mxu0 0
        %2016 = vmatpush1.bf16.xpose.msra.mxu0 0
        %2017 = vmatprep.mubr.bf16.mxu0 0
        %2018 = vmatmul.mubr.bf16.gmra.mrb[0].mxu0 %v1977
        %v2019 = vpop.f32.mrb[0].mxu0
        %v2020 = vadd.f32 0.0, %v2019
        %v2021 = vpop.f32.mrb[0].mxu0
        %v2022 = vpop.f32.mrb[0].mxu0
        %v2023 = vadd.f32 0.0, %v2022
        %v2024 = vpop.f32.mrb[0].mxu0
        %2025 = vmatprep.mubr.bf16.mxu0 0
        %2026 = vmatmul.mubr.bf16.gmra.mrb[0].mxu0 %v1980
        %v2027 = vpop.f32.mrb[0].mxu0
        %v2028 = vadd.f32 0.0, %v2027
        %v2029 = vpop.f32.mrb[0].mxu0
        %v2030 = vpop.f32.mrb[0].mxu0
        %v2031 = vadd.f32 0.0, %v2030
        %v2032 = vpop.f32.mrb[0].mxu0
        %2033 = vdwg.mxu0
        %v2035 = vsel %vm1863, %v1936, 0
        %v2038 = vsel %vm1863, %v1937, 0
        %v2041 = vsel %vm1863, %v1909, 0
        %2043 = vmatprep.subr.bf16.mxu0 0
        %2044 = vmatpush1.bf16.xpose.msra.mxu0 %v2041
        %2045 = vmatprep.subr.bf16.mxu0 0
        %2046 = vmatpush1.bf16.xpose.msra.mxu0 0
        %2047 = vmatprep.subr.bf16.mxu0 0
        %2048 = vmatpush1.bf16.xpose.msra.mxu0 0
        %2049 = vmatprep.subr.bf16.mxu0 0
        %2050 = vmatpush1.bf16.xpose.msra.mxu0 0
        %2051 = vmatprep.subr.bf16.mxu0 0
        %2052 = vmatpush1.bf16.xpose.msra.mxu0 0
        %2053 = vmatprep.subr.bf16.mxu0 0
        %2054 = vmatpush1.bf16.xpose.msra.mxu0 0
        %2055 = vmatprep.subr.bf16.mxu0 0
        %2056 = vmatpush1.bf16.xpose.msra.mxu0 0
        %2057 = vmatprep.subr.bf16.mxu0 0
        %2058 = vmatpush1.bf16.xpose.msra.mxu0 0
        %2059 = vmatprep.subr.bf16.mxu0 0
        %2060 = vmatpush1.bf16.xpose.msra.mxu0 0
        %2061 = vmatprep.subr.bf16.mxu0 0
        %2062 = vmatpush1.bf16.xpose.msra.mxu0 0
        %2063 = vmatprep.subr.bf16.mxu0 0
        %2064 = vmatpush1.bf16.xpose.msra.mxu0 0
        %2065 = vmatprep.subr.bf16.mxu0 0
        %2066 = vmatpush1.bf16.xpose.msra.mxu0 0
        %2067 = vmatprep.subr.bf16.mxu0 0
        %2068 = vmatpush1.bf16.xpose.msra.mxu0 0
        %2069 = vmatprep.subr.bf16.mxu0 0
        %2070 = vmatpush1.bf16.xpose.msra.mxu0 0
        %2071 = vmatprep.subr.bf16.mxu0 0
        %2072 = vmatpush1.bf16.xpose.msra.mxu0 0
        %2073 = vmatprep.subr.bf16.mxu0 0
        %2074 = vmatpush1.bf16.xpose.msra.mxu0 0
        %2075 = vmatprep.mubr.bf16.mxu0 0
        %2076 = vmatmul.mubr.bf16.gmra.mrb[0].mxu0 %v2035
        %v2077 = vpop.f32.mrb[0].mxu0
        %v2078 = vadd.f32 0.0, %v2077
        %v2079 = vpop.f32.mrb[0].mxu0
        %v2080 = vpop.f32.mrb[0].mxu0
        %v2081 = vadd.f32 0.0, %v2080
        %v2082 = vpop.f32.mrb[0].mxu0
        %2083 = vmatprep.mubr.bf16.mxu0 0
        %2084 = vmatmul.mubr.bf16.gmra.mrb[0].mxu0 %v2038
        %v2085 = vpop.f32.mrb[0].mxu0
        %v2086 = vadd.f32 0.0, %v2085
        %v2087 = vpop.f32.mrb[0].mxu0
        %v2088 = vpop.f32.mrb[0].mxu0
        %v2089 = vadd.f32 0.0, %v2088
        %v2090 = vpop.f32.mrb[0].mxu0
        %2091 = vdwg.mxu0
        %v2093 = vsel %vm1863, %v1952, 0
        %v2096 = vsel %vm1863, %v1953, 0
        %v2099 = vsel %vm1863, %v1910, 0
        %2101 = vmatprep.subr.bf16.mxu0 0
        %2102 = vmatpush1.bf16.xpose.msra.mxu0 %v2099
        %2103 = vmatprep.subr.bf16.mxu0 0
        %2104 = vmatpush1.bf16.xpose.msra.mxu0 0
        %2105 = vmatprep.subr.bf16.mxu0 0
        %2106 = vmatpush1.bf16.xpose.msra.mxu0 0
        %2107 = vmatprep.subr.bf16.mxu0 0
        %2108 = vmatpush1.bf16.xpose.msra.mxu0 0
        %2109 = vmatprep.subr.bf16.mxu0 0
        %2110 = vmatpush1.bf16.xpose.msra.mxu0 0
        %2111 = vmatprep.subr.bf16.mxu0 0
        %2112 = vmatpush1.bf16.xpose.msra.mxu0 0
        %2113 = vmatprep.subr.bf16.mxu0 0
        %2114 = vmatpush1.bf16.xpose.msra.mxu0 0
        %2115 = vmatprep.subr.bf16.mxu0 0
        %2116 = vmatpush1.bf16.xpose.msra.mxu0 0
        %2117 = vmatprep.subr.bf16.mxu0 0
        %2118 = vmatpush1.bf16.xpose.msra.mxu0 0
        %2119 = vmatprep.subr.bf16.mxu0 0
        %2120 = vmatpush1.bf16.xpose.msra.mxu0 0
        %2121 = vmatprep.subr.bf16.mxu0 0
        %2122 = vmatpush1.bf16.xpose.msra.mxu0 0
        %2123 = vmatprep.subr.bf16.mxu0 0
        %2124 = vmatpush1.bf16.xpose.msra.mxu0 0
        %2125 = vmatprep.subr.bf16.mxu0 0
        %2126 = vmatpush1.bf16.xpose.msra.mxu0 0
        %2127 = vmatprep.subr.bf16.mxu0 0
        %2128 = vmatpush1.bf16.xpose.msra.mxu0 0
        %2129 = vmatprep.subr.bf16.mxu0 0
        %2130 = vmatpush1.bf16.xpose.msra.mxu0 0
        %2131 = vmatprep.subr.bf16.mxu0 0
        %2132 = vmatpush1.bf16.xpose.msra.mxu0 0
        %2133 = vmatprep.mubr.bf16.mxu0 0
        %2134 = vmatmul.mubr.bf16.gmra.mrb[0].mxu0 %v2093
        %v2135 = vpop.f32.mrb[0].mxu0
        %v2136 = vadd.f32 0.0, %v2135
        %v2137 = vpop.f32.mrb[0].mxu0
        %v2138 = vpop.f32.mrb[0].mxu0
        %v2139 = vadd.f32 0.0, %v2138
        %v2140 = vpop.f32.mrb[0].mxu0
        %2141 = vmatprep.mubr.bf16.mxu0 0
        %2142 = vmatmul.mubr.bf16.gmra.mrb[0].mxu0 %v2096
        %v2143 = vpop.f32.mrb[0].mxu0
        %v2144 = vadd.f32 0.0, %v2143
        %v2145 = vpop.f32.mrb[0].mxu0
        %v2146 = vpop.f32.mrb[0].mxu0
        %v2147 = vadd.f32 0.0, %v2146
        %v2148 = vpop.f32.mrb[0].mxu0
        %2149 = vdwg.mxu0
        %v2151 = vsel %vm1863, %v1968, 0
        %v2154 = vsel %vm1863, %v1969, 0
        %v2157 = vsel %vm1863, %v1911, 0
        %2159 = vmatprep.subr.bf16.mxu0 0
        %2160 = vmatpush1.bf16.xpose.msra.mxu0 %v2157
        %2161 = vmatprep.subr.bf16.mxu0 0
        %2162 = vmatpush1.bf16.xpose.msra.mxu0 0
        %2163 = vmatprep.subr.bf16.mxu0 0
        %2164 = vmatpush1.bf16.xpose.msra.mxu0 0
        %2165 = vmatprep.subr.bf16.mxu0 0
        %2166 = vmatpush1.bf16.xpose.msra.mxu0 0
        %2167 = vmatprep.subr.bf16.mxu0 0
        %2168 = vmatpush1.bf16.xpose.msra.mxu0 0
        %2169 = vmatprep.subr.bf16.mxu0 0
        %2170 = vmatpush1.bf16.xpose.msra.mxu0 0
        %2171 = vmatprep.subr.bf16.mxu0 0
        %2172 = vmatpush1.bf16.xpose.msra.mxu0 0
        %2173 = vmatprep.subr.bf16.mxu0 0
        %2174 = vmatpush1.bf16.xpose.msra.mxu0 0
        %2175 = vmatprep.subr.bf16.mxu0 0
        %2176 = vmatpush1.bf16.xpose.msra.mxu0 0
        %2177 = vmatprep.subr.bf16.mxu0 0
        %2178 = vmatpush1.bf16.xpose.msra.mxu0 0
        %2179 = vmatprep.subr.bf16.mxu0 0
        %2180 = vmatpush1.bf16.xpose.msra.mxu0 0
        %2181 = vmatprep.subr.bf16.mxu0 0
        %2182 = vmatpush1.bf16.xpose.msra.mxu0 0
        %2183 = vmatprep.subr.bf16.mxu0 0
        %2184 = vmatpush1.bf16.xpose.msra.mxu0 0
        %2185 = vmatprep.subr.bf16.mxu0 0
        %2186 = vmatpush1.bf16.xpose.msra.mxu0 0
        %2187 = vmatprep.subr.bf16.mxu0 0
        %2188 = vmatpush1.bf16.xpose.msra.mxu0 0
        %2189 = vmatprep.subr.bf16.mxu0 0
        %2190 = vmatpush1.bf16.xpose.msra.mxu0 0
        %2191 = vmatprep.mubr.bf16.mxu0 0
        %2192 = vmatmul.mubr.bf16.gmra.mrb[0].mxu0 %v2151
        %v2193 = vpop.f32.mrb[0].mxu0
        %v2194 = vadd.f32 0.0, %v2193
        %v2195 = vpop.f32.mrb[0].mxu0
        %v2196 = vpop.f32.mrb[0].mxu0
        %v2197 = vadd.f32 0.0, %v2196
        %v2198 = vpop.f32.mrb[0].mxu0
        %2199 = vmatprep.mubr.bf16.mxu0 0
        %2200 = vmatmul.mubr.bf16.gmra.mrb[0].mxu0 %v2154
        %v2201 = vpop.f32.mrb[0].mxu0
        %v2202 = vadd.f32 0.0, %v2201
        %v2203 = vpop.f32.mrb[0].mxu0
        %v2204 = vpop.f32.mrb[0].mxu0
        %v2205 = vadd.f32 0.0, %v2204
        %v2206 = vpop.f32.mrb[0].mxu0
        %2207 = vdwg.mxu0
        %2208 = vxpose.xlu0.b32.start [1/16] %v2020, 128
        %2209 = vxpose.xlu0.b32.cont [2/16] %v2023, 128
        %2210 = vxpose.xlu0.b32.cont [3/16] %v2028, 128
        %2211 = vxpose.xlu0.b32.cont [4/16] %v2031, 128
        %2212 = vxpose.xlu0.b32.cont [5/16] 0.0, 128
        %2213 = vxpose.xlu0.b32.cont [6/16] 0.0, 128
        %2214 = vxpose.xlu0.b32.cont [7/16] 0.0, 128
        %2215 = vxpose.xlu0.b32.cont [8/16] 0.0, 128
        %2216 = vxpose.xlu0.b32.cont [9/16] 0.0, 128
        %2217 = vxpose.xlu0.b32.cont [10/16] 0.0, 128
        %2218 = vxpose.xlu0.b32.cont [11/16] 0.0, 128
        %2219 = vxpose.xlu0.b32.cont [12/16] 0.0, 128
        %2220 = vxpose.xlu0.b32.cont [13/16] 0.0, 128
        %2221 = vxpose.xlu0.b32.cont [14/16] 0.0, 128
        %2222 = vxpose.xlu0.b32.cont [15/16] 0.0, 128
        %2223 = vxpose.xlu0.b32.end [16/16] 0.0, 128
        %v2224 = vpop.trf.xlu0
        %v2225 = vpop.trf.xlu0
        %v2226 = vpop.trf.xlu0
        %v2227 = vpop.trf.xlu0
        %v2228 = vpop.trf.xlu0
        %v2229 = vpop.trf.xlu0
        %v2230 = vpop.trf.xlu0
        %v2231 = vpop.trf.xlu0
        %v2232 = vpop.trf.xlu0
        %v2233 = vpop.trf.xlu0
        %v2234 = vpop.trf.xlu0
        %v2235 = vpop.trf.xlu0
        %v2236 = vpop.trf.xlu0
        %v2237 = vpop.trf.xlu0
        %v2238 = vpop.trf.xlu0
        %v2239 = vpop.trf.xlu0
        %2240 = vxpose.xlu0.b32.start [1/16] %v2078, 128
        %2241 = vxpose.xlu0.b32.cont [2/16] %v2081, 128
        %2242 = vxpose.xlu0.b32.cont [3/16] %v2086, 128
        %2243 = vxpose.xlu0.b32.cont [4/16] %v2089, 128
        %2244 = vxpose.xlu0.b32.cont [5/16] 0.0, 128
        %2245 = vxpose.xlu0.b32.cont [6/16] 0.0, 128
        %2246 = vxpose.xlu0.b32.cont [7/16] 0.0, 128
        %2247 = vxpose.xlu0.b32.cont [8/16] 0.0, 128
        %2248 = vxpose.xlu0.b32.cont [9/16] 0.0, 128
        %2249 = vxpose.xlu0.b32.cont [10/16] 0.0, 128
        %2250 = vxpose.xlu0.b32.cont [11/16] 0.0, 128
        %2251 = vxpose.xlu0.b32.cont [12/16] 0.0, 128
        %2252 = vxpose.xlu0.b32.cont [13/16] 0.0, 128
        %2253 = vxpose.xlu0.b32.cont [14/16] 0.0, 128
        %2254 = vxpose.xlu0.b32.cont [15/16] 0.0, 128
        %2255 = vxpose.xlu0.b32.end [16/16] 0.0, 128
        %v2256 = vpop.trf.xlu0
        %v2257 = vpop.trf.xlu0
        %v2258 = vpop.trf.xlu0
        %v2259 = vpop.trf.xlu0
        %v2260 = vpop.trf.xlu0
        %v2261 = vpop.trf.xlu0
        %v2262 = vpop.trf.xlu0
        %v2263 = vpop.trf.xlu0
        %v2264 = vpop.trf.xlu0
        %v2265 = vpop.trf.xlu0
        %v2266 = vpop.trf.xlu0
        %v2267 = vpop.trf.xlu0
        %v2268 = vpop.trf.xlu0
        %v2269 = vpop.trf.xlu0
        %v2270 = vpop.trf.xlu0
        %v2271 = vpop.trf.xlu0
        %2272 = vxpose.xlu0.b32.start [1/16] %v2136, 128
        %2273 = vxpose.xlu0.b32.cont [2/16] %v2139, 128
        %2274 = vxpose.xlu0.b32.cont [3/16] %v2144, 128
        %2275 = vxpose.xlu0.b32.cont [4/16] %v2147, 128
        %2276 = vxpose.xlu0.b32.cont [5/16] 0.0, 128
        %2277 = vxpose.xlu0.b32.cont [6/16] 0.0, 128
        %2278 = vxpose.xlu0.b32.cont [7/16] 0.0, 128
        %2279 = vxpose.xlu0.b32.cont [8/16] 0.0, 128
        %2280 = vxpose.xlu0.b32.cont [9/16] 0.0, 128
        %2281 = vxpose.xlu0.b32.cont [10/16] 0.0, 128
        %2282 = vxpose.xlu0.b32.cont [11/16] 0.0, 128
        %2283 = vxpose.xlu0.b32.cont [12/16] 0.0, 128
        %2284 = vxpose.xlu0.b32.cont [13/16] 0.0, 128
        %2285 = vxpose.xlu0.b32.cont [14/16] 0.0, 128
        %2286 = vxpose.xlu0.b32.cont [15/16] 0.0, 128
        %2287 = vxpose.xlu0.b32.end [16/16] 0.0, 128
        %v2288 = vpop.trf.xlu0
        %v2289 = vpop.trf.xlu0
        %v2290 = vpop.trf.xlu0
        %v2291 = vpop.trf.xlu0
        %v2292 = vpop.trf.xlu0
        %v2293 = vpop.trf.xlu0
        %v2294 = vpop.trf.xlu0
        %v2295 = vpop.trf.xlu0
        %v2296 = vpop.trf.xlu0
        %v2297 = vpop.trf.xlu0
        %v2298 = vpop.trf.xlu0
        %v2299 = vpop.trf.xlu0
        %v2300 = vpop.trf.xlu0
        %v2301 = vpop.trf.xlu0
        %v2302 = vpop.trf.xlu0
        %v2303 = vpop.trf.xlu0
        %2304 = vxpose.xlu0.b32.start [1/16] %v2194, 128
        %2305 = vxpose.xlu0.b32.cont [2/16] %v2197, 128
        %2306 = vxpose.xlu0.b32.cont [3/16] %v2202, 128
        %2307 = vxpose.xlu0.b32.cont [4/16] %v2205, 128
        %2308 = vxpose.xlu0.b32.cont [5/16] 0.0, 128
        %2309 = vxpose.xlu0.b32.cont [6/16] 0.0, 128
        %2310 = vxpose.xlu0.b32.cont [7/16] 0.0, 128
        %2311 = vxpose.xlu0.b32.cont [8/16] 0.0, 128
        %2312 = vxpose.xlu0.b32.cont [9/16] 0.0, 128
        %2313 = vxpose.xlu0.b32.cont [10/16] 0.0, 128
        %2314 = vxpose.xlu0.b32.cont [11/16] 0.0, 128
        %2315 = vxpose.xlu0.b32.cont [12/16] 0.0, 128
        %2316 = vxpose.xlu0.b32.cont [13/16] 0.0, 128
        %2317 = vxpose.xlu0.b32.cont [14/16] 0.0, 128
        %2318 = vxpose.xlu0.b32.cont [15/16] 0.0, 128
        %2319 = vxpose.xlu0.b32.end [16/16] 0.0, 128
        %v2320 = vpop.trf.xlu0
        %v2321 = vpop.trf.xlu0
        %v2322 = vpop.trf.xlu0
        %v2323 = vpop.trf.xlu0
        %v2324 = vpop.trf.xlu0
        %v2325 = vpop.trf.xlu0
        %v2326 = vpop.trf.xlu0
        %v2327 = vpop.trf.xlu0
        %v2328 = vpop.trf.xlu0
        %v2329 = vpop.trf.xlu0
        %v2330 = vpop.trf.xlu0
        %v2331 = vpop.trf.xlu0
        %v2332 = vpop.trf.xlu0
        %v2333 = vpop.trf.xlu0
        %v2334 = vpop.trf.xlu0
        %v2335 = vpop.trf.xlu0
        %v2336 = vcombine.low %v2224, %v2288
        %v2337 = vcombine.high %v2224, %v2288
        %v2339 = vunpack.c.l.s4 1983009808
        %v2340 = vunpack.c.0.s8 %v2339
        %v2341 = vlaneseq
        %v2342 = vshrl.u32 %v2341, 7
        %v2343 = vsub.s32 %v2340, %v2342
        %v2344 = vrot.slane %v2336, %v2343
        %v2346 = vunpack.c.l.s4 1983009808
        %v2347 = vunpack.c.0.s8 %v2346
        %v2348 = vlaneseq
        %v2349 = vshrl.u32 %v2348, 7
        %v2350 = vsub.s32 %v2347, %v2349
        %v2351 = vrot.slane %v2337, %v2350
        %v2352 = vcombine.low %v2256, %v2320
        %v2353 = vcombine.high %v2256, %v2320
        %v2355 = vunpack.c.l.s4 1983009808
        %v2356 = vunpack.c.0.s8 %v2355
        %v2357 = vlaneseq
        %v2358 = vshrl.u32 %v2357, 7
        %v2359 = vsub.s32 %v2356, %v2358
        %v2360 = vrot.slane %v2352, %v2359
        %v2362 = vunpack.c.l.s4 1983009808
        %v2363 = vunpack.c.0.s8 %v2362
        %v2364 = vlaneseq
        %v2365 = vshrl.u32 %v2364, 7
        %v2366 = vsub.s32 %v2363, %v2365
        %v2367 = vrot.slane %v2353, %v2366
        %v2368 = vcombine.low %v2344, %v2360
        %v2369 = vcombine.high %v2344, %v2360
        %v2371 = vunpack.c.l.s4 1934713408
        %v2372 = vunpack.c.0.s8 %v2371
        %v2373 = vlaneseq
        %v2374 = vshrl.u32 %v2373, 7
        %v2375 = vsub.s32 %v2372, %v2374
        %v2376 = vrot.slane %v2368, %v2375
        %v2378 = vunpack.c.l.s4 1934713408
        %v2379 = vunpack.c.0.s8 %v2378
        %v2380 = vlaneseq
        %v2381 = vshrl.u32 %v2380, 7
        %v2382 = vsub.s32 %v2379, %v2381
        %v2383 = vrot.slane %v2369, %v2382
        %v2384 = vcombine.low %v2351, %v2367
        %v2385 = vcombine.high %v2351, %v2367
        %v2387 = vunpack.c.l.s4 1934713408
        %v2388 = vunpack.c.0.s8 %v2387
        %v2389 = vlaneseq
        %v2390 = vshrl.u32 %v2389, 7
        %v2391 = vsub.s32 %v2388, %v2390
        %v2392 = vrot.slane %v2384, %v2391
        %v2394 = vunpack.c.l.s4 1934713408
        %v2395 = vunpack.c.0.s8 %v2394
        %v2396 = vlaneseq
        %v2397 = vshrl.u32 %v2396, 7
        %v2398 = vsub.s32 %v2395, %v2397
        %v2399 = vrot.slane %v2385, %v2398
        %v2400 = vcombine.high %v2376, 0.0
        %v2401 = vcombine.high %v2383, 0.0
        %v2402 = vcombine.high %v2392, 0.0
        %v2403 = vcombine.high %v2399, 0.0
        %v2404 = vcombine.low %v2376, %v2383
        %v2406 = vunpack.c.l.s4 1983009808
        %v2407 = vunpack.c.0.s8 %v2406
        %v2408 = vlaneseq
        %v2409 = vshrl.u32 %v2408, 7
        %v2410 = vsub.s32 %v2407, %v2409
        %v2411 = vrot.slane %v2404, %v2410
        %v2412 = vcombine.low %v2400, %v2401
        %v2414 = vunpack.c.l.s4 1983009808
        %v2415 = vunpack.c.0.s8 %v2414
        %v2416 = vlaneseq
        %v2417 = vshrl.u32 %v2416, 7
        %v2418 = vsub.s32 %v2415, %v2417
        %v2419 = vrot.slane %v2412, %v2418
        %v2420 = vcombine.low %v2392, %v2399
        %v2422 = vunpack.c.l.s4 1983009808
        %v2423 = vunpack.c.0.s8 %v2422
        %v2424 = vlaneseq
        %v2425 = vshrl.u32 %v2424, 7
        %v2426 = vsub.s32 %v2423, %v2425
        %v2427 = vrot.slane %v2420, %v2426
        %v2428 = vcombine.low %v2402, %v2403
        %v2430 = vunpack.c.l.s4 1983009808
        %v2431 = vunpack.c.0.s8 %v2430
        %v2432 = vlaneseq
        %v2433 = vshrl.u32 %v2432, 7
        %v2434 = vsub.s32 %v2431, %v2433
        %v2435 = vrot.slane %v2428, %v2434
        %v2436 = vcombine.low %v2411, %v2419
        %v2437 = vcombine.high %v2411, %v2419
        %v2439 = vunpack.c.l.s4 1934713408
        %v2440 = vunpack.c.0.s8 %v2439
        %v2441 = vlaneseq
        %v2442 = vshrl.u32 %v2441, 7
        %v2443 = vsub.s32 %v2440, %v2442
        %v2444 = vrot.slane %v2436, %v2443
        %v2446 = vunpack.c.l.s4 1934713408
        %v2447 = vunpack.c.0.s8 %v2446
        %v2448 = vlaneseq
        %v2449 = vshrl.u32 %v2448, 7
        %v2450 = vsub.s32 %v2447, %v2449
        %v2451 = vrot.slane %v2437, %v2450
        %v2452 = vcombine.low %v2427, %v2435
        %v2453 = vcombine.high %v2427, %v2435
        %v2455 = vunpack.c.l.s4 1934713408
        %v2456 = vunpack.c.0.s8 %v2455
        %v2457 = vlaneseq
        %v2458 = vshrl.u32 %v2457, 7
        %v2459 = vsub.s32 %v2456, %v2458
        %v2460 = vrot.slane %v2452, %v2459
        %v2462 = vunpack.c.l.s4 1934713408
        %v2463 = vunpack.c.0.s8 %v2462
        %v2464 = vlaneseq
        %v2465 = vshrl.u32 %v2464, 7
        %v2466 = vsub.s32 %v2463, %v2465
        %v2467 = vrot.slane %v2453, %v2466
        %v2468 = vcombine.low %v2444, %v2460
        %v2469 = vcombine.high %v2444, %v2460
        %v2470 = vcombine.low %v2451, %v2467
        %v2471 = vcombine.high %v2451, %v2467
        %2473 = vrot.lane.b32.xlu0 %v2469, 32
        %v2474 = vpop.permute.xlu0 %2473
        %2477 = vrot.lane.b32.xlu0 %v2470, 64
        %v2478 = vpop.permute.xlu0 %2477
        %2481 = vrot.lane.b32.xlu0 %v2471, 96
        %v2482 = vpop.permute.xlu0 %2481
        %v2484 = vsel %vm1679, %v2468, %v2474
        %vm2485 = vcmask 523264
        %v2486 = vsel %vm2485, %v2484, %v2478
        %vm2487 = vcmask 785408
        %v2488 = vsel %vm2487, %v2486, %v2482
        %v2489 = vld [vmem:[%s637] sm:$0xf]
        %v2490 = vld [vmem:[%s637 + $0x4] sm:$0xf]
        %v2491 = vld [vmem:[%s637 + $0x8] sm:$0xf]
        %v2492 = vld [vmem:[%s637 + $0xc] sm:$0xf]
        %v2493 = vld [vmem:[%s637 + $0x10] sm:$0xf]
        %v2494 = vld [vmem:[%s637 + $0x14] sm:$0xf]
        %v2495 = vld [vmem:[%s637 + $0x18] sm:$0xf]
        %v2496 = vld [vmem:[%s637 + $0x1c] sm:$0xf]
        %v2497 = vld [vmem:[%s637 + $0x20] sm:$0xf]
        %v2498 = vld [vmem:[%s637 + $0x24] sm:$0xf]
        %v2499 = vld [vmem:[%s637 + $0x28] sm:$0xf]
        %v2500 = vld [vmem:[%s637 + $0x2c] sm:$0xf]
        %v2501 = vld [vmem:[%s637 + $0x30] sm:$0xf]
        %v2502 = vld [vmem:[%s637 + $0x34] sm:$0xf]
        %v2503 = vld [vmem:[%s637 + $0x38] sm:$0xf]
        %v2504 = vld [vmem:[%s637 + $0x3c] sm:$0xf]
        %v2505 = vld [vmem:[%s774] sm:$0x1]
        %v2506 = vpack.c.bf16 %v2488, %v2488
        %v2508 = vlaneseq
        %v2509 = vshrl.u32 %v2508, 7
        %v2510 = vsub.s32 0, %v2509
        %v2511 = vrot.slane %v2505, %v2510
        %v2529 = vunpack.c.l.b16 %v2489
        %v2530 = vunpack.c.l.b16 %v2490
        %v2531 = vunpack.c.l.b16 %v2491
        %v2532 = vunpack.c.l.b16 %v2492
        %v2533 = vunpack.c.l.b16 %v2493
        %v2534 = vunpack.c.l.b16 %v2494
        %v2535 = vunpack.c.l.b16 %v2495
        %v2536 = vunpack.c.l.b16 %v2496
        %v2537 = vunpack.c.l.b16 %v2497
        %v2538 = vunpack.c.l.b16 %v2498
        %v2539 = vunpack.c.l.b16 %v2499
        %v2540 = vunpack.c.l.b16 %v2500
        %v2541 = vunpack.c.l.b16 %v2501
        %v2542 = vunpack.c.l.b16 %v2502
        %v2543 = vunpack.c.l.b16 %v2503
        %v2544 = vunpack.c.l.b16 %v2504
        %v2545 = vpack.c.b16 %v2530, %v2529
        %v2546 = vpack.c.b16 %v2532, %v2531
        %v2547 = vpack.c.b16 %v2534, %v2533
        %v2548 = vpack.c.b16 %v2536, %v2535
        %v2549 = vpack.c.b16 %v2538, %v2537
        %v2550 = vpack.c.b16 %v2540, %v2539
        %v2551 = vpack.c.b16 %v2542, %v2541
        %v2552 = vpack.c.b16 %v2544, %v2543
        %2561 = vmatprep.subr.bf16.mxu0 0
        %2562 = vmatpush1.bf16.msra.mxu0 %v2545
        %2563 = vmatprep.subr.bf16.mxu0 0
        %2564 = vmatpush1.bf16.msra.mxu0 %v2546
        %2565 = vmatprep.subr.bf16.mxu0 0
        %2566 = vmatpush1.bf16.msra.mxu0 %v2547
        %2567 = vmatprep.subr.bf16.mxu0 0
        %2568 = vmatpush1.bf16.msra.mxu0 %v2548
        %2569 = vmatprep.subr.bf16.mxu0 0
        %2570 = vmatpush1.bf16.msra.mxu0 %v2549
        %2571 = vmatprep.subr.bf16.mxu0 0
        %2572 = vmatpush1.bf16.msra.mxu0 %v2550
        %2573 = vmatprep.subr.bf16.mxu0 0
        %2574 = vmatpush1.bf16.msra.mxu0 %v2551
        %2575 = vmatprep.subr.bf16.mxu0 0
        %2576 = vmatpush1.bf16.msra.mxu0 %v2552
        %2577 = vmatprep.subr.bf16.mxu0 0
        %2578 = vmatpush1.bf16.msra.mxu0 0
        %2579 = vmatprep.subr.bf16.mxu0 0
        %2580 = vmatpush1.bf16.msra.mxu0 0
        %2581 = vmatprep.subr.bf16.mxu0 0
        %2582 = vmatpush1.bf16.msra.mxu0 0
        %2583 = vmatprep.subr.bf16.mxu0 0
        %2584 = vmatpush1.bf16.msra.mxu0 0
        %2585 = vmatprep.subr.bf16.mxu0 0
        %2586 = vmatpush1.bf16.msra.mxu0 0
        %2587 = vmatprep.subr.bf16.mxu0 0
        %2588 = vmatpush1.bf16.msra.mxu0 0
        %2589 = vmatprep.subr.bf16.mxu0 0
        %2590 = vmatpush1.bf16.msra.mxu0 0
        %2591 = vmatprep.subr.bf16.mxu0 0
        %2592 = vmatpush1.bf16.msra.mxu0 0
        %2593 = vmatprep.mubr.bf16.mxu0 0
        %2594 = vmatmul.mubr.bf16.gmra.mrb[0].mxu0 %v2506
        %v2595 = vpop.f32.mrb[0].mxu0
        %v2596 = vadd.f32 %v2511, %v2595
        %v2597 = vpop.f32.mrb[0].mxu0
        %v2598 = vpop.f32.mrb[0].mxu0
        %v2599 = vpop.f32.mrb[0].mxu0
        %2600 = vdwg.mxu0
        %v2601 = vadd.f32 %v1297, %v2596
        %v2602 = vld [vmem:[%s645] sm:$0x1]
        %v2603 = vld [vmem:[%s653] sm:$0x1]
        %2604 = vadd.xlane.f32.xlu0 %v2601
        %v2605 = vpop.xlane.xlu0 %2604
        %v2606 = vmul.f32 %v2605, %v1302
        %v2607 = vsub.f32 %v2601, %v2606
        %v2608 = vmul.f32 %v2607, %v2607
        %2609 = vadd.xlane.f32.xlu0 %v2608
        %v2610 = vpop.xlane.xlu0 %2609
        %v2611 = vmul.f32 %v2610, %v1302
        %v2612 = vadd.f32 %v2611, 1e-05
        %v2613 = vrsqrt.pop %v2612
        %v2614 = vmul.f32 %v2607, %v2613
        %v2616 = vlaneseq
        %v2617 = vshrl.u32 %v2616, 7
        %v2618 = vsub.s32 0, %v2617
        %v2619 = vrot.slane %v2602, %v2618
        %v2621 = vmul.f32 %v2614, %v2619
        %v2623 = vlaneseq
        %v2624 = vshrl.u32 %v2623, 7
        %v2625 = vsub.s32 0, %v2624
        %v2626 = vrot.slane %v2603, %v2625
        %v2628 = vadd.f32 %v2621, %v2626
        %v2629 = vld [vmem:[%s779] sm:$0xff]
        %v2630 = vld [vmem:[%s779 + $0x8] sm:$0xff]
        %v2631 = vld [vmem:[%s779 + $0x10] sm:$0xff]
        %v2632 = vld [vmem:[%s779 + $0x18] sm:$0xff]
        %v2633 = vld [vmem:[%s779 + $0x20] sm:$0xff]
        %v2634 = vld [vmem:[%s779 + $0x28] sm:$0xff]
        %v2635 = vld [vmem:[%s779 + $0x30] sm:$0xff]
        %v2636 = vld [vmem:[%s779 + $0x38] sm:$0xff]
        %v2637 = vld [vmem:[%s779 + $0x40] sm:$0xff]
        %v2638 = vld [vmem:[%s779 + $0x48] sm:$0xff]
        %v2639 = vld [vmem:[%s779 + $0x50] sm:$0xff]
        %v2640 = vld [vmem:[%s779 + $0x58] sm:$0xff]
        %v2641 = vld [vmem:[%s779 + $0x60] sm:$0xff]
        %v2642 = vld [vmem:[%s779 + $0x68] sm:$0xff]
        %v2643 = vld [vmem:[%s779 + $0x70] sm:$0xff]
        %v2644 = vld [vmem:[%s779 + $0x78] sm:$0xff]
        %v2645 = vld [vmem:[%s779 + $0x80] sm:$0xff]
        %v2646 = vld [vmem:[%s779 + $0x88] sm:$0xff]
        %v2647 = vld [vmem:[%s779 + $0x90] sm:$0xff]
        %v2648 = vld [vmem:[%s779 + $0x98] sm:$0xff]
        %v2649 = vld [vmem:[%s779 + $0xa0] sm:$0xff]
        %v2650 = vld [vmem:[%s779 + $0xa8] sm:$0xff]
        %v2651 = vld [vmem:[%s779 + $0xb0] sm:$0xff]
        %v2652 = vld [vmem:[%s779 + $0xb8] sm:$0xff]
        %v2653 = vld [vmem:[%s779 + $0xc0] sm:$0xff]
        %v2654 = vld [vmem:[%s779 + $0xc8] sm:$0xff]
        %v2655 = vld [vmem:[%s779 + $0xd0] sm:$0xff]
        %v2656 = vld [vmem:[%s779 + $0xd8] sm:$0xff]
        %v2657 = vld [vmem:[%s779 + $0xe0] sm:$0xff]
        %v2658 = vld [vmem:[%s779 + $0xe8] sm:$0xff]
        %v2659 = vld [vmem:[%s779 + $0xf0] sm:$0xff]
        %v2660 = vld [vmem:[%s779 + $0xf8] sm:$0xff]
        %v2661 = vld [vmem:[%s662] sm:$0xf]
        %v2662 = vpack.c.bf16 %v2628, %v2628
        %v2664 = vlaneseq
        %v2665 = vshrl.u32 %v2664, 7
        %v2666 = vsub.s32 0, %v2665
        %v2667 = vrot.slane %v2661, %v2666
        %v2668 = vlaneseq
        %v2669 = vshrl.u32 %v2668, 7
        %v2670 = vsub.s32 1, %v2669
        %v2671 = vrot.slane %v2661, %v2670
        %v2672 = vlaneseq
        %v2673 = vshrl.u32 %v2672, 7
        %v2674 = vsub.s32 2, %v2673
        %v2675 = vrot.slane %v2661, %v2674
        %v2676 = vlaneseq
        %v2677 = vshrl.u32 %v2676, 7
        %v2678 = vsub.s32 3, %v2677
        %v2679 = vrot.slane %v2661, %v2678
        %v2716 = vunpack.c.l.b16 %v2629
        %v2717 = vunpack.c.h.b16 %v2629
        %v2718 = vunpack.c.l.b16 %v2630
        %v2719 = vunpack.c.h.b16 %v2630
        %v2720 = vunpack.c.l.b16 %v2631
        %v2721 = vunpack.c.h.b16 %v2631
        %v2722 = vunpack.c.l.b16 %v2632
        %v2723 = vunpack.c.h.b16 %v2632
        %v2724 = vunpack.c.l.b16 %v2633
        %v2725 = vunpack.c.h.b16 %v2633
        %v2726 = vunpack.c.l.b16 %v2634
        %v2727 = vunpack.c.h.b16 %v2634
        %v2728 = vunpack.c.l.b16 %v2635
        %v2729 = vunpack.c.h.b16 %v2635
        %v2730 = vunpack.c.l.b16 %v2636
        %v2731 = vunpack.c.h.b16 %v2636
        %v2732 = vunpack.c.l.b16 %v2637
        %v2733 = vunpack.c.h.b16 %v2637
        %v2734 = vunpack.c.l.b16 %v2638
        %v2735 = vunpack.c.h.b16 %v2638
        %v2736 = vunpack.c.l.b16 %v2639
        %v2737 = vunpack.c.h.b16 %v2639
        %v2738 = vunpack.c.l.b16 %v2640
        %v2739 = vunpack.c.h.b16 %v2640
        %v2740 = vunpack.c.l.b16 %v2641
        %v2741 = vunpack.c.h.b16 %v2641
        %v2742 = vunpack.c.l.b16 %v2642
        %v2743 = vunpack.c.h.b16 %v2642
        %v2744 = vunpack.c.l.b16 %v2643
        %v2745 = vunpack.c.h.b16 %v2643
        %v2746 = vunpack.c.l.b16 %v2644
        %v2747 = vunpack.c.h.b16 %v2644
        %v2748 = vunpack.c.l.b16 %v2645
        %v2749 = vunpack.c.h.b16 %v2645
        %v2750 = vunpack.c.l.b16 %v2646
        %v2751 = vunpack.c.h.b16 %v2646
        %v2752 = vunpack.c.l.b16 %v2647
        %v2753 = vunpack.c.h.b16 %v2647
        %v2754 = vunpack.c.l.b16 %v2648
        %v2755 = vunpack.c.h.b16 %v2648
        %v2756 = vunpack.c.l.b16 %v2649
        %v2757 = vunpack.c.h.b16 %v2649
        %v2758 = vunpack.c.l.b16 %v2650
        %v2759 = vunpack.c.h.b16 %v2650
        %v2760 = vunpack.c.l.b16 %v2651
        %v2761 = vunpack.c.h.b16 %v2651
        %v2762 = vunpack.c.l.b16 %v2652
        %v2763 = vunpack.c.h.b16 %v2652
        %v2764 = vunpack.c.l.b16 %v2653
        %v2765 = vunpack.c.h.b16 %v2653
        %v2766 = vunpack.c.l.b16 %v2654
        %v2767 = vunpack.c.h.b16 %v2654
        %v2768 = vunpack.c.l.b16 %v2655
        %v2769 = vunpack.c.h.b16 %v2655
        %v2770 = vunpack.c.l.b16 %v2656
        %v2771 = vunpack.c.h.b16 %v2656
        %v2772 = vunpack.c.l.b16 %v2657
        %v2773 = vunpack.c.h.b16 %v2657
        %v2774 = vunpack.c.l.b16 %v2658
        %v2775 = vunpack.c.h.b16 %v2658
        %v2776 = vunpack.c.l.b16 %v2659
        %v2777 = vunpack.c.h.b16 %v2659
        %v2778 = vunpack.c.l.b16 %v2660
        %v2779 = vunpack.c.h.b16 %v2660
        %v2780 = vpack.c.b16 %v2720, %v2716
        %v2781 = vpack.c.b16 %v2721, %v2717
        %v2782 = vpack.c.b16 %v2722, %v2718
        %v2783 = vpack.c.b16 %v2723, %v2719
        %v2784 = vpack.c.b16 %v2728, %v2724
        %v2785 = vpack.c.b16 %v2729, %v2725
        %v2786 = vpack.c.b16 %v2730, %v2726
        %v2787 = vpack.c.b16 %v2731, %v2727
        %v2788 = vpack.c.b16 %v2736, %v2732
        %v2789 = vpack.c.b16 %v2737, %v2733
        %v2790 = vpack.c.b16 %v2738, %v2734
        %v2791 = vpack.c.b16 %v2739, %v2735
        %v2792 = vpack.c.b16 %v2744, %v2740
        %v2793 = vpack.c.b16 %v2745, %v2741
        %v2794 = vpack.c.b16 %v2746, %v2742
        %v2795 = vpack.c.b16 %v2747, %v2743
        %v2796 = vpack.c.b16 %v2752, %v2748
        %v2797 = vpack.c.b16 %v2753, %v2749
        %v2798 = vpack.c.b16 %v2754, %v2750
        %v2799 = vpack.c.b16 %v2755, %v2751
        %v2800 = vpack.c.b16 %v2760, %v2756
        %v2801 = vpack.c.b16 %v2761, %v2757
        %v2802 = vpack.c.b16 %v2762, %v2758
        %v2803 = vpack.c.b16 %v2763, %v2759
        %v2804 = vpack.c.b16 %v2768, %v2764
        %v2805 = vpack.c.b16 %v2769, %v2765
        %v2806 = vpack.c.b16 %v2770, %v2766
        %v2807 = vpack.c.b16 %v2771, %v2767
        %v2808 = vpack.c.b16 %v2776, %v2772
        %v2809 = vpack.c.b16 %v2777, %v2773
        %v2810 = vpack.c.b16 %v2778, %v2774
        %v2811 = vpack.c.b16 %v2779, %v2775
        %2844 = vmatprep.subr.bf16.mxu0 %v2781
        %2845 = vmatpush1.bf16.msra.mxu0 %v2780
        %2846 = vmatprep.subr.bf16.mxu0 %v2785
        %2847 = vmatpush1.bf16.msra.mxu0 %v2784
        %2848 = vmatprep.subr.bf16.mxu0 %v2789
        %2849 = vmatpush1.bf16.msra.mxu0 %v2788
        %2850 = vmatprep.subr.bf16.mxu0 %v2793
        %2851 = vmatpush1.bf16.msra.mxu0 %v2792
        %2852 = vmatprep.subr.bf16.mxu0 %v2797
        %2853 = vmatpush1.bf16.msra.mxu0 %v2796
        %2854 = vmatprep.subr.bf16.mxu0 %v2801
        %2855 = vmatpush1.bf16.msra.mxu0 %v2800
        %2856 = vmatprep.subr.bf16.mxu0 %v2805
        %2857 = vmatpush1.bf16.msra.mxu0 %v2804
        %2858 = vmatprep.subr.bf16.mxu0 %v2809
        %2859 = vmatpush1.bf16.msra.mxu0 %v2808
        %2860 = vmatprep.subr.bf16.mxu0 0
        %2861 = vmatpush1.bf16.msra.mxu0 0
        %2862 = vmatprep.subr.bf16.mxu0 0
        %2863 = vmatpush1.bf16.msra.mxu0 0
        %2864 = vmatprep.subr.bf16.mxu0 0
        %2865 = vmatpush1.bf16.msra.mxu0 0
        %2866 = vmatprep.subr.bf16.mxu0 0
        %2867 = vmatpush1.bf16.msra.mxu0 0
        %2868 = vmatprep.subr.bf16.mxu0 0
        %2869 = vmatpush1.bf16.msra.mxu0 0
        %2870 = vmatprep.subr.bf16.mxu0 0
        %2871 = vmatpush1.bf16.msra.mxu0 0
        %2872 = vmatprep.subr.bf16.mxu0 0
        %2873 = vmatpush1.bf16.msra.mxu0 0
        %2874 = vmatprep.subr.bf16.mxu0 0
        %2875 = vmatpush1.bf16.msra.mxu0 0
        %2876 = vmatprep.mubr.bf16.mxu0 0
        %2877 = vmatmul.mubr.bf16.gmra.mrb[0].mxu0 %v2662
        %v2878 = vpop.f32.mrb[0].mxu0
        %v2879 = vadd.f32 %v2667, %v2878
        %v2880 = vpop.f32.mrb[0].mxu0
        %v2881 = vadd.f32 %v2671, %v2880
        %v2882 = vpop.f32.mrb[0].mxu0
        %v2883 = vpop.f32.mrb[0].mxu0
        %2884 = vdwg.mxu0
        %2885 = vmatprep.subr.bf16.mxu0 %v2783
        %2886 = vmatpush1.bf16.msra.mxu0 %v2782
        %2887 = vmatprep.subr.bf16.mxu0 %v2787
        %2888 = vmatpush1.bf16.msra.mxu0 %v2786
        %2889 = vmatprep.subr.bf16.mxu0 %v2791
        %2890 = vmatpush1.bf16.msra.mxu0 %v2790
        %2891 = vmatprep.subr.bf16.mxu0 %v2795
        %2892 = vmatpush1.bf16.msra.mxu0 %v2794
        %2893 = vmatprep.subr.bf16.mxu0 %v2799
        %2894 = vmatpush1.bf16.msra.mxu0 %v2798
        %2895 = vmatprep.subr.bf16.mxu0 %v2803
        %2896 = vmatpush1.bf16.msra.mxu0 %v2802
        %2897 = vmatprep.subr.bf16.mxu0 %v2807
        %2898 = vmatpush1.bf16.msra.mxu0 %v2806
        %2899 = vmatprep.subr.bf16.mxu0 %v2811
        %2900 = vmatpush1.bf16.msra.mxu0 %v2810
        %2901 = vmatprep.subr.bf16.mxu0 0
        %2902 = vmatpush1.bf16.msra.mxu0 0
        %2903 = vmatprep.subr.bf16.mxu0 0
        %2904 = vmatpush1.bf16.msra.mxu0 0
        %2905 = vmatprep.subr.bf16.mxu0 0
        %2906 = vmatpush1.bf16.msra.mxu0 0
        %2907 = vmatprep.subr.bf16.mxu0 0
        %2908 = vmatpush1.bf16.msra.mxu0 0
        %2909 = vmatprep.subr.bf16.mxu0 0
        %2910 = vmatpush1.bf16.msra.mxu0 0
        %2911 = vmatprep.subr.bf16.mxu0 0
        %2912 = vmatpush1.bf16.msra.mxu0 0
        %2913 = vmatprep.subr.bf16.mxu0 0
        %2914 = vmatpush1.bf16.msra.mxu0 0
        %2915 = vmatprep.subr.bf16.mxu0 0
        %2916 = vmatpush1.bf16.msra.mxu0 0
        %2917 = vmatprep.mubr.bf16.mxu0 0
        %2918 = vmatmul.mubr.bf16.gmra.mrb[0].mxu0 %v2662
        %v2919 = vpop.f32.mrb[0].mxu0
        %v2920 = vadd.f32 %v2675, %v2919
        %v2921 = vpop.f32.mrb[0].mxu0
        %v2922 = vadd.f32 %v2679, %v2921
        %v2923 = vpop.f32.mrb[0].mxu0
        %v2924 = vpop.f32.mrb[0].mxu0
        %2925 = vdwg.mxu0
        %v2926 = vmul.f32 %v2879, %v2879
        %v2927 = vmul.f32 %v2881, %v2881
        %v2928 = vmul.f32 %v2920, %v2920
        %v2929 = vmul.f32 %v2922, %v2922
        %v2930 = vmul.f32 %v2879, %v2926
        %v2931 = vmul.f32 %v2881, %v2927
        %v2932 = vmul.f32 %v2920, %v2928
        %v2933 = vmul.f32 %v2922, %v2929
        %v2934 = vmul.f32 %v2930, 0.044715
        %v2935 = vmul.f32 %v2931, 0.044715
        %v2936 = vmul.f32 %v2932, 0.044715
        %v2937 = vmul.f32 %v2933, 0.044715
        %v2938 = vadd.f32 %v2879, %v2934
        %v2939 = vadd.f32 %v2881, %v2935
        %v2940 = vadd.f32 %v2920, %v2936
        %v2941 = vadd.f32 %v2922, %v2937
        %v2942 = vmul.f32 %v2938, 0.7978846
        %v2943 = vmul.f32 %v2939, 0.7978846
        %v2944 = vmul.f32 %v2940, 0.7978846
        %v2945 = vmul.f32 %v2941, 0.7978846
        %v2946 = vtanh.pop %v2942
        %v2947 = vtanh.pop %v2943
        %v2948 = vtanh.pop %v2944
        %v2949 = vtanh.pop %v2945
        %v2950 = vadd.f32 %v2946, 1.0
        %v2951 = vadd.f32 %v2947, 1.0
        %v2952 = vadd.f32 %v2948, 1.0
        %v2953 = vadd.f32 %v2949, 1.0
        %v2954 = vmul.f32 %v2950, 0.5
        %v2955 = vmul.f32 %v2951, 0.5
        %v2956 = vmul.f32 %v2952, 0.5
        %v2957 = vmul.f32 %v2953, 0.5
        %v2958 = vmul.f32 %v2879, %v2954
        %v2959 = vmul.f32 %v2881, %v2955
        %v2960 = vmul.f32 %v2920, %v2956
        %v2961 = vmul.f32 %v2922, %v2957
        %v2962 = vld [vmem:[%s784] sm:$0xf]
        %v2963 = vld [vmem:[%s784 + $0x4] sm:$0xf]
        %v2964 = vld [vmem:[%s784 + $0x8] sm:$0xf]
        %v2965 = vld [vmem:[%s784 + $0xc] sm:$0xf]
        %v2966 = vld [vmem:[%s784 + $0x10] sm:$0xf]
        %v2967 = vld [vmem:[%s784 + $0x14] sm:$0xf]
        %v2968 = vld [vmem:[%s784 + $0x18] sm:$0xf]
        %v2969 = vld [vmem:[%s784 + $0x1c] sm:$0xf]
        %v2970 = vld [vmem:[%s784 + $0x20] sm:$0xf]
        %v2971 = vld [vmem:[%s784 + $0x24] sm:$0xf]
        %v2972 = vld [vmem:[%s784 + $0x28] sm:$0xf]
        %v2973 = vld [vmem:[%s784 + $0x2c] sm:$0xf]
        %v2974 = vld [vmem:[%s784 + $0x30] sm:$0xf]
        %v2975 = vld [vmem:[%s784 + $0x34] sm:$0xf]
        %v2976 = vld [vmem:[%s784 + $0x38] sm:$0xf]
        %v2977 = vld [vmem:[%s784 + $0x3c] sm:$0xf]
        %v2978 = vld [vmem:[%s784 + $0x40] sm:$0xf]
        %v2979 = vld [vmem:[%s784 + $0x44] sm:$0xf]
        %v2980 = vld [vmem:[%s784 + $0x48] sm:$0xf]
        %v2981 = vld [vmem:[%s784 + $0x4c] sm:$0xf]
        %v2982 = vld [vmem:[%s784 + $0x50] sm:$0xf]
        %v2983 = vld [vmem:[%s784 + $0x54] sm:$0xf]
        %v2984 = vld [vmem:[%s784 + $0x58] sm:$0xf]
        %v2985 = vld [vmem:[%s784 + $0x5c] sm:$0xf]
        %v2986 = vld [vmem:[%s784 + $0x60] sm:$0xf]
        %v2987 = vld [vmem:[%s784 + $0x64] sm:$0xf]
        %v2988 = vld [vmem:[%s784 + $0x68] sm:$0xf]
        %v2989 = vld [vmem:[%s784 + $0x6c] sm:$0xf]
        %v2990 = vld [vmem:[%s784 + $0x70] sm:$0xf]
        %v2991 = vld [vmem:[%s784 + $0x74] sm:$0xf]
        %v2992 = vld [vmem:[%s784 + $0x78] sm:$0xf]
        %v2993 = vld [vmem:[%s784 + $0x7c] sm:$0xf]
        %v2994 = vld [vmem:[%s784 + $0x80] sm:$0xf]
        %v2995 = vld [vmem:[%s784 + $0x84] sm:$0xf]
        %v2996 = vld [vmem:[%s784 + $0x88] sm:$0xf]
        %v2997 = vld [vmem:[%s784 + $0x8c] sm:$0xf]
        %v2998 = vld [vmem:[%s784 + $0x90] sm:$0xf]
        %v2999 = vld [vmem:[%s784 + $0x94] sm:$0xf]
        %v3000 = vld [vmem:[%s784 + $0x98] sm:$0xf]
        %v3001 = vld [vmem:[%s784 + $0x9c] sm:$0xf]
        %v3002 = vld [vmem:[%s784 + $0xa0] sm:$0xf]
        %v3003 = vld [vmem:[%s784 + $0xa4] sm:$0xf]
        %v3004 = vld [vmem:[%s784 + $0xa8] sm:$0xf]
        %v3005 = vld [vmem:[%s784 + $0xac] sm:$0xf]
        %v3006 = vld [vmem:[%s784 + $0xb0] sm:$0xf]
        %v3007 = vld [vmem:[%s784 + $0xb4] sm:$0xf]
        %v3008 = vld [vmem:[%s784 + $0xb8] sm:$0xf]
        %v3009 = vld [vmem:[%s784 + $0xbc] sm:$0xf]
        %v3010 = vld [vmem:[%s784 + $0xc0] sm:$0xf]
        %v3011 = vld [vmem:[%s784 + $0xc4] sm:$0xf]
        %v3012 = vld [vmem:[%s784 + $0xc8] sm:$0xf]
        %v3013 = vld [vmem:[%s784 + $0xcc] sm:$0xf]
        %v3014 = vld [vmem:[%s784 + $0xd0] sm:$0xf]
        %v3015 = vld [vmem:[%s784 + $0xd4] sm:$0xf]
        %v3016 = vld [vmem:[%s784 + $0xd8] sm:$0xf]
        %v3017 = vld [vmem:[%s784 + $0xdc] sm:$0xf]
        %v3018 = vld [vmem:[%s784 + $0xe0] sm:$0xf]
        %v3019 = vld [vmem:[%s784 + $0xe4] sm:$0xf]
        %v3020 = vld [vmem:[%s784 + $0xe8] sm:$0xf]
        %v3021 = vld [vmem:[%s784 + $0xec] sm:$0xf]
        %v3022 = vld [vmem:[%s784 + $0xf0] sm:$0xf]
        %v3023 = vld [vmem:[%s784 + $0xf4] sm:$0xf]
        %v3024 = vld [vmem:[%s784 + $0xf8] sm:$0xf]
        %v3025 = vld [vmem:[%s784 + $0xfc] sm:$0xf]
        %v3026 = vld [vmem:[%s670] sm:$0x1]
        %v3027 = vpack.c.bf16 %v2958, %v2958
        %v3028 = vpack.c.bf16 %v2959, %v2959
        %v3029 = vpack.c.bf16 %v2960, %v2960
        %v3030 = vpack.c.bf16 %v2961, %v2961
        %v3032 = vlaneseq
        %v3033 = vshrl.u32 %v3032, 7
        %v3034 = vsub.s32 0, %v3033
        %v3035 = vrot.slane %v3026, %v3034
        %v3101 = vunpack.c.l.b16 %v2962
        %v3102 = vunpack.c.l.b16 %v2963
        %v3103 = vunpack.c.l.b16 %v2964
        %v3104 = vunpack.c.l.b16 %v2965
        %v3105 = vunpack.c.l.b16 %v2966
        %v3106 = vunpack.c.l.b16 %v2967
        %v3107 = vunpack.c.l.b16 %v2968
        %v3108 = vunpack.c.l.b16 %v2969
        %v3109 = vunpack.c.l.b16 %v2970
        %v3110 = vunpack.c.l.b16 %v2971
        %v3111 = vunpack.c.l.b16 %v2972
        %v3112 = vunpack.c.l.b16 %v2973
        %v3113 = vunpack.c.l.b16 %v2974
        %v3114 = vunpack.c.l.b16 %v2975
        %v3115 = vunpack.c.l.b16 %v2976
        %v3116 = vunpack.c.l.b16 %v2977
        %v3117 = vunpack.c.l.b16 %v2978
        %v3118 = vunpack.c.l.b16 %v2979
        %v3119 = vunpack.c.l.b16 %v2980
        %v3120 = vunpack.c.l.b16 %v2981
        %v3121 = vunpack.c.l.b16 %v2982
        %v3122 = vunpack.c.l.b16 %v2983
        %v3123 = vunpack.c.l.b16 %v2984
        %v3124 = vunpack.c.l.b16 %v2985
        %v3125 = vunpack.c.l.b16 %v2986
        %v3126 = vunpack.c.l.b16 %v2987
        %v3127 = vunpack.c.l.b16 %v2988
        %v3128 = vunpack.c.l.b16 %v2989
        %v3129 = vunpack.c.l.b16 %v2990
        %v3130 = vunpack.c.l.b16 %v2991
        %v3131 = vunpack.c.l.b16 %v2992
        %v3132 = vunpack.c.l.b16 %v2993
        %v3133 = vunpack.c.l.b16 %v2994
        %v3134 = vunpack.c.l.b16 %v2995
        %v3135 = vunpack.c.l.b16 %v2996
        %v3136 = vunpack.c.l.b16 %v2997
        %v3137 = vunpack.c.l.b16 %v2998
        %v3138 = vunpack.c.l.b16 %v2999
        %v3139 = vunpack.c.l.b16 %v3000
        %v3140 = vunpack.c.l.b16 %v3001
        %v3141 = vunpack.c.l.b16 %v3002
        %v3142 = vunpack.c.l.b16 %v3003
        %v3143 = vunpack.c.l.b16 %v3004
        %v3144 = vunpack.c.l.b16 %v3005
        %v3145 = vunpack.c.l.b16 %v3006
        %v3146 = vunpack.c.l.b16 %v3007
        %v3147 = vunpack.c.l.b16 %v3008
        %v3148 = vunpack.c.l.b16 %v3009
        %v3149 = vunpack.c.l.b16 %v3010
        %v3150 = vunpack.c.l.b16 %v3011
        %v3151 = vunpack.c.l.b16 %v3012
        %v3152 = vunpack.c.l.b16 %v3013
        %v3153 = vunpack.c.l.b16 %v3014
        %v3154 = vunpack.c.l.b16 %v3015
        %v3155 = vunpack.c.l.b16 %v3016
        %v3156 = vunpack.c.l.b16 %v3017
        %v3157 = vunpack.c.l.b16 %v3018
        %v3158 = vunpack.c.l.b16 %v3019
        %v3159 = vunpack.c.l.b16 %v3020
        %v3160 = vunpack.c.l.b16 %v3021
        %v3161 = vunpack.c.l.b16 %v3022
        %v3162 = vunpack.c.l.b16 %v3023
        %v3163 = vunpack.c.l.b16 %v3024
        %v3164 = vunpack.c.l.b16 %v3025
        %v3165 = vpack.c.b16 %v3102, %v3101
        %v3166 = vpack.c.b16 %v3104, %v3103
        %v3167 = vpack.c.b16 %v3106, %v3105
        %v3168 = vpack.c.b16 %v3108, %v3107
        %v3169 = vpack.c.b16 %v3110, %v3109
        %v3170 = vpack.c.b16 %v3112, %v3111
        %v3171 = vpack.c.b16 %v3114, %v3113
        %v3172 = vpack.c.b16 %v3116, %v3115
        %v3173 = vpack.c.b16 %v3118, %v3117
        %v3174 = vpack.c.b16 %v3120, %v3119
        %v3175 = vpack.c.b16 %v3122, %v3121
        %v3176 = vpack.c.b16 %v3124, %v3123
        %v3177 = vpack.c.b16 %v3126, %v3125
        %v3178 = vpack.c.b16 %v3128, %v3127
        %v3179 = vpack.c.b16 %v3130, %v3129
        %v3180 = vpack.c.b16 %v3132, %v3131
        %v3181 = vpack.c.b16 %v3134, %v3133
        %v3182 = vpack.c.b16 %v3136, %v3135
        %v3183 = vpack.c.b16 %v3138, %v3137
        %v3184 = vpack.c.b16 %v3140, %v3139
        %v3185 = vpack.c.b16 %v3142, %v3141
        %v3186 = vpack.c.b16 %v3144, %v3143
        %v3187 = vpack.c.b16 %v3146, %v3145
        %v3188 = vpack.c.b16 %v3148, %v3147
        %v3189 = vpack.c.b16 %v3150, %v3149
        %v3190 = vpack.c.b16 %v3152, %v3151
        %v3191 = vpack.c.b16 %v3154, %v3153
        %v3192 = vpack.c.b16 %v3156, %v3155
        %v3193 = vpack.c.b16 %v3158, %v3157
        %v3194 = vpack.c.b16 %v3160, %v3159
        %v3195 = vpack.c.b16 %v3162, %v3161
        %v3196 = vpack.c.b16 %v3164, %v3163
        %3229 = vmatprep.subr.bf16.mxu0 0
        %3230 = vmatpush1.bf16.msra.mxu0 %v3165
        %3231 = vmatprep.subr.bf16.mxu0 0
        %3232 = vmatpush1.bf16.msra.mxu0 %v3166
        %3233 = vmatprep.subr.bf16.mxu0 0
        %3234 = vmatpush1.bf16.msra.mxu0 %v3167
        %3235 = vmatprep.subr.bf16.mxu0 0
        %3236 = vmatpush1.bf16.msra.mxu0 %v3168
        %3237 = vmatprep.subr.bf16.mxu0 0
        %3238 = vmatpush1.bf16.msra.mxu0 %v3169
        %3239 = vmatprep.subr.bf16.mxu0 0
        %3240 = vmatpush1.bf16.msra.mxu0 %v3170
        %3241 = vmatprep.subr.bf16.mxu0 0
        %3242 = vmatpush1.bf16.msra.mxu0 %v3171
        %3243 = vmatprep.subr.bf16.mxu0 0
        %3244 = vmatpush1.bf16.msra.mxu0 %v3172
        %3245 = vmatprep.subr.bf16.mxu0 0
        %3246 = vmatpush1.bf16.msra.mxu0 %v3173
        %3247 = vmatprep.subr.bf16.mxu0 0
        %3248 = vmatpush1.bf16.msra.mxu0 %v3174
        %3249 = vmatprep.subr.bf16.mxu0 0
        %3250 = vmatpush1.bf16.msra.mxu0 %v3175
        %3251 = vmatprep.subr.bf16.mxu0 0
        %3252 = vmatpush1.bf16.msra.mxu0 %v3176
        %3253 = vmatprep.subr.bf16.mxu0 0
        %3254 = vmatpush1.bf16.msra.mxu0 %v3177
        %3255 = vmatprep.subr.bf16.mxu0 0
        %3256 = vmatpush1.bf16.msra.mxu0 %v3178
        %3257 = vmatprep.subr.bf16.mxu0 0
        %3258 = vmatpush1.bf16.msra.mxu0 %v3179
        %3259 = vmatprep.subr.bf16.mxu0 0
        %3260 = vmatpush1.bf16.msra.mxu0 %v3180
        %3261 = vmatprep.mubr.bf16.mxu0 %v3028
        %3262 = vmatmul.mubr.bf16.gmra.mrb[0].mxu0 %v3027
        %v3263 = vpop.f32.mrb[0].mxu0
        %v3264 = vadd.f32 %v3035, %v3263
        %v3265 = vpop.f32.mrb[0].mxu0
        %v3266 = vpop.f32.mrb[0].mxu0
        %v3267 = vpop.f32.mrb[0].mxu0
        %3268 = vdwg.mxu0
        %3269 = vmatprep.subr.bf16.mxu0 0
        %3270 = vmatpush1.bf16.msra.mxu0 %v3181
        %3271 = vmatprep.subr.bf16.mxu0 0
        %3272 = vmatpush1.bf16.msra.mxu0 %v3182
        %3273 = vmatprep.subr.bf16.mxu0 0
        %3274 = vmatpush1.bf16.msra.mxu0 %v3183
        %3275 = vmatprep.subr.bf16.mxu0 0
        %3276 = vmatpush1.bf16.msra.mxu0 %v3184
        %3277 = vmatprep.subr.bf16.mxu0 0
        %3278 = vmatpush1.bf16.msra.mxu0 %v3185
        %3279 = vmatprep.subr.bf16.mxu0 0
        %3280 = vmatpush1.bf16.msra.mxu0 %v3186
        %3281 = vmatprep.subr.bf16.mxu0 0
        %3282 = vmatpush1.bf16.msra.mxu0 %v3187
        %3283 = vmatprep.subr.bf16.mxu0 0
        %3284 = vmatpush1.bf16.msra.mxu0 %v3188
        %3285 = vmatprep.subr.bf16.mxu0 0
        %3286 = vmatpush1.bf16.msra.mxu0 %v3189
        %3287 = vmatprep.subr.bf16.mxu0 0
        %3288 = vmatpush1.bf16.msra.mxu0 %v3190
        %3289 = vmatprep.subr.bf16.mxu0 0
        %3290 = vmatpush1.bf16.msra.mxu0 %v3191
        %3291 = vmatprep.subr.bf16.mxu0 0
        %3292 = vmatpush1.bf16.msra.mxu0 %v3192
        %3293 = vmatprep.subr.bf16.mxu0 0
        %3294 = vmatpush1.bf16.msra.mxu0 %v3193
        %3295 = vmatprep.subr.bf16.mxu0 0
        %3296 = vmatpush1.bf16.msra.mxu0 %v3194
        %3297 = vmatprep.subr.bf16.mxu0 0
        %3298 = vmatpush1.bf16.msra.mxu0 %v3195
        %3299 = vmatprep.subr.bf16.mxu0 0
        %3300 = vmatpush1.bf16.msra.mxu0 %v3196
        %3301 = vmatprep.mubr.bf16.mxu0 %v3030
        %3302 = vmatmul.mubr.bf16.gmra.mrb[0].mxu0 %v3029
        %v3303 = vpop.f32.mrb[0].mxu0
        %v3304 = vadd.f32 %v3264, %v3303
        %v3305 = vpop.f32.mrb[0].mxu0
        %v3306 = vpop.f32.mrb[0].mxu0
        %v3307 = vpop.f32.mrb[0].mxu0
        %3308 = vdwg.mxu0
        %v3309 = vadd.f32 %v2601, %v3304
        %p3310 = scmp.ne.s32.totalorder %s48, 1
        // Predicated region
        $region242: #{musk_vision_forward.1} parent=75 // pred_check
          %p3311 = pneg %p3310
        $region243: #{musk_vision_forward.1} parent=75 // pred_check_branch
          %3313 = sbr.rel (%p3311) target = $region245
        $region244: #{musk_vision_forward.1} parent=75 // pred_region
          %3314 = vst [vmem:[#allocation2] sm:$0xff] %v3309
        $region245: #{musk_vision_forward.1} parent=75 // pred_fallthru
          _
        %p3315 = scmp.eq.s32.totalorder %s48, 1
        // Predicated region
        $region246: #{musk_vision_forward.1} parent=75 // pred_check
          %p3316 = pneg %p3315
        $region247: #{musk_vision_forward.1} parent=75 // pred_check_branch
          %3318 = sbr.rel (%p3316) target = $region249
        $region248: #{musk_vision_forward.1} parent=75 // pred_region
          %v3319 = vld [vmem:[%s5] sm:$0x1]
          %v3320 = vld [vmem:[#allocation3] sm:$0x1]
          %vm3321 = vcmask 1040384
          %v3322 = vsel %vm3321, %v3309, 0.0
          %3323 = vadd.xlane.f32.xlu0 %v3322
          %v3324 = vpop.xlane.xlu0 %3323
          %v3325 = vmul.f32 %v3324, %v1302
          %v3326 = vsub.f32 %v3309, %v3325
          %v3327 = vmul.f32 %v3326, %v3326
          %v3328 = vsel %vm3321, %v3327, 0.0
          %3329 = vadd.xlane.f32.xlu0 %v3328
          %v3330 = vpop.xlane.xlu0 %3329
          %v3331 = vmul.f32 %v3330, %v1302
          %v3332 = vadd.f32 %v3331, 1e-05
          %v3333 = vrsqrt.pop %v3332
          %v3334 = vmul.f32 %v3326, %v3333
          %v3335 = vmul.f32 %v3334, %v3319
          %v3336 = vadd.f32 %v3335, %v3320
          %3337 = vst [vmem:[%s759] sm:$0x1] %v3336
        $region249: #{musk_vision_forward.1} parent=75 // pred_fallthru
          _
        %s3338 = sand.u32 %s417, 1
        %s3339 = scalar_lea.sflag [#allocation5], %s3338
        %s3340 = sand.u32 %s417, 1
        %s3341 = scalar_lea.vmem [#allocation15], %s3340
        // Predicated region
        $region250: #{musk_vision_forward.1} parent=75 // pred_check
          %p3342 = pneg %p427
        $region251: #{musk_vision_forward.1} parent=75 // pred_check_branch
          %3344 = sbr.rel (%p3342) target = $region253
        $region252: #{musk_vision_forward.1} parent=75 // pred_region
          %s3346 = ssub.s32 16, 16
          %3347 = vsyncadd %s3339, %s3346
          %s3348 = smul.addr %s47, 16
          %s3349 = scalar_lea.hbm %s19, %s3348
          %s3351 = sshll.u32 %s3341, 4
          %s3352 = int_to_ptr.vmem [resolvable:$true] %s3351
          %3354 = dma.vmem_to_hbm [thread:$0]  %s3352, 16, %s3349, %s3339
        $region253: #{musk_vision_forward.1} parent=75 // pred_fallthru
          _
      $region76: #{musk_vision_forward.1} parent=5 // pred_fallthru
        _
      %p3355 = scmp.le.s32.totalorder 2, %s38
      // Predicated region
      $region254: #{musk_vision_forward.1} parent=5 // pred_check
        %p3356 = pneg %p3355
      $region255: #{musk_vision_forward.1} parent=5 // pred_check_branch
        %3358 = sbr.rel (%p3356) target = $region257
      $region256: #{musk_vision_forward.1} parent=5 // pred_region
        %s3359 = ssub.s32 %s38, 2
        // Predicated region
        $region258: #{musk_vision_forward.1} parent=256 // pred_check
          %p3360 = pneg %p433
        $region259: #{musk_vision_forward.1} parent=256 // pred_check_branch
          %3362 = sbr.rel (%p3360) target = $region261
        $region260: #{musk_vision_forward.1} parent=256 // pred_region
          %s3363 = sand.u32 %s418, 1
          %s3364 = scalar_lea.sflag [#allocation5], %s3363
          %s3365 = sand.u32 %s418, 1
          %s3366 = scalar_lea.vmem [#allocation15], %s3365
          %3367 = dma.done %s3364, 16
        $region261: #{musk_vision_forward.1} parent=256 // pred_fallthru
          _
      $region257: #{musk_vision_forward.1} parent=5 // pred_fallthru
        _
    $region6: #{musk_vision_forward.1} parent=1 // loop_footer
      %s42 = sadd.s32 1, %s38
    $region7: #{musk_vision_forward.1} parent=1 // loop_footer_branch
      %37 = sbr.rel target = $region3
    $region8: #{musk_vision_forward.1} parent=1 // loop_exit
      _
    %3368 = vsyncpa [#allocation4], 1
    %s3369 = scalar_lea.sflag [#allocation4], 1
    %3370 = vsyncpa %s3369, 1
    %3371 = vsyncpa [#allocation7], 1
    %s3372 = scalar_lea.sflag [#allocation7], 1
    %3373 = vsyncpa %s3372, 1
    %3374 = vsyncpa [#allocation10], 1
    %s3375 = scalar_lea.sflag [#allocation10], 1
    %3376 = vsyncpa %s3375, 1
    %3377 = vsyncpa [#allocation13], 1
    %s3378 = scalar_lea.sflag [#allocation13], 1
    %3379 = vsyncpa %s3378, 1
    %3380 = vsyncpa [#allocation5], 1
    %s3381 = scalar_lea.sflag [#allocation5], 1
    %3382 = vsyncpa %s3381, 1

</llo_original>
